<compile_context>
chip_gen: v7x
topology: tpu7x:2x2x1
jax: 0.10.0
libtpu: 0.0.40
codegen_flags: <defaults>
</compile_context>

<pallas_src>
import jax
import jax.numpy as jnp
import numpy as np
from jax.experimental import pallas as pl
from jax.experimental.pallas import tpu as pltpu


# ----------------------------- Pallas kernel --------------------------------
def graph_net_kernel(
    # inputs
    nodes_ref, edges_ref, recv_oh_ref, send_oh_ref, recv_oh_t_ref,
    # edge MLP params (global term already folded into bias_e1)
    we1_ref, wr1_ref, ws1_ref, bias_e1_ref, we2_ref, be2_ref,
    # node MLP params (global term folded into bias_n1)
    wne1_ref, wnv1_ref, bias_n1_ref, wn2_ref, bn2_ref,
    # global MLP params (global term folded into bias_g1)
    wge1_ref, wgv1_ref, bias_g1_ref, wg2_ref, bg2_ref,
    # outputs
    edges_out_ref, nodes_out_ref, glob_out_ref,
    # scratch
    agg_e_ref,
):
    f32 = jnp.float32
    i = pl.program_id(0)
    last = pl.num_programs(0) - 1

    @pl.when(i == 0)
    def _init():
        agg_e_ref[...] = jnp.zeros_like(agg_e_ref)

    nodes = nodes_ref[...]                        # [N, Dn]   f32
    edges = edges_ref[...]                        # [tE, De]  f32
    R = recv_oh_ref[...].astype(f32)              # [tE, N]   bf16 -> f32 (exact)
    S = send_oh_ref[...].astype(f32)              # [tE, N]
    Rt = recv_oh_t_ref[...].astype(f32)           # [N, tE]

    # ------------------------ edge block (per tile) -------------------------
    # Project node features first, then gather via one-hot matmul:
    #   (R @ nodes) @ W  ==  R @ (nodes @ W)
    # so the big [tE, N] matmuls produce lane-dense H=128 outputs.
    nw_r = jnp.dot(nodes, wr1_ref[...], preferred_element_type=f32)   # [N, H]
    nw_s = jnp.dot(nodes, ws1_ref[...], preferred_element_type=f32)   # [N, H]
    h_e = (jnp.dot(edges, we1_ref[...], preferred_element_type=f32)
           + jnp.dot(R, nw_r, preferred_element_type=f32)
           + jnp.dot(S, nw_s, preferred_element_type=f32)
           + bias_e1_ref[...])                    # bias_e1 = g @ wu1 + be1
    h_e = jnp.maximum(h_e, 0.0)
    e_out = jnp.dot(h_e, we2_ref[...], preferred_element_type=f32) + be2_ref[...]
    edges_out_ref[...] = e_out                    # [tE, De_out] lane-dense store

    # scatter-add this tile's edge outputs to their receiver nodes
    agg_e_ref[...] += jnp.dot(Rt, e_out, preferred_element_type=f32)  # [N, De_out]

    # ---------------- node + global blocks (last tile only) -----------------
    @pl.when(i == last)
    def _finalize():
        agg_e = agg_e_ref[...]                    # [N, De_out]
        h_n = (jnp.dot(agg_e, wne1_ref[...], preferred_element_type=f32)
               + jnp.dot(nodes, wnv1_ref[...], preferred_element_type=f32)
               + bias_n1_ref[...])                # bias_n1 = g @ wnu1 + bn1
        h_n = jnp.maximum(h_n, 0.0)
        n_out = jnp.dot(h_n, wn2_ref[...], preferred_element_type=f32) + bn2_ref[...]
        nodes_out_ref[...] = n_out                # [N, Dn_out]

        # Each edge has exactly one receiver, so summing agg_e over nodes
        # equals summing e_out over edges -> no extra accumulator needed.
        agg_e_g = jnp.sum(agg_e, axis=0, keepdims=True)       # [1, De_out]
        agg_n_g = jnp.sum(n_out, axis=0, keepdims=True)       # [1, Dn_out]
        h_g = (jnp.dot(agg_e_g, wge1_ref[...], preferred_element_type=f32)
               + jnp.dot(agg_n_g, wgv1_ref[...], preferred_element_type=f32)
               + bias_g1_ref[...])                # bias_g1 = g @ wgu1 + bg1
        h_g = jnp.maximum(h_g, 0.0)
        glob_out_ref[...] = (jnp.dot(h_g, wg2_ref[...], preferred_element_type=f32)
                             + bg2_ref[...])


# ------------------------------ wrapper --------------------------------------
def mlp_graph_network(nodes, edges, globals_, receivers, senders, params,
                      *, tile_e=128):
    """GraphNetwork forward pass as one edge-tiled Pallas kernel."""
    N, Dn = nodes.shape
    E, De = edges.shape
    assert E % tile_e == 0, "edge count must be a multiple of tile_e"
    n_tiles = E // tile_e

    (we1, wr1, ws1, wu1, be1, we2, be2,
     wne1, wnv1, wnu1, bn1, wn2, bn2,
     wge1, wgv1, wgu1, bg1, wg2, bg2) = params

    H = we1.shape[1]
    de_out = we2.shape[1]
    dn_out = wn2.shape[1]
    dg_out = wg2.shape[1]

    # One-hot gather/scatter matrices in bf16 (0/1 values are exact in bf16).
    recv_oh = jax.nn.one_hot(receivers, N, dtype=jnp.bfloat16)    # [E, N]
    send_oh = jax.nn.one_hot(senders, N, dtype=jnp.bfloat16)      # [E, N]
    recv_oh_t = recv_oh.T                                         # [N, E] (hoisted)

    # Fold the M=1 global-feature matmuls into the first-layer biases.
    bias_e1 = globals_ @ wu1 + be1                                # [1, H]
    bias_n1 = globals_ @ wnu1 + bn1                               # [1, H]
    bias_g1 = globals_ @ wgu1 + bg1                               # [1, H]

    def resident(shape):
        return pl.BlockSpec(shape, lambda i: (0, 0))

    in_specs = [
        resident((N, Dn)),                                        # nodes (resident)
        pl.BlockSpec((tile_e, De), lambda i: (i, 0)),             # edges tile
        pl.BlockSpec((tile_e, N), lambda i: (i, 0)),              # recv one-hot tile
        pl.BlockSpec((tile_e, N), lambda i: (i, 0)),              # send one-hot tile
        pl.BlockSpec((N, tile_e), lambda i: (0, i)),              # recv one-hot^T tile
        # edge MLP
        resident((De, H)), resident((Dn, H)), resident((Dn, H)),
        resident((1, H)), resident((H, de_out)), resident((1, de_out)),
        # node MLP
        resident((de_out, H)), resident((Dn, H)), resident((1, H)),
        resident((H, dn_out)), resident((1, dn_out)),
        # global MLP
        resident((de_out, H)), resident((dn_out, H)), resident((1, H)),
        resident((H, dg_out)), resident((1, dg_out)),
    ]

    out_specs = (
        pl.BlockSpec((tile_e, de_out), lambda i: (i, 0)),         # edges'
        pl.BlockSpec((N, dn_out), lambda i: (0, 0)),              # nodes' (resident)
        pl.BlockSpec((1, dg_out), lambda i: (0, 0)),              # globals' (resident)
    )
    out_shape = (
        jax.ShapeDtypeStruct((E, de_out), jnp.float32),
        jax.ShapeDtypeStruct((N, dn_out), jnp.float32),
        jax.ShapeDtypeStruct((1, dg_out), jnp.float32),
    )

    grid_spec = pltpu.PrefetchScalarGridSpec(
        num_scalar_prefetch=0,
        grid=(n_tiles,),
        in_specs=in_specs,
        out_specs=out_specs,
        scratch_shapes=[pltpu.VMEM((N, de_out), jnp.float32)],    # agg_e accumulator
    )

    return pl.pallas_call(
        graph_net_kernel,
        out_shape=out_shape,
        grid_spec=grid_spec,
        compiler_params=pltpu.CompilerParams(
            dimension_semantics=("arbitrary",),    # edge axis feeds the accumulator
            vmem_limit_bytes=64 * 1024 * 1024,
        ),
    )(nodes, edges, recv_oh, send_oh, recv_oh_t,
      we1, wr1, ws1, bias_e1, we2, be2,
      wne1, wnv1, bias_n1, wn2, bn2,
      wge1, wgv1, bias_g1, wg2, bg2)


# ------------------------- pure-JAX reference ---------------------------------
def reference(nodes, edges, globals_, receivers, senders, params):
    (we1, wr1, ws1, wu1, be1, we2, be2,
     wne1, wnv1, wnu1, bn1, wn2, bn2,
     wge1, wgv1, wgu1, bg1, wg2, bg2) = params
    N = nodes.shape[0]
    recv_n = nodes[receivers]
    send_n = nodes[senders]
    h = jax.nn.relu(edges @ we1 + recv_n @ wr1 + send_n @ ws1
                    + globals_ @ wu1 + be1)
    e_out = h @ we2 + be2
    agg_e = jax.ops.segment_sum(e_out, receivers, num_segments=N)
    hn = jax.nn.relu(agg_e @ wne1 + nodes @ wnv1 + globals_ @ wnu1 + bn1)
    n_out = hn @ wn2 + bn2
    hg = jax.nn.relu(e_out.sum(0, keepdims=True) @ wge1
                     + n_out.sum(0, keepdims=True) @ wgv1
                     + globals_ @ wgu1 + bg1)
    g_out = hg @ wg2 + bg2
    return e_out, n_out, g_out


# --------------------------------- main ---------------------------------------
if __name__ == "__main__":
    key = jax.random.PRNGKey(0)

    # Small graph, but with lane-dense (128-wide) hidden / output dims.
    N, E = 32, 256
    Dn, De, Dg = 8, 8, 8           # input feature dims
    H = 128                        # MLP hidden (padded to 128 lanes)
    De_out, Dn_out, Dg_out = 128, 128, 128

    keys = jax.random.split(key, 32)
    k = iter(keys)

    nodes = jax.random.normal(next(k), (N, Dn), dtype=jnp.float32)
    edges = jax.random.normal(next(k), (E, De), dtype=jnp.float32)
    globals_ = jax.random.normal(next(k), (1, Dg), dtype=jnp.float32)
    receivers = jax.random.randint(next(k), (E,), 0, N)
    senders = jax.random.randint(next(k), (E,), 0, N)

    def w(kk, shape):
        return 0.1 * jax.random.normal(kk, shape, dtype=jnp.float32)

    params = (
        # edge MLP: first layer split across [edges | recv | send | globals]
        w(next(k), (De, H)), w(next(k), (Dn, H)), w(next(k), (Dn, H)),
        w(next(k), (Dg, H)), w(next(k), (1, H)),
        w(next(k), (H, De_out)), w(next(k), (1, De_out)),
        # node MLP: first layer split across [agg_edges | nodes | globals]
        w(next(k), (De_out, H)), w(next(k), (Dn, H)), w(next(k), (Dg, H)),
        w(next(k), (1, H)),
        w(next(k), (H, Dn_out)), w(next(k), (1, Dn_out)),
        # global MLP: first layer split across [agg_edges | agg_nodes | globals]
        w(next(k), (De_out, H)), w(next(k), (Dn_out, H)), w(next(k), (Dg, H)),
        w(next(k), (1, H)),
        w(next(k), (H, Dg_out)), w(next(k), (1, Dg_out)),
    )

    e_out, n_out, g_out = jax.block_until_ready(
        mlp_graph_network(nodes, edges, globals_, receivers, senders, params,
                          tile_e=128))

    e_ref, n_ref, g_ref = reference(nodes, edges, globals_, receivers, senders,
                                    params)

    np.testing.assert_allclose(np.asarray(e_out), np.asarray(e_ref),
                               rtol=1e-3, atol=1e-3)
    np.testing.assert_allclose(np.asarray(n_out), np.asarray(n_ref),
                               rtol=1e-3, atol=1e-3)
    np.testing.assert_allclose(np.asarray(g_out), np.asarray(g_ref),
                               rtol=1e-3, atol=1e-3)

    print("KERNEL_OK")
</pallas_src>

<mosaic_0001>
module attributes {stable_mosaic.version = 11 : i64} {
  func.func @graph_net_kernel(%arg0: i32, %arg1: memref<32x8xf32, #tpu.memory_space<vmem>>, %arg2: memref<128x8xf32, #tpu.memory_space<vmem>>, %arg3: memref<128x32xbf16, #tpu.memory_space<vmem>>, %arg4: memref<128x32xbf16, #tpu.memory_space<vmem>>, %arg5: memref<32x128xbf16, #tpu.memory_space<vmem>>, %arg6: memref<8x128xf32, #tpu.memory_space<vmem>>, %arg7: memref<8x128xf32, #tpu.memory_space<vmem>>, %arg8: memref<8x128xf32, #tpu.memory_space<vmem>>, %arg9: memref<1x128xf32, #tpu.memory_space<vmem>>, %arg10: memref<128x128xf32, #tpu.memory_space<vmem>>, %arg11: memref<1x128xf32, #tpu.memory_space<vmem>>, %arg12: memref<128x128xf32, #tpu.memory_space<vmem>>, %arg13: memref<8x128xf32, #tpu.memory_space<vmem>>, %arg14: memref<1x128xf32, #tpu.memory_space<vmem>>, %arg15: memref<128x128xf32, #tpu.memory_space<vmem>>, %arg16: memref<1x128xf32, #tpu.memory_space<vmem>>, %arg17: memref<128x128xf32, #tpu.memory_space<vmem>>, %arg18: memref<128x128xf32, #tpu.memory_space<vmem>>, %arg19: memref<1x128xf32, #tpu.memory_space<vmem>>, %arg20: memref<128x128xf32, #tpu.memory_space<vmem>>, %arg21: memref<1x128xf32, #tpu.memory_space<vmem>>, %arg22: memref<128x128xf32, #tpu.memory_space<vmem>>, %arg23: memref<32x128xf32, #tpu.memory_space<vmem>>, %arg24: memref<1x128xf32, #tpu.memory_space<vmem>>, %arg25: memref<32x128xf32, #tpu.memory_space<vmem>>) attributes {dimension_semantics = [#tpu.dimension_semantics<arbitrary>], iteration_bounds = array<i64: 2>, scalar_prefetch = 0 : i64, scratch_operands = 1 : i64, tpu.core_type = #tpu.core_type<tc>, window_params = [{pipeline_mode = #tpu.pipeline_mode<synchronous>, transform_indices = @transform_0, window_bounds = array<i64: 32, 8>}, {transform_indices = @transform_1, window_bounds = array<i64: 128, 8>}, {transform_indices = @transform_2, window_bounds = array<i64: 128, 32>}, {transform_indices = @transform_3, window_bounds = array<i64: 128, 32>}, {transform_indices = @transform_4, window_bounds = array<i64: 32, 128>}, {pipeline_mode = #tpu.pipeline_mode<synchronous>, transform_indices = @transform_5, window_bounds = array<i64: 8, 128>}, {pipeline_mode = #tpu.pipeline_mode<synchronous>, transform_indices = @transform_6, window_bounds = array<i64: 8, 128>}, {pipeline_mode = #tpu.pipeline_mode<synchronous>, transform_indices = @transform_7, window_bounds = array<i64: 8, 128>}, {pipeline_mode = #tpu.pipeline_mode<synchronous>, transform_indices = @transform_8, window_bounds = array<i64: 1, 128>}, {pipeline_mode = #tpu.pipeline_mode<synchronous>, transform_indices = @transform_9, window_bounds = array<i64: 128, 128>}, {pipeline_mode = #tpu.pipeline_mode<synchronous>, transform_indices = @transform_10, window_bounds = array<i64: 1, 128>}, {pipeline_mode = #tpu.pipeline_mode<synchronous>, transform_indices = @transform_11, window_bounds = array<i64: 128, 128>}, {pipeline_mode = #tpu.pipeline_mode<synchronous>, transform_indices = @transform_12, window_bounds = array<i64: 8, 128>}, {pipeline_mode = #tpu.pipeline_mode<synchronous>, transform_indices = @transform_13, window_bounds = array<i64: 1, 128>}, {pipeline_mode = #tpu.pipeline_mode<synchronous>, transform_indices = @transform_14, window_bounds = array<i64: 128, 128>}, {pipeline_mode = #tpu.pipeline_mode<synchronous>, transform_indices = @transform_15, window_bounds = array<i64: 1, 128>}, {pipeline_mode = #tpu.pipeline_mode<synchronous>, transform_indices = @transform_16, window_bounds = array<i64: 128, 128>}, {pipeline_mode = #tpu.pipeline_mode<synchronous>, transform_indices = @transform_17, window_bounds = array<i64: 128, 128>}, {pipeline_mode = #tpu.pipeline_mode<synchronous>, transform_indices = @transform_18, window_bounds = array<i64: 1, 128>}, {pipeline_mode = #tpu.pipeline_mode<synchronous>, transform_indices = @transform_19, window_bounds = array<i64: 128, 128>}, {pipeline_mode = #tpu.pipeline_mode<synchronous>, transform_indices = @transform_20, window_bounds = array<i64: 1, 128>}, {transform_indices = @transform_21, window_bounds = array<i64: 128, 128>}, {pipeline_mode = #tpu.pipeline_mode<synchronous>, transform_indices = @transform_22, window_bounds = array<i64: 32, 128>}, {pipeline_mode = #tpu.pipeline_mode<synchronous>, transform_indices = @transform_23, window_bounds = array<i64: 1, 128>}]} {
    %c0_i32 = arith.constant 0 : i32
    %0 = arith.cmpi eq, %arg0, %c0_i32 : i32
    %1 = arith.extui %0 : i1 to i32
    %c0_i32_0 = arith.constant 0 : i32
    %2 = arith.cmpi ne, %1, %c0_i32_0 : i32
    scf.if %2 {
      %cst_36 = arith.constant 0.000000e+00 : f32
      %39 = vector.broadcast %cst_36 : f32 to vector<32x128xf32>
      %c0_37 = arith.constant 0 : index
      %c0_38 = arith.constant 0 : index
      %40 = vector.load %arg25[%c0_37, %c0_38] : memref<32x128xf32, #tpu.memory_space<vmem>>, vector<32x128xf32>
      tpu.vector_store %arg25[%c0_37, %c0_38], %39 {strides = array<i32>} : memref<32x128xf32, #tpu.memory_space<vmem>>, vector<32x128xf32>,
    } else {
    }
    %c0 = arith.constant 0 : index
    %c0_1 = arith.constant 0 : index
    %3 = vector.load %arg1[%c0, %c0_1] : memref<32x8xf32, #tpu.memory_space<vmem>>, vector<32x8xf32>
    %c0_2 = arith.constant 0 : index
    %c0_3 = arith.constant 0 : index
    %4 = vector.load %arg2[%c0_2, %c0_3] : memref<128x8xf32, #tpu.memory_space<vmem>>, vector<128x8xf32>
    %c0_4 = arith.constant 0 : index
    %c0_5 = arith.constant 0 : index
    %5 = vector.load %arg3[%c0_4, %c0_5] : memref<128x32xbf16, #tpu.memory_space<vmem>>, vector<128x32xbf16>
    %6 = arith.extf %5 : vector<128x32xbf16> to vector<128x32xf32>
    %c0_6 = arith.constant 0 : index
    %c0_7 = arith.constant 0 : index
    %7 = vector.load %arg4[%c0_6, %c0_7] : memref<128x32xbf16, #tpu.memory_space<vmem>>, vector<128x32xbf16>
    %8 = arith.extf %7 : vector<128x32xbf16> to vector<128x32xf32>
    %c0_8 = arith.constant 0 : index
    %c0_9 = arith.constant 0 : index
    %9 = vector.load %arg5[%c0_8, %c0_9] : memref<32x128xbf16, #tpu.memory_space<vmem>>, vector<32x128xbf16>
    %10 = arith.extf %9 : vector<32x128xbf16> to vector<32x128xf32>
    %c0_10 = arith.constant 0 : index
    %c0_11 = arith.constant 0 : index
    %11 = vector.load %arg7[%c0_10, %c0_11] : memref<8x128xf32, #tpu.memory_space<vmem>>, vector<8x128xf32>
    %cst = arith.constant dense<0.000000e+00> : vector<32x128xf32>
    %12 = tpu.matmul %3, %11, %cst {dimension_numbers = #tpu.dot_dimension_numbers<[1], [0], [0], [1], [0, 0, 1, 1], [], []>} : vector<32x8xf32>, vector<8x128xf32>, vector<32x128xf32> -> vector<32x128xf32>
    %c0_12 = arith.constant 0 : index
    %c0_13 = arith.constant 0 : index
    %13 = vector.load %arg8[%c0_12, %c0_13] : memref<8x128xf32, #tpu.memory_space<vmem>>, vector<8x128xf32>
    %cst_14 = arith.constant dense<0.000000e+00> : vector<32x128xf32>
    %14 = tpu.matmul %3, %13, %cst_14 {dimension_numbers = #tpu.dot_dimension_numbers<[1], [0], [0], [1], [0, 0, 1, 1], [], []>} : vector<32x8xf32>, vector<8x128xf32>, vector<32x128xf32> -> vector<32x128xf32>
    %c0_15 = arith.constant 0 : index
    %c0_16 = arith.constant 0 : index
    %15 = vector.load %arg6[%c0_15, %c0_16] : memref<8x128xf32, #tpu.memory_space<vmem>>, vector<8x128xf32>
    %cst_17 = arith.constant dense<0.000000e+00> : vector<128x128xf32>
    %16 = tpu.matmul %4, %15, %cst_17 {dimension_numbers = #tpu.dot_dimension_numbers<[1], [0], [0], [1], [0, 0, 1, 1], [], []>} : vector<128x8xf32>, vector<8x128xf32>, vector<128x128xf32> -> vector<128x128xf32>
    %cst_18 = arith.constant dense<0.000000e+00> : vector<128x128xf32>
    %17 = tpu.matmul %6, %12, %cst_18 {dimension_numbers = #tpu.dot_dimension_numbers<[1], [0], [0], [1], [0, 0, 1, 1], [], []>} : vector<128x32xf32>, vector<32x128xf32>, vector<128x128xf32> -> vector<128x128xf32>
    %18 = arith.addf %16, %17 : vector<128x128xf32>
    %cst_19 = arith.constant dense<0.000000e+00> : vector<128x128xf32>
    %19 = tpu.matmul %8, %14, %cst_19 {dimension_numbers = #tpu.dot_dimension_numbers<[1], [0], [0], [1], [0, 0, 1, 1], [], []>} : vector<128x32xf32>, vector<32x128xf32>, vector<128x128xf32> -> vector<128x128xf32>
    %20 = arith.addf %18, %19 : vector<128x128xf32>
    %c0_20 = arith.constant 0 : index
    %c0_21 = arith.constant 0 : index
    %21 = vector.load %arg9[%c0_20, %c0_21] : memref<1x128xf32, #tpu.memory_space<vmem>>, vector<1x128xf32>
    %22 = vector.broadcast %21 : vector<1x128xf32> to vector<128x128xf32>
    %23 = arith.addf %20, %22 : vector<128x128xf32>
    %cst_22 = arith.constant 0.000000e+00 : f32
    %24 = vector.broadcast %cst_22 : f32 to vector<128x128xf32>
    %25 = arith.maximumf %23, %24 : vector<128x128xf32>
    %c0_23 = arith.constant 0 : index
    %c0_24 = arith.constant 0 : index
    %26 = vector.load %arg10[%c0_23, %c0_24] : memref<128x128xf32, #tpu.memory_space<vmem>>, vector<128x128xf32>
    %cst_25 = arith.constant dense<0.000000e+00> : vector<128x128xf32>
    %27 = tpu.matmul %25, %26, %cst_25 {dimension_numbers = #tpu.dot_dimension_numbers<[1], [0], [0], [1], [0, 0, 1, 1], [], []>} : vector<128x128xf32>, vector<128x128xf32>, vector<128x128xf32> -> vector<128x128xf32>
    %c0_26 = arith.constant 0 : index
    %c0_27 = arith.constant 0 : index
    %28 = vector.load %arg11[%c0_26, %c0_27] : memref<1x128xf32, #tpu.memory_space<vmem>>, vector<1x128xf32>
    %29 = vector.broadcast %28 : vector<1x128xf32> to vector<128x128xf32>
    %30 = arith.addf %27, %29 : vector<128x128xf32>
    %c0_28 = arith.constant 0 : index
    %c0_29 = arith.constant 0 : index
    %31 = vector.load %arg22[%c0_28, %c0_29] : memref<128x128xf32, #tpu.memory_space<vmem>>, vector<128x128xf32>
    tpu.vector_store %arg22[%c0_28, %c0_29], %30 {strides = array<i32>} : memref<128x128xf32, #tpu.memory_space<vmem>>, vector<128x128xf32>,
    %c0_30 = arith.constant 0 : index
    %c0_31 = arith.constant 0 : index
    %32 = vector.load %arg25[%c0_30, %c0_31] : memref<32x128xf32, #tpu.memory_space<vmem>>, vector<32x128xf32>
    %cst_32 = arith.constant dense<0.000000e+00> : vector<32x128xf32>
    %33 = tpu.matmul %10, %30, %cst_32 {dimension_numbers = #tpu.dot_dimension_numbers<[1], [0], [0], [1], [0, 0, 1, 1], [], []>} : vector<32x128xf32>, vector<128x128xf32>, vector<32x128xf32> -> vector<32x128xf32>
    %34 = arith.addf %32, %33 : vector<32x128xf32>
    %c0_33 = arith.constant 0 : index
    %c0_34 = arith.constant 0 : index
    %35 = vector.load %arg25[%c0_33, %c0_34] : memref<32x128xf32, #tpu.memory_space<vmem>>, vector<32x128xf32>
    tpu.vector_store %arg25[%c0_33, %c0_34], %34 {strides = array<i32>} : memref<32x128xf32, #tpu.memory_space<vmem>>, vector<32x128xf32>,
    %c1_i32 = arith.constant 1 : i32
    %36 = arith.cmpi eq, %arg0, %c1_i32 : i32
    %37 = arith.extui %36 : i1 to i32
    %c0_i32_35 = arith.constant 0 : i32
    %38 = arith.cmpi ne, %37, %c0_i32_35 : i32
    scf.if %38 {
      %c0_36 = arith.constant 0 : index
      %c0_37 = arith.constant 0 : index
      %39 = vector.load %arg25[%c0_36, %c0_37] : memref<32x128xf32, #tpu.memory_space<vmem>>, vector<32x128xf32>
      %c0_38 = arith.constant 0 : index
      %c0_39 = arith.constant 0 : index
      %40 = vector.load %arg12[%c0_38, %c0_39] : memref<128x128xf32, #tpu.memory_space<vmem>>, vector<128x128xf32>
      %cst_40 = arith.constant dense<0.000000e+00> : vector<32x128xf32>
      %41 = tpu.matmul %39, %40, %cst_40 {dimension_numbers = #tpu.dot_dimension_numbers<[1], [0], [0], [1], [0, 0, 1, 1], [], []>} : vector<32x128xf32>, vector<128x128xf32>, vector<32x128xf32> -> vector<32x128xf32>
      %c0_41 = arith.constant 0 : index
      %c0_42 = arith.constant 0 : index
      %42 = vector.load %arg13[%c0_41, %c0_42] : memref<8x128xf32, #tpu.memory_space<vmem>>, vector<8x128xf32>
      %cst_43 = arith.constant dense<0.000000e+00> : vector<32x128xf32>
      %43 = tpu.matmul %3, %42, %cst_43 {dimension_numbers = #tpu.dot_dimension_numbers<[1], [0], [0], [1], [0, 0, 1, 1], [], []>} : vector<32x8xf32>, vector<8x128xf32>, vector<32x128xf32> -> vector<32x128xf32>
      %44 = arith.addf %41, %43 : vector<32x128xf32>
      %c0_44 = arith.constant 0 : index
      %c0_45 = arith.constant 0 : index
      %45 = vector.load %arg14[%c0_44, %c0_45] : memref<1x128xf32, #tpu.memory_space<vmem>>, vector<1x128xf32>
      %46 = vector.broadcast %45 : vector<1x128xf32> to vector<32x128xf32>
      %47 = arith.addf %44, %46 : vector<32x128xf32>
      %cst_46 = arith.constant 0.000000e+00 : f32
      %48 = vector.broadcast %cst_46 : f32 to vector<32x128xf32>
      %49 = arith.maximumf %47, %48 : vector<32x128xf32>
      %c0_47 = arith.constant 0 : index
      %c0_48 = arith.constant 0 : index
      %50 = vector.load %arg15[%c0_47, %c0_48] : memref<128x128xf32, #tpu.memory_space<vmem>>, vector<128x128xf32>
      %cst_49 = arith.constant dense<0.000000e+00> : vector<32x128xf32>
      %51 = tpu.matmul %49, %50, %cst_49 {dimension_numbers = #tpu.dot_dimension_numbers<[1], [0], [0], [1], [0, 0, 1, 1], [], []>} : vector<32x128xf32>, vector<128x128xf32>, vector<32x128xf32> -> vector<32x128xf32>
      %c0_50 = arith.constant 0 : index
      %c0_51 = arith.constant 0 : index
      %52 = vector.load %arg16[%c0_50, %c0_51] : memref<1x128xf32, #tpu.memory_space<vmem>>, vector<1x128xf32>
      %53 = vector.broadcast %52 : vector<1x128xf32> to vector<32x128xf32>
      %54 = arith.addf %51, %53 : vector<32x128xf32>
      %c0_52 = arith.constant 0 : index
      %c0_53 = arith.constant 0 : index
      %55 = vector.load %arg23[%c0_52, %c0_53] : memref<32x128xf32, #tpu.memory_space<vmem>>, vector<32x128xf32>
      tpu.vector_store %arg23[%c0_52, %c0_53], %54 {strides = array<i32>} : memref<32x128xf32, #tpu.memory_space<vmem>>, vector<32x128xf32>,
      %cst_54 = arith.constant dense<0.000000e+00> : vector<128xf32>
      %56 = vector.multi_reduction <add>, %39, %cst_54 [0] : vector<32x128xf32> to vector<128xf32>
      %57 = vector.shape_cast %56 : vector<128xf32> to vector<1x128xf32>
      %cst_55 = arith.constant dense<0.000000e+00> : vector<128xf32>
      %58 = vector.multi_reduction <add>, %54, %cst_55 [0] : vector<32x128xf32> to vector<128xf32>
      %59 = vector.shape_cast %58 : vector<128xf32> to vector<1x128xf32>
      %c0_56 = arith.constant 0 : index
      %c0_57 = arith.constant 0 : index
      %60 = vector.load %arg17[%c0_56, %c0_57] : memref<128x128xf32, #tpu.memory_space<vmem>>, vector<128x128xf32>
      %cst_58 = arith.constant dense<0.000000e+00> : vector<1x128xf32>
      %61 = tpu.matmul %57, %60, %cst_58 {dimension_numbers = #tpu.dot_dimension_numbers<[1], [0], [0], [1], [0, 0, 1, 1], [], []>} : vector<1x128xf32>, vector<128x128xf32>, vector<1x128xf32> -> vector<1x128xf32>
      %c0_59 = arith.constant 0 : index
      %c0_60 = arith.constant 0 : index
      %62 = vector.load %arg18[%c0_59, %c0_60] : memref<128x128xf32, #tpu.memory_space<vmem>>, vector<128x128xf32>
      %cst_61 = arith.constant dense<0.000000e+00> : vector<1x128xf32>
      %63 = tpu.matmul %59, %62, %cst_61 {dimension_numbers = #tpu.dot_dimension_numbers<[1], [0], [0], [1], [0, 0, 1, 1], [], []>} : vector<1x128xf32>, vector<128x128xf32>, vector<1x128xf32> -> vector<1x128xf32>
      %64 = arith.addf %61, %63 : vector<1x128xf32>
      %c0_62 = arith.constant 0 : index
      %c0_63 = arith.constant 0 : index
      %65 = vector.load %arg19[%c0_62, %c0_63] : memref<1x128xf32, #tpu.memory_space<vmem>>, vector<1x128xf32>
      %66 = arith.addf %64, %65 : vector<1x128xf32>
      %cst_64 = arith.constant 0.000000e+00 : f32
      %67 = vector.broadcast %cst_64 : f32 to vector<1x128xf32>
      %68 = arith.maximumf %66, %67 : vector<1x128xf32>
      %c0_65 = arith.constant 0 : index
      %c0_66 = arith.constant 0 : index
      %69 = vector.load %arg20[%c0_65, %c0_66] : memref<128x128xf32, #tpu.memory_space<vmem>>, vector<128x128xf32>
      %cst_67 = arith.constant dense<0.000000e+00> : vector<1x128xf32>
      %70 = tpu.matmul %68, %69, %cst_67 {dimension_numbers = #tpu.dot_dimension_numbers<[1], [0], [0], [1], [0, 0, 1, 1], [], []>} : vector<1x128xf32>, vector<128x128xf32>, vector<1x128xf32> -> vector<1x128xf32>
      %c0_68 = arith.constant 0 : index
      %c0_69 = arith.constant 0 : index
      %71 = vector.load %arg21[%c0_68, %c0_69] : memref<1x128xf32, #tpu.memory_space<vmem>>, vector<1x128xf32>
      %72 = arith.addf %70, %71 : vector<1x128xf32>
      %c0_70 = arith.constant 0 : index
      %c0_71 = arith.constant 0 : index
      %73 = vector.load %arg24[%c0_70, %c0_71] : memref<1x128xf32, #tpu.memory_space<vmem>>, vector<1x128xf32>
      tpu.vector_store %arg24[%c0_70, %c0_71], %72 {strides = array<i32>} : memref<1x128xf32, #tpu.memory_space<vmem>>, vector<1x128xf32>,
    } else {
    }
    return
  }
  func.func @transform_0(%arg0: i32) -> (i32, i32) {
    %c0_i32 = arith.constant 0 : i32
    %c0_i32_0 = arith.constant 0 : i32
    %c0_i32_1 = arith.constant 0 : i32
    return %c0_i32, %c0_i32_0 : i32, i32
  }
  func.func @transform_1(%arg0: i32) -> (i32, i32) {
    %c0_i32 = arith.constant 0 : i32
    %c0_i32_0 = arith.constant 0 : i32
    return %arg0, %c0_i32 : i32, i32
  }
  func.func @transform_2(%arg0: i32) -> (i32, i32) {
    %c0_i32 = arith.constant 0 : i32
    %c0_i32_0 = arith.constant 0 : i32
    return %arg0, %c0_i32 : i32, i32
  }
  func.func @transform_3(%arg0: i32) -> (i32, i32) {
    %c0_i32 = arith.constant 0 : i32
    %c0_i32_0 = arith.constant 0 : i32
    return %arg0, %c0_i32 : i32, i32
  }
  func.func @transform_4(%arg0: i32) -> (i32, i32) {
    %c0_i32 = arith.constant 0 : i32
    %c0_i32_0 = arith.constant 0 : i32
    return %c0_i32, %arg0 : i32, i32
  }
  func.func @transform_5(%arg0: i32) -> (i32, i32) {
    %c0_i32 = arith.constant 0 : i32
    %c0_i32_0 = arith.constant 0 : i32
    %c0_i32_1 = arith.constant 0 : i32
    return %c0_i32, %c0_i32_0 : i32, i32
  }
  func.func @transform_6(%arg0: i32) -> (i32, i32) {
    %c0_i32 = arith.constant 0 : i32
    %c0_i32_0 = arith.constant 0 : i32
    %c0_i32_1 = arith.constant 0 : i32
    return %c0_i32, %c0_i32_0 : i32, i32
  }
  func.func @transform_7(%arg0: i32) -> (i32, i32) {
    %c0_i32 = arith.constant 0 : i32
    %c0_i32_0 = arith.constant 0 : i32
    %c0_i32_1 = arith.constant 0 : i32
    return %c0_i32, %c0_i32_0 : i32, i32
  }
  func.func @transform_8(%arg0: i32) -> (i32, i32) {
    %c0_i32 = arith.constant 0 : i32
    %c0_i32_0 = arith.constant 0 : i32
    %c0_i32_1 = arith.constant 0 : i32
    return %c0_i32, %c0_i32_0 : i32, i32
  }
  func.func @transform_9(%arg0: i32) -> (i32, i32) {
    %c0_i32 = arith.constant 0 : i32
    %c0_i32_0 = arith.constant 0 : i32
    %c0_i32_1 = arith.constant 0 : i32
    return %c0_i32, %c0_i32_0 : i32, i32
  }
  func.func @transform_10(%arg0: i32) -> (i32, i32) {
    %c0_i32 = arith.constant 0 : i32
    %c0_i32_0 = arith.constant 0 : i32
    %c0_i32_1 = arith.constant 0 : i32
    return %c0_i32, %c0_i32_0 : i32, i32
  }
  func.func @transform_11(%arg0: i32) -> (i32, i32) {
    %c0_i32 = arith.constant 0 : i32
    %c0_i32_0 = arith.constant 0 : i32
    %c0_i32_1 = arith.constant 0 : i32
    return %c0_i32, %c0_i32_0 : i32, i32
  }
  func.func @transform_12(%arg0: i32) -> (i32, i32) {
    %c0_i32 = arith.constant 0 : i32
    %c0_i32_0 = arith.constant 0 : i32
    %c0_i32_1 = arith.constant 0 : i32
    return %c0_i32, %c0_i32_0 : i32, i32
  }
  func.func @transform_13(%arg0: i32) -> (i32, i32) {
    %c0_i32 = arith.constant 0 : i32
    %c0_i32_0 = arith.constant 0 : i32
    %c0_i32_1 = arith.constant 0 : i32
    return %c0_i32, %c0_i32_0 : i32, i32
  }
  func.func @transform_14(%arg0: i32) -> (i32, i32) {
    %c0_i32 = arith.constant 0 : i32
    %c0_i32_0 = arith.constant 0 : i32
    %c0_i32_1 = arith.constant 0 : i32
    return %c0_i32, %c0_i32_0 : i32, i32
  }
  func.func @transform_15(%arg0: i32) -> (i32, i32) {
    %c0_i32 = arith.constant 0 : i32
    %c0_i32_0 = arith.constant 0 : i32
    %c0_i32_1 = arith.constant 0 : i32
    return %c0_i32, %c0_i32_0 : i32, i32
  }
  func.func @transform_16(%arg0: i32) -> (i32, i32) {
    %c0_i32 = arith.constant 0 : i32
    %c0_i32_0 = arith.constant 0 : i32
    %c0_i32_1 = arith.constant 0 : i32
    return %c0_i32, %c0_i32_0 : i32, i32
  }
  func.func @transform_17(%arg0: i32) -> (i32, i32) {
    %c0_i32 = arith.constant 0 : i32
    %c0_i32_0 = arith.constant 0 : i32
    %c0_i32_1 = arith.constant 0 : i32
    return %c0_i32, %c0_i32_0 : i32, i32
  }
  func.func @transform_18(%arg0: i32) -> (i32, i32) {
    %c0_i32 = arith.constant 0 : i32
    %c0_i32_0 = arith.constant 0 : i32
    %c0_i32_1 = arith.constant 0 : i32
    return %c0_i32, %c0_i32_0 : i32, i32
  }
  func.func @transform_19(%arg0: i32) -> (i32, i32) {
    %c0_i32 = arith.constant 0 : i32
    %c0_i32_0 = arith.constant 0 : i32
    %c0_i32_1 = arith.constant 0 : i32
    return %c0_i32, %c0_i32_0 : i32, i32
  }
  func.func @transform_20(%arg0: i32) -> (i32, i32) {
    %c0_i32 = arith.constant 0 : i32
    %c0_i32_0 = arith.constant 0 : i32
    %c0_i32_1 = arith.constant 0 : i32
    return %c0_i32, %c0_i32_0 : i32, i32
  }
  func.func @transform_21(%arg0: i32) -> (i32, i32) {
    %c0_i32 = arith.constant 0 : i32
    %c0_i32_0 = arith.constant 0 : i32
    return %arg0, %c0_i32 : i32, i32
  }
  func.func @transform_22(%arg0: i32) -> (i32, i32) {
    %c0_i32 = arith.constant 0 : i32
    %c0_i32_0 = arith.constant 0 : i32
    %c0_i32_1 = arith.constant 0 : i32
    return %c0_i32, %c0_i32_0 : i32, i32
  }
  func.func @transform_23(%arg0: i32) -> (i32, i32) {
    %c0_i32 = arith.constant 0 : i32
    %c0_i32_0 = arith.constant 0 : i32
    %c0_i32_1 = arith.constant 0 : i32
    return %c0_i32, %c0_i32_0 : i32, i32
  }
}

</mosaic_0001>

<llo_original>
// kernel: tpu_custom_call.1
$region0: #{tpu_custom_call.1}
  #allocation0 [shape = 'u32[]', space=smem, size = 0x4, offset = 0x4, fixed_abs, tag = 'smem constant byte address 0x4 - core index']
  #allocation1 [shape = 'u32[144,128]{1,0:T(1,128)}', space=vmem, size = 0x12000, scoped, tag = 'internal scratch']
  #allocation2 [shape = 'f32[32,128]{1,0:T(8,128)}', space=vmem, size = 0x4000, scoped, tag = 'scratch operand']
  %s0 = inlined_call_operand.hbm [shape: f32[32,8], index: 0, kind: input, shape index: {}]
  %s1 = inlined_call_operand.hbm [shape: f32[256,8], index: 1, kind: input, shape index: {}]
  %s2 = inlined_call_operand.hbm [shape: bf16[256,32], index: 2, kind: input, shape index: {}]
  %s3 = inlined_call_operand.hbm [shape: bf16[256,32], index: 3, kind: input, shape index: {}]
  %s4 = inlined_call_operand.hbm [shape: bf16[32,256], index: 4, kind: input, shape index: {}]
  %s5 = inlined_call_operand.hbm [shape: f32[8,128], index: 5, kind: input, shape index: {}]
  %s6 = inlined_call_operand.hbm [shape: f32[8,128], index: 6, kind: input, shape index: {}]
  %s7 = inlined_call_operand.hbm [shape: f32[8,128], index: 7, kind: input, shape index: {}]
  %s8 = inlined_call_operand.hbm [shape: f32[1,128], index: 8, kind: input, shape index: {}]
  %s9 = inlined_call_operand.hbm [shape: f32[128,128], index: 9, kind: input, shape index: {}]
  %s10 = inlined_call_operand.hbm [shape: f32[1,128], index: 10, kind: input, shape index: {}]
  %s11 = inlined_call_operand.hbm [shape: f32[128,128], index: 11, kind: input, shape index: {}]
  %s12 = inlined_call_operand.hbm [shape: f32[8,128], index: 12, kind: input, shape index: {}]
  %s13 = inlined_call_operand.hbm [shape: f32[1,128], index: 13, kind: input, shape index: {}]
  %s14 = inlined_call_operand.hbm [shape: f32[128,128], index: 14, kind: input, shape index: {}]
  %s15 = inlined_call_operand.hbm [shape: f32[1,128], index: 15, kind: input, shape index: {}]
  %s16 = inlined_call_operand.hbm [shape: f32[128,128], index: 16, kind: input, shape index: {}]
  %s17 = inlined_call_operand.hbm [shape: f32[128,128], index: 17, kind: input, shape index: {}]
  %s18 = inlined_call_operand.hbm [shape: f32[1,128], index: 18, kind: input, shape index: {}]
  %s19 = inlined_call_operand.hbm [shape: f32[128,128], index: 19, kind: input, shape index: {}]
  %s20 = inlined_call_operand.hbm [shape: f32[1,128], index: 20, kind: input, shape index: {}]
  %s21 = inlined_call_operand.hbm [shape: f32[256,128], index: 21, kind: output, shape index: {0}]
  %s22 = inlined_call_operand.hbm [shape: f32[32,128], index: 22, kind: output, shape index: {1}]
  %s23 = inlined_call_operand.hbm [shape: f32[1,128], index: 23, kind: output, shape index: {2}]
  %24 = xla_tuple %s21, %s22, %s23
  %s25 = sld [smem:[#allocation0]]
  $region225: #{tpu_custom_call.1} parent=0
    _
  %s27 = ssub.s32 1, %s25
  %s28 = scalar_select 0, %s27, %s25
  $region1: #{tpu_custom_call.1} parent=0
    #allocation3 [shape = 'u8[16384]{0}', space=vmem, size = 0x4000, scoped, tag = 'input window, operand 0, single buffered']
    #allocation4 [shape = 's32[2]{0}', space=sflag, size = 0x8, scoped, tag = 'scoped memory for tpu_custom_call.1']
    #allocation5 [shape = 's32[2]{0}', space=sflag, size = 0x8, scoped, tag = 'scoped memory for tpu_custom_call.1']
    #allocation6 [shape = 'u8[131072]{0}', space=vmem, size = 0x20000, scoped, tag = 'input window, operand 1']
    #allocation7 [shape = 's32[2]{0}', space=sflag, size = 0x8, scoped, tag = 'scoped memory for tpu_custom_call.1']
    #allocation8 [shape = 'u8[65536]{0}', space=vmem, size = 0x10000, scoped, tag = 'input window, operand 2']
    #allocation9 [shape = 'u8[65536]{0}', space=vmem, size = 0x10000, scoped, tag = 'input window, operand 3']
    #allocation10 [shape = 's32[2]{0}', space=sflag, size = 0x8, scoped, tag = 'scoped memory for tpu_custom_call.1']
    #allocation11 [shape = 'u8[16384]{0}', space=vmem, size = 0x4000, scoped, tag = 'input window, operand 4']
    #allocation12 [shape = 'u8[4096]{0}', space=vmem, size = 0x1000, scoped, tag = 'input window, operand 5, single buffered']
    #allocation13 [shape = 's32[1]{0}', space=sflag, size = 0x4, scoped, tag = 'scoped memory for tpu_custom_call.1']
    #allocation14 [shape = 'u8[4096]{0}', space=vmem, size = 0x1000, scoped, tag = 'input window, operand 6, single buffered']
    #allocation15 [shape = 'u8[4096]{0}', space=vmem, size = 0x1000, scoped, tag = 'input window, operand 7, single buffered']
    #allocation16 [shape = 's32[1]{0}', space=sflag, size = 0x4, scoped, tag = 'scoped memory for tpu_custom_call.1']
    #allocation17 [shape = 'u8[512]{0}', space=vmem, size = 0x400, scoped, tag = 'input window, operand 8, single buffered']
    #allocation18 [shape = 'u8[65536]{0}', space=vmem, size = 0x10000, scoped, tag = 'input window, operand 9, single buffered']
    #allocation19 [shape = 's32[1]{0}', space=sflag, size = 0x4, scoped, tag = 'scoped memory for tpu_custom_call.1']
    #allocation20 [shape = 'u8[512]{0}', space=vmem, size = 0x400, scoped, tag = 'input window, operand 10, single buffered']
    #allocation21 [shape = 'u8[65536]{0}', space=vmem, size = 0x10000, scoped, tag = 'input window, operand 11, single buffered']
    #allocation22 [shape = 's32[1]{0}', space=sflag, size = 0x4, scoped, tag = 'scoped memory for tpu_custom_call.1']
    #allocation23 [shape = 'u8[4096]{0}', space=vmem, size = 0x1000, scoped, tag = 'input window, operand 12, single buffered']
    #allocation24 [shape = 'u8[512]{0}', space=vmem, size = 0x400, scoped, tag = 'input window, operand 13, single buffered']
    #allocation25 [shape = 's32[1]{0}', space=sflag, size = 0x4, scoped, tag = 'scoped memory for tpu_custom_call.1']
    #allocation26 [shape = 'u8[65536]{0}', space=vmem, size = 0x10000, scoped, tag = 'input window, operand 14, single buffered']
    #allocation27 [shape = 'u8[512]{0}', space=vmem, size = 0x400, scoped, tag = 'input window, operand 15, single buffered']
    #allocation28 [shape = 's32[1]{0}', space=sflag, size = 0x4, scoped, tag = 'scoped memory for tpu_custom_call.1']
    #allocation29 [shape = 'u8[65536]{0}', space=vmem, size = 0x10000, scoped, tag = 'input window, operand 16, single buffered']
    #allocation30 [shape = 'u8[65536]{0}', space=vmem, size = 0x10000, scoped, tag = 'input window, operand 17, single buffered']
    #allocation31 [shape = 's32[1]{0}', space=sflag, size = 0x4, scoped, tag = 'scoped memory for tpu_custom_call.1']
    #allocation32 [shape = 'u8[512]{0}', space=vmem, size = 0x400, scoped, tag = 'input window, operand 18, single buffered']
    #allocation33 [shape = 'u8[65536]{0}', space=vmem, size = 0x10000, scoped, tag = 'input window, operand 19, single buffered']
    #allocation34 [shape = 's32[1]{0}', space=sflag, size = 0x4, scoped, tag = 'scoped memory for tpu_custom_call.1']
    #allocation35 [shape = 'u8[512]{0}', space=vmem, size = 0x400, scoped, tag = 'input window, operand 20, single buffered']
    #allocation36 [shape = 'u8[131072]{0}', space=vmem, size = 0x20000, scoped, tag = 'output window, operand 0']
    #allocation37 [shape = 'u8[16384]{0}', space=vmem, size = 0x4000, scoped, tag = 'output window, operand 1, single buffered']
    #allocation38 [shape = 's32[1]{0}', space=sflag, size = 0x4, scoped, tag = 'scoped memory for tpu_custom_call.1']
    #allocation39 [shape = 'u8[512]{0}', space=vmem, size = 0x400, scoped, tag = 'output window, operand 2, single buffered']
    %29 = vsyncpa [#allocation4], 0
    %30 = vsyncpa [#allocation7], 0
    %s31 = scalar_lea.sflag [#allocation7], 1
    %32 = vsyncpa %s31, 0
    %33 = vsyncpa [#allocation10], 0
    %s34 = scalar_lea.sflag [#allocation10], 1
    %35 = vsyncpa %s34, 0
    %36 = vsyncpa [#allocation13], 0
    %37 = vsyncpa [#allocation16], 0
    %38 = vsyncpa [#allocation19], 0
    %39 = vsyncpa [#allocation22], 0
    %40 = vsyncpa [#allocation25], 0
    %41 = vsyncpa [#allocation28], 0
    %42 = vsyncpa [#allocation31], 0
    %43 = vsyncpa [#allocation34], 0
    %44 = vsyncpa [#allocation5], 0
    %s45 = scalar_lea.sflag [#allocation5], 1
    %46 = vsyncpa %s45, 0
    %47 = vsyncpa [#allocation38], 0
    loop: start=0, step=1, limit=4
    $region2: #{tpu_custom_call.1} parent=1 // loop_pre_header
      _
    $region3: #{tpu_custom_call.1} parent=1 // loop_header
      %s49 = sphi 0, %s53
      %p50 = scmp.ge.s32.totalorder %s49, 4
      %s57 = sphi 0, %s57
      %s59 = sphi 0, %s57
      %s60 = sphi 0, %s59
      %s74 = sphi 0, %s60
      %s80 = sphi 0, %s82
      %s83 = sphi 0, %s80
      %s84 = sphi 0, %s83
      %s100 = sphi 0, %s84
      %s106 = sphi 0, %s108
      %s109 = sphi 0, %s106
      %s110 = sphi 0, %s109
      %s126 = sphi 0, %s110
      %s132 = sphi 0, %s134
      %s135 = sphi 0, %s132
      %s136 = sphi 0, %s135
      %s152 = sphi 0, %s136
      %s158 = sphi 0, %s160
      %s161 = sphi 0, %s158
      %s162 = sphi 0, %s161
      %s178 = sphi 0, %s162
      %s182 = sphi 0, %s182
      %s184 = sphi 0, %s182
      %s185 = sphi 0, %s184
      %s199 = sphi 0, %s185
      %s203 = sphi 0, %s203
      %s205 = sphi 0, %s203
      %s206 = sphi 0, %s205
      %s220 = sphi 0, %s206
      %s224 = sphi 0, %s224
      %s226 = sphi 0, %s224
      %s227 = sphi 0, %s226
      %s241 = sphi 0, %s227
      %s245 = sphi 0, %s245
      %s247 = sphi 0, %s245
      %s248 = sphi 0, %s247
      %s262 = sphi 0, %s248
      %s266 = sphi 0, %s266
      %s268 = sphi 0, %s266
      %s269 = sphi 0, %s268
      %s283 = sphi 0, %s269
      %s287 = sphi 0, %s287
      %s289 = sphi 0, %s287
      %s290 = sphi 0, %s289
      %s304 = sphi 0, %s290
      %s308 = sphi 0, %s308
      %s310 = sphi 0, %s308
      %s311 = sphi 0, %s310
      %s325 = sphi 0, %s311
      %s329 = sphi 0, %s329
      %s331 = sphi 0, %s329
      %s332 = sphi 0, %s331
      %s346 = sphi 0, %s332
      %s350 = sphi 0, %s350
      %s352 = sphi 0, %s350
      %s353 = sphi 0, %s352
      %s367 = sphi 0, %s353
      %s371 = sphi 0, %s371
      %s373 = sphi 0, %s371
      %s374 = sphi 0, %s373
      %s388 = sphi 0, %s374
      %s392 = sphi 0, %s392
      %s394 = sphi 0, %s392
      %s395 = sphi 0, %s394
      %s409 = sphi 0, %s395
      %s413 = sphi 0, %s413
      %s415 = sphi 0, %s413
      %s416 = sphi 0, %s415
      %s430 = sphi 0, %s416
      %s434 = sphi 0, %s434
      %s436 = sphi 0, %s434
      %s437 = sphi 0, %s436
      %s451 = sphi 0, %s437
      %s455 = sphi 0, %s455
      %s457 = sphi 0, %s455
      %s458 = sphi 0, %s457
      %s472 = sphi 0, %s458
      %s476 = sphi 0, %s476
      %s478 = sphi 0, %s476
      %s479 = sphi 0, %s478
      %s493 = sphi 0, %s479
      %s497 = sphi 0, %s497
      %s499 = sphi 0, %s497
      %s500 = sphi 0, %s499
      %s514 = sphi 0, %s500
      %s520 = sphi 0, %s522
      %s523 = sphi 0, %s520
      %s524 = sphi 0, %s523
      %s540 = sphi 0, %s524
      %s544 = sphi 0, %s544
      %s546 = sphi 0, %s544
      %s547 = sphi 0, %s546
      %s561 = sphi 0, %s547
      %s565 = sphi 0, %s565
      %s567 = sphi 0, %s565
      %s568 = sphi 0, %s567
      %s582 = sphi 0, %s568
    $region4: #{tpu_custom_call.1} parent=1 // loop_header_branch
      %52 = sbr.rel (%p50) target = $region8
    $region5: #{tpu_custom_call.1} parent=1 // loop_body
      %s54 = ssub.s32 %s49, 1
      %s55 = ssub.s32 %s49, 2
      %s56 = sadd.s32 %s49, 1
      %s58 = sadd.s32 %s57, 1
      %p61 = scmp.eq.s32.totalorder %s49, 1
      %p62 = scmp.ne.s32.totalorder %s57, %s59
      %p63 = scmp.eq.s32.totalorder %s49, 0
      %p64 = por %p62, %p63
      %p65 = scmp.ne.s32.totalorder %s57, %s59
      %p66 = scmp.eq.s32.totalorder %s54, 1
      %p67 = por %p65, %p66
      %p68 = scmp.ne.s32.totalorder %s59, %s60
      %p69 = scmp.eq.s32.totalorder %s54, 0
      %p70 = por %p68, %p69
      %p71 = scmp.ne.s32.totalorder %s59, %s60
      %p72 = scmp.eq.s32.totalorder %s55, 1
      %p73 = por %p71, %p72
      %p75 = scmp.ne.s32.totalorder %s60, %s74
      %p76 = scmp.eq.s32.totalorder %s55, 0
      %p77 = por %p75, %p76
      %s78 = ssub.s32 %s49, %s56
      %p79 = scmp.eq.s32.totalorder %s78, 0
      %s81 = sadd.s32 %s80, 1
      %s82 = scalar_select %p79, %s80, %s81
      %p85 = pneg %p79
      %p86 = scmp.eq.s32.totalorder %s49, 1
      %p87 = por %p85, %p86
      %p88 = scmp.ne.s32.totalorder %s80, %s83
      %p89 = scmp.eq.s32.totalorder %s49, 0
      %p90 = por %p88, %p89
      %p91 = scmp.ne.s32.totalorder %s80, %s83
      %p92 = scmp.eq.s32.totalorder %s54, 1
      %p93 = por %p91, %p92
      %p94 = scmp.ne.s32.totalorder %s83, %s84
      %p95 = scmp.eq.s32.totalorder %s54, 0
      %p96 = por %p94, %p95
      %p97 = scmp.ne.s32.totalorder %s83, %s84
      %p98 = scmp.eq.s32.totalorder %s55, 1
      %p99 = por %p97, %p98
      %p101 = scmp.ne.s32.totalorder %s84, %s100
      %p102 = scmp.eq.s32.totalorder %s55, 0
      %p103 = por %p101, %p102
      %s104 = ssub.s32 %s49, %s56
      %p105 = scmp.eq.s32.totalorder %s104, 0
      %s107 = sadd.s32 %s106, 1
      %s108 = scalar_select %p105, %s106, %s107
      %p111 = pneg %p105
      %p112 = scmp.eq.s32.totalorder %s49, 1
      %p113 = por %p111, %p112
      %p114 = scmp.ne.s32.totalorder %s106, %s109
      %p115 = scmp.eq.s32.totalorder %s49, 0
      %p116 = por %p114, %p115
      %p117 = scmp.ne.s32.totalorder %s106, %s109
      %p118 = scmp.eq.s32.totalorder %s54, 1
      %p119 = por %p117, %p118
      %p120 = scmp.ne.s32.totalorder %s109, %s110
      %p121 = scmp.eq.s32.totalorder %s54, 0
      %p122 = por %p120, %p121
      %p123 = scmp.ne.s32.totalorder %s109, %s110
      %p124 = scmp.eq.s32.totalorder %s55, 1
      %p125 = por %p123, %p124
      %p127 = scmp.ne.s32.totalorder %s110, %s126
      %p128 = scmp.eq.s32.totalorder %s55, 0
      %p129 = por %p127, %p128
      %s130 = ssub.s32 %s49, %s56
      %p131 = scmp.eq.s32.totalorder %s130, 0
      %s133 = sadd.s32 %s132, 1
      %s134 = scalar_select %p131, %s132, %s133
      %p137 = pneg %p131
      %p138 = scmp.eq.s32.totalorder %s49, 1
      %p139 = por %p137, %p138
      %p140 = scmp.ne.s32.totalorder %s132, %s135
      %p141 = scmp.eq.s32.totalorder %s49, 0
      %p142 = por %p140, %p141
      %p143 = scmp.ne.s32.totalorder %s132, %s135
      %p144 = scmp.eq.s32.totalorder %s54, 1
      %p145 = por %p143, %p144
      %p146 = scmp.ne.s32.totalorder %s135, %s136
      %p147 = scmp.eq.s32.totalorder %s54, 0
      %p148 = por %p146, %p147
      %p149 = scmp.ne.s32.totalorder %s135, %s136
      %p150 = scmp.eq.s32.totalorder %s55, 1
      %p151 = por %p149, %p150
      %p153 = scmp.ne.s32.totalorder %s136, %s152
      %p154 = scmp.eq.s32.totalorder %s55, 0
      %p155 = por %p153, %p154
      %s156 = ssub.s32 %s49, %s56
      %p157 = scmp.eq.s32.totalorder %s156, 0
      %s159 = sadd.s32 %s158, 1
      %s160 = scalar_select %p157, %s158, %s159
      %p163 = pneg %p157
      %p164 = scmp.eq.s32.totalorder %s49, 1
      %p165 = por %p163, %p164
      %p166 = scmp.ne.s32.totalorder %s158, %s161
      %p167 = scmp.eq.s32.totalorder %s49, 0
      %p168 = por %p166, %p167
      %p169 = scmp.ne.s32.totalorder %s158, %s161
      %p170 = scmp.eq.s32.totalorder %s54, 1
      %p171 = por %p169, %p170
      %p172 = scmp.ne.s32.totalorder %s161, %s162
      %p173 = scmp.eq.s32.totalorder %s54, 0
      %p174 = por %p172, %p173
      %p175 = scmp.ne.s32.totalorder %s161, %s162
      %p176 = scmp.eq.s32.totalorder %s55, 1
      %p177 = por %p175, %p176
      %p179 = scmp.ne.s32.totalorder %s162, %s178
      %p180 = scmp.eq.s32.totalorder %s55, 0
      %p181 = por %p179, %p180
      %s183 = sadd.s32 %s182, 1
      %p186 = scmp.eq.s32.totalorder %s49, 1
      %p187 = scmp.ne.s32.totalorder %s182, %s184
      %p188 = scmp.eq.s32.totalorder %s49, 0
      %p189 = por %p187, %p188
      %p190 = scmp.ne.s32.totalorder %s182, %s184
      %p191 = scmp.eq.s32.totalorder %s54, 1
      %p192 = por %p190, %p191
      %p193 = scmp.ne.s32.totalorder %s184, %s185
      %p194 = scmp.eq.s32.totalorder %s54, 0
      %p195 = por %p193, %p194
      %p196 = scmp.ne.s32.totalorder %s184, %s185
      %p197 = scmp.eq.s32.totalorder %s55, 1
      %p198 = por %p196, %p197
      %p200 = scmp.ne.s32.totalorder %s185, %s199
      %p201 = scmp.eq.s32.totalorder %s55, 0
      %p202 = por %p200, %p201
      %s204 = sadd.s32 %s203, 1
      %p207 = scmp.eq.s32.totalorder %s49, 1
      %p208 = scmp.ne.s32.totalorder %s203, %s205
      %p209 = scmp.eq.s32.totalorder %s49, 0
      %p210 = por %p208, %p209
      %p211 = scmp.ne.s32.totalorder %s203, %s205
      %p212 = scmp.eq.s32.totalorder %s54, 1
      %p213 = por %p211, %p212
      %p214 = scmp.ne.s32.totalorder %s205, %s206
      %p215 = scmp.eq.s32.totalorder %s54, 0
      %p216 = por %p214, %p215
      %p217 = scmp.ne.s32.totalorder %s205, %s206
      %p218 = scmp.eq.s32.totalorder %s55, 1
      %p219 = por %p217, %p218
      %p221 = scmp.ne.s32.totalorder %s206, %s220
      %p222 = scmp.eq.s32.totalorder %s55, 0
      %p223 = por %p221, %p222
      %s225 = sadd.s32 %s224, 1
      %p228 = scmp.eq.s32.totalorder %s49, 1
      %p229 = scmp.ne.s32.totalorder %s224, %s226
      %p230 = scmp.eq.s32.totalorder %s49, 0
      %p231 = por %p229, %p230
      %p232 = scmp.ne.s32.totalorder %s224, %s226
      %p233 = scmp.eq.s32.totalorder %s54, 1
      %p234 = por %p232, %p233
      %p235 = scmp.ne.s32.totalorder %s226, %s227
      %p236 = scmp.eq.s32.totalorder %s54, 0
      %p237 = por %p235, %p236
      %p238 = scmp.ne.s32.totalorder %s226, %s227
      %p239 = scmp.eq.s32.totalorder %s55, 1
      %p240 = por %p238, %p239
      %p242 = scmp.ne.s32.totalorder %s227, %s241
      %p243 = scmp.eq.s32.totalorder %s55, 0
      %p244 = por %p242, %p243
      %s246 = sadd.s32 %s245, 1
      %p249 = scmp.eq.s32.totalorder %s49, 1
      %p250 = scmp.ne.s32.totalorder %s245, %s247
      %p251 = scmp.eq.s32.totalorder %s49, 0
      %p252 = por %p250, %p251
      %p253 = scmp.ne.s32.totalorder %s245, %s247
      %p254 = scmp.eq.s32.totalorder %s54, 1
      %p255 = por %p253, %p254
      %p256 = scmp.ne.s32.totalorder %s247, %s248
      %p257 = scmp.eq.s32.totalorder %s54, 0
      %p258 = por %p256, %p257
      %p259 = scmp.ne.s32.totalorder %s247, %s248
      %p260 = scmp.eq.s32.totalorder %s55, 1
      %p261 = por %p259, %p260
      %p263 = scmp.ne.s32.totalorder %s248, %s262
      %p264 = scmp.eq.s32.totalorder %s55, 0
      %p265 = por %p263, %p264
      %s267 = sadd.s32 %s266, 1
      %p270 = scmp.eq.s32.totalorder %s49, 1
      %p271 = scmp.ne.s32.totalorder %s266, %s268
      %p272 = scmp.eq.s32.totalorder %s49, 0
      %p273 = por %p271, %p272
      %p274 = scmp.ne.s32.totalorder %s266, %s268
      %p275 = scmp.eq.s32.totalorder %s54, 1
      %p276 = por %p274, %p275
      %p277 = scmp.ne.s32.totalorder %s268, %s269
      %p278 = scmp.eq.s32.totalorder %s54, 0
      %p279 = por %p277, %p278
      %p280 = scmp.ne.s32.totalorder %s268, %s269
      %p281 = scmp.eq.s32.totalorder %s55, 1
      %p282 = por %p280, %p281
      %p284 = scmp.ne.s32.totalorder %s269, %s283
      %p285 = scmp.eq.s32.totalorder %s55, 0
      %p286 = por %p284, %p285
      %s288 = sadd.s32 %s287, 1
      %p291 = scmp.eq.s32.totalorder %s49, 1
      %p292 = scmp.ne.s32.totalorder %s287, %s289
      %p293 = scmp.eq.s32.totalorder %s49, 0
      %p294 = por %p292, %p293
      %p295 = scmp.ne.s32.totalorder %s287, %s289
      %p296 = scmp.eq.s32.totalorder %s54, 1
      %p297 = por %p295, %p296
      %p298 = scmp.ne.s32.totalorder %s289, %s290
      %p299 = scmp.eq.s32.totalorder %s54, 0
      %p300 = por %p298, %p299
      %p301 = scmp.ne.s32.totalorder %s289, %s290
      %p302 = scmp.eq.s32.totalorder %s55, 1
      %p303 = por %p301, %p302
      %p305 = scmp.ne.s32.totalorder %s290, %s304
      %p306 = scmp.eq.s32.totalorder %s55, 0
      %p307 = por %p305, %p306
      %s309 = sadd.s32 %s308, 1
      %p312 = scmp.eq.s32.totalorder %s49, 1
      %p313 = scmp.ne.s32.totalorder %s308, %s310
      %p314 = scmp.eq.s32.totalorder %s49, 0
      %p315 = por %p313, %p314
      %p316 = scmp.ne.s32.totalorder %s308, %s310
      %p317 = scmp.eq.s32.totalorder %s54, 1
      %p318 = por %p316, %p317
      %p319 = scmp.ne.s32.totalorder %s310, %s311
      %p320 = scmp.eq.s32.totalorder %s54, 0
      %p321 = por %p319, %p320
      %p322 = scmp.ne.s32.totalorder %s310, %s311
      %p323 = scmp.eq.s32.totalorder %s55, 1
      %p324 = por %p322, %p323
      %p326 = scmp.ne.s32.totalorder %s311, %s325
      %p327 = scmp.eq.s32.totalorder %s55, 0
      %p328 = por %p326, %p327
      %s330 = sadd.s32 %s329, 1
      %p333 = scmp.eq.s32.totalorder %s49, 1
      %p334 = scmp.ne.s32.totalorder %s329, %s331
      %p335 = scmp.eq.s32.totalorder %s49, 0
      %p336 = por %p334, %p335
      %p337 = scmp.ne.s32.totalorder %s329, %s331
      %p338 = scmp.eq.s32.totalorder %s54, 1
      %p339 = por %p337, %p338
      %p340 = scmp.ne.s32.totalorder %s331, %s332
      %p341 = scmp.eq.s32.totalorder %s54, 0
      %p342 = por %p340, %p341
      %p343 = scmp.ne.s32.totalorder %s331, %s332
      %p344 = scmp.eq.s32.totalorder %s55, 1
      %p345 = por %p343, %p344
      %p347 = scmp.ne.s32.totalorder %s332, %s346
      %p348 = scmp.eq.s32.totalorder %s55, 0
      %p349 = por %p347, %p348
      %s351 = sadd.s32 %s350, 1
      %p354 = scmp.eq.s32.totalorder %s49, 1
      %p355 = scmp.ne.s32.totalorder %s350, %s352
      %p356 = scmp.eq.s32.totalorder %s49, 0
      %p357 = por %p355, %p356
      %p358 = scmp.ne.s32.totalorder %s350, %s352
      %p359 = scmp.eq.s32.totalorder %s54, 1
      %p360 = por %p358, %p359
      %p361 = scmp.ne.s32.totalorder %s352, %s353
      %p362 = scmp.eq.s32.totalorder %s54, 0
      %p363 = por %p361, %p362
      %p364 = scmp.ne.s32.totalorder %s352, %s353
      %p365 = scmp.eq.s32.totalorder %s55, 1
      %p366 = por %p364, %p365
      %p368 = scmp.ne.s32.totalorder %s353, %s367
      %p369 = scmp.eq.s32.totalorder %s55, 0
      %p370 = por %p368, %p369
      %s372 = sadd.s32 %s371, 1
      %p375 = scmp.eq.s32.totalorder %s49, 1
      %p376 = scmp.ne.s32.totalorder %s371, %s373
      %p377 = scmp.eq.s32.totalorder %s49, 0
      %p378 = por %p376, %p377
      %p379 = scmp.ne.s32.totalorder %s371, %s373
      %p380 = scmp.eq.s32.totalorder %s54, 1
      %p381 = por %p379, %p380
      %p382 = scmp.ne.s32.totalorder %s373, %s374
      %p383 = scmp.eq.s32.totalorder %s54, 0
      %p384 = por %p382, %p383
      %p385 = scmp.ne.s32.totalorder %s373, %s374
      %p386 = scmp.eq.s32.totalorder %s55, 1
      %p387 = por %p385, %p386
      %p389 = scmp.ne.s32.totalorder %s374, %s388
      %p390 = scmp.eq.s32.totalorder %s55, 0
      %p391 = por %p389, %p390
      %s393 = sadd.s32 %s392, 1
      %p396 = scmp.eq.s32.totalorder %s49, 1
      %p397 = scmp.ne.s32.totalorder %s392, %s394
      %p398 = scmp.eq.s32.totalorder %s49, 0
      %p399 = por %p397, %p398
      %p400 = scmp.ne.s32.totalorder %s392, %s394
      %p401 = scmp.eq.s32.totalorder %s54, 1
      %p402 = por %p400, %p401
      %p403 = scmp.ne.s32.totalorder %s394, %s395
      %p404 = scmp.eq.s32.totalorder %s54, 0
      %p405 = por %p403, %p404
      %p406 = scmp.ne.s32.totalorder %s394, %s395
      %p407 = scmp.eq.s32.totalorder %s55, 1
      %p408 = por %p406, %p407
      %p410 = scmp.ne.s32.totalorder %s395, %s409
      %p411 = scmp.eq.s32.totalorder %s55, 0
      %p412 = por %p410, %p411
      %s414 = sadd.s32 %s413, 1
      %p417 = scmp.eq.s32.totalorder %s49, 1
      %p418 = scmp.ne.s32.totalorder %s413, %s415
      %p419 = scmp.eq.s32.totalorder %s49, 0
      %p420 = por %p418, %p419
      %p421 = scmp.ne.s32.totalorder %s413, %s415
      %p422 = scmp.eq.s32.totalorder %s54, 1
      %p423 = por %p421, %p422
      %p424 = scmp.ne.s32.totalorder %s415, %s416
      %p425 = scmp.eq.s32.totalorder %s54, 0
      %p426 = por %p424, %p425
      %p427 = scmp.ne.s32.totalorder %s415, %s416
      %p428 = scmp.eq.s32.totalorder %s55, 1
      %p429 = por %p427, %p428
      %p431 = scmp.ne.s32.totalorder %s416, %s430
      %p432 = scmp.eq.s32.totalorder %s55, 0
      %p433 = por %p431, %p432
      %s435 = sadd.s32 %s434, 1
      %p438 = scmp.eq.s32.totalorder %s49, 1
      %p439 = scmp.ne.s32.totalorder %s434, %s436
      %p440 = scmp.eq.s32.totalorder %s49, 0
      %p441 = por %p439, %p440
      %p442 = scmp.ne.s32.totalorder %s434, %s436
      %p443 = scmp.eq.s32.totalorder %s54, 1
      %p444 = por %p442, %p443
      %p445 = scmp.ne.s32.totalorder %s436, %s437
      %p446 = scmp.eq.s32.totalorder %s54, 0
      %p447 = por %p445, %p446
      %p448 = scmp.ne.s32.totalorder %s436, %s437
      %p449 = scmp.eq.s32.totalorder %s55, 1
      %p450 = por %p448, %p449
      %p452 = scmp.ne.s32.totalorder %s437, %s451
      %p453 = scmp.eq.s32.totalorder %s55, 0
      %p454 = por %p452, %p453
      %s456 = sadd.s32 %s455, 1
      %p459 = scmp.eq.s32.totalorder %s49, 1
      %p460 = scmp.ne.s32.totalorder %s455, %s457
      %p461 = scmp.eq.s32.totalorder %s49, 0
      %p462 = por %p460, %p461
      %p463 = scmp.ne.s32.totalorder %s455, %s457
      %p464 = scmp.eq.s32.totalorder %s54, 1
      %p465 = por %p463, %p464
      %p466 = scmp.ne.s32.totalorder %s457, %s458
      %p467 = scmp.eq.s32.totalorder %s54, 0
      %p468 = por %p466, %p467
      %p469 = scmp.ne.s32.totalorder %s457, %s458
      %p470 = scmp.eq.s32.totalorder %s55, 1
      %p471 = por %p469, %p470
      %p473 = scmp.ne.s32.totalorder %s458, %s472
      %p474 = scmp.eq.s32.totalorder %s55, 0
      %p475 = por %p473, %p474
      %s477 = sadd.s32 %s476, 1
      %p480 = scmp.eq.s32.totalorder %s49, 1
      %p481 = scmp.ne.s32.totalorder %s476, %s478
      %p482 = scmp.eq.s32.totalorder %s49, 0
      %p483 = por %p481, %p482
      %p484 = scmp.ne.s32.totalorder %s476, %s478
      %p485 = scmp.eq.s32.totalorder %s54, 1
      %p486 = por %p484, %p485
      %p487 = scmp.ne.s32.totalorder %s478, %s479
      %p488 = scmp.eq.s32.totalorder %s54, 0
      %p489 = por %p487, %p488
      %p490 = scmp.ne.s32.totalorder %s478, %s479
      %p491 = scmp.eq.s32.totalorder %s55, 1
      %p492 = por %p490, %p491
      %p494 = scmp.ne.s32.totalorder %s479, %s493
      %p495 = scmp.eq.s32.totalorder %s55, 0
      %p496 = por %p494, %p495
      %s498 = sadd.s32 %s497, 1
      %p501 = scmp.eq.s32.totalorder %s49, 1
      %p502 = scmp.ne.s32.totalorder %s497, %s499
      %p503 = scmp.eq.s32.totalorder %s49, 0
      %p504 = por %p502, %p503
      %p505 = scmp.ne.s32.totalorder %s497, %s499
      %p506 = scmp.eq.s32.totalorder %s54, 1
      %p507 = por %p505, %p506
      %p508 = scmp.ne.s32.totalorder %s499, %s500
      %p509 = scmp.eq.s32.totalorder %s54, 0
      %p510 = por %p508, %p509
      %p511 = scmp.ne.s32.totalorder %s499, %s500
      %p512 = scmp.eq.s32.totalorder %s55, 1
      %p513 = por %p511, %p512
      %p515 = scmp.ne.s32.totalorder %s500, %s514
      %p516 = scmp.eq.s32.totalorder %s55, 0
      %p517 = por %p515, %p516
      %s518 = ssub.s32 %s49, %s56
      %p519 = scmp.eq.s32.totalorder %s518, 0
      %s521 = sadd.s32 %s520, 1
      %s522 = scalar_select %p519, %s520, %s521
      %p525 = pneg %p519
      %p526 = scmp.eq.s32.totalorder %s49, 1
      %p527 = por %p525, %p526
      %p528 = scmp.ne.s32.totalorder %s520, %s523
      %p529 = scmp.eq.s32.totalorder %s49, 0
      %p530 = por %p528, %p529
      %p531 = scmp.ne.s32.totalorder %s520, %s523
      %p532 = scmp.eq.s32.totalorder %s54, 1
      %p533 = por %p531, %p532
      %p534 = scmp.ne.s32.totalorder %s523, %s524
      %p535 = scmp.eq.s32.totalorder %s54, 0
      %p536 = por %p534, %p535
      %p537 = scmp.ne.s32.totalorder %s523, %s524
      %p538 = scmp.eq.s32.totalorder %s55, 1
      %p539 = por %p537, %p538
      %p541 = scmp.ne.s32.totalorder %s524, %s540
      %p542 = scmp.eq.s32.totalorder %s55, 0
      %p543 = por %p541, %p542
      %s545 = sadd.s32 %s544, 1
      %p548 = scmp.eq.s32.totalorder %s49, 1
      %p549 = scmp.ne.s32.totalorder %s544, %s546
      %p550 = scmp.eq.s32.totalorder %s49, 0
      %p551 = por %p549, %p550
      %p552 = scmp.ne.s32.totalorder %s544, %s546
      %p553 = scmp.eq.s32.totalorder %s54, 1
      %p554 = por %p552, %p553
      %p555 = scmp.ne.s32.totalorder %s546, %s547
      %p556 = scmp.eq.s32.totalorder %s54, 0
      %p557 = por %p555, %p556
      %p558 = scmp.ne.s32.totalorder %s546, %s547
      %p559 = scmp.eq.s32.totalorder %s55, 1
      %p560 = por %p558, %p559
      %p562 = scmp.ne.s32.totalorder %s547, %s561
      %p563 = scmp.eq.s32.totalorder %s55, 0
      %p564 = por %p562, %p563
      %s566 = sadd.s32 %s565, 1
      %p569 = scmp.eq.s32.totalorder %s49, 1
      %p570 = scmp.ne.s32.totalorder %s565, %s567
      %p571 = scmp.eq.s32.totalorder %s49, 0
      %p572 = por %p570, %p571
      %p573 = scmp.ne.s32.totalorder %s565, %s567
      %p574 = scmp.eq.s32.totalorder %s54, 1
      %p575 = por %p573, %p574
      %p576 = scmp.ne.s32.totalorder %s567, %s568
      %p577 = scmp.eq.s32.totalorder %s54, 0
      %p578 = por %p576, %p577
      %p579 = scmp.ne.s32.totalorder %s567, %s568
      %p580 = scmp.eq.s32.totalorder %s55, 1
      %p581 = por %p579, %p580
      %p583 = scmp.ne.s32.totalorder %s568, %s582
      %p584 = scmp.eq.s32.totalorder %s55, 0
      %p585 = por %p583, %p584
      %p586 = scmp.le.s32.totalorder 1, %s49
      %p587 = scmp.lt.s32.totalorder %s49, 3
      %p588 = pnand %p586, %p587
      %p589 = pneg %p588
      // Predicated region
      $region9: #{tpu_custom_call.1} parent=5 // pred_check
        _
      $region10: #{tpu_custom_call.1} parent=5 // pred_check_branch
        %591 = sbr.rel (%p588) target = $region12
      $region11: #{tpu_custom_call.1} parent=5 // pred_region
        %s592 = ssub.s32 %s49, 1
        // Predicated region
        $region13: #{tpu_custom_call.1} parent=11 // pred_check
          %p593 = pneg %p70
        $region14: #{tpu_custom_call.1} parent=11 // pred_check_branch
          %595 = sbr.rel (%p593) target = $region16
        $region15: #{tpu_custom_call.1} parent=11 // pred_region
          %s597 = ssub.s32 512, 512
          %598 = vsyncadd [#allocation4], %s597
          %s599 = sshll.u32 [#allocation3], 4
          %s600 = int_to_ptr.vmem [resolvable:$true] %s599
          %605 = dma.hbm_to_vmem [thread:$0]  %s0, 512, %s600, [#allocation4], 128, 128, 8
        $region16: #{tpu_custom_call.1} parent=11 // pred_fallthru
          _
        // Predicated region
        $region17: #{tpu_custom_call.1} parent=11 // pred_check
          %p606 = pneg %p195
        $region18: #{tpu_custom_call.1} parent=11 // pred_check_branch
          %608 = sbr.rel (%p606) target = $region20
        $region19: #{tpu_custom_call.1} parent=11 // pred_region
          %s610 = ssub.s32 128, 128
          %611 = vsyncadd [#allocation13], %s610
          %s613 = sshll.u32 [#allocation12], 4
          %s614 = int_to_ptr.vmem [resolvable:$true] %s613
          %616 = dma.hbm_to_vmem [thread:$0]  %s5, 128, %s614, [#allocation13]
        $region20: #{tpu_custom_call.1} parent=11 // pred_fallthru
          _
        // Predicated region
        $region21: #{tpu_custom_call.1} parent=11 // pred_check
          %p617 = pneg %p216
        $region22: #{tpu_custom_call.1} parent=11 // pred_check_branch
          %619 = sbr.rel (%p617) target = $region24
        $region23: #{tpu_custom_call.1} parent=11 // pred_region
          %s621 = ssub.s32 128, 128
          %622 = vsyncadd [#allocation13], %s621
          %s624 = sshll.u32 [#allocation14], 4
          %s625 = int_to_ptr.vmem [resolvable:$true] %s624
          %627 = dma.hbm_to_vmem [thread:$0]  %s6, 128, %s625, [#allocation13]
        $region24: #{tpu_custom_call.1} parent=11 // pred_fallthru
          _
        // Predicated region
        $region25: #{tpu_custom_call.1} parent=11 // pred_check
          %p628 = pneg %p237
        $region26: #{tpu_custom_call.1} parent=11 // pred_check_branch
          %630 = sbr.rel (%p628) target = $region28
        $region27: #{tpu_custom_call.1} parent=11 // pred_region
          %s632 = ssub.s32 128, 128
          %633 = vsyncadd [#allocation16], %s632
          %s635 = sshll.u32 [#allocation15], 4
          %s636 = int_to_ptr.vmem [resolvable:$true] %s635
          %638 = dma.hbm_to_vmem [thread:$0]  %s7, 128, %s636, [#allocation16]
        $region28: #{tpu_custom_call.1} parent=11 // pred_fallthru
          _
        // Predicated region
        $region29: #{tpu_custom_call.1} parent=11 // pred_check
          %p639 = pneg %p258
        $region30: #{tpu_custom_call.1} parent=11 // pred_check_branch
          %641 = sbr.rel (%p639) target = $region32
        $region31: #{tpu_custom_call.1} parent=11 // pred_region
          %s643 = ssub.s32 16, 16
          %644 = vsyncadd [#allocation16], %s643
          %s646 = sshll.u32 [#allocation17], 4
          %s647 = int_to_ptr.vmem [resolvable:$true] %s646
          %649 = dma.hbm_to_vmem [thread:$0]  %s8, 16, %s647, [#allocation16]
        $region32: #{tpu_custom_call.1} parent=11 // pred_fallthru
          _
        // Predicated region
        $region33: #{tpu_custom_call.1} parent=11 // pred_check
          %p650 = pneg %p279
        $region34: #{tpu_custom_call.1} parent=11 // pred_check_branch
          %652 = sbr.rel (%p650) target = $region36
        $region35: #{tpu_custom_call.1} parent=11 // pred_region
          %s654 = ssub.s32 2048, 2048
          %655 = vsyncadd [#allocation19], %s654
          %s656 = sshll.u32 [#allocation18], 4
          %s657 = int_to_ptr.vmem [resolvable:$true] %s656
          %662 = dma.hbm_to_vmem [thread:$0]  %s9, 2048, %s657, [#allocation19], 128, 128, 8
        $region36: #{tpu_custom_call.1} parent=11 // pred_fallthru
          _
        // Predicated region
        $region37: #{tpu_custom_call.1} parent=11 // pred_check
          %p663 = pneg %p300
        $region38: #{tpu_custom_call.1} parent=11 // pred_check_branch
          %665 = sbr.rel (%p663) target = $region40
        $region39: #{tpu_custom_call.1} parent=11 // pred_region
          %s667 = ssub.s32 16, 16
          %668 = vsyncadd [#allocation19], %s667
          %s670 = sshll.u32 [#allocation20], 4
          %s671 = int_to_ptr.vmem [resolvable:$true] %s670
          %673 = dma.hbm_to_vmem [thread:$0]  %s10, 16, %s671, [#allocation19]
        $region40: #{tpu_custom_call.1} parent=11 // pred_fallthru
          _
        // Predicated region
        $region41: #{tpu_custom_call.1} parent=11 // pred_check
          %p674 = pneg %p321
        $region42: #{tpu_custom_call.1} parent=11 // pred_check_branch
          %676 = sbr.rel (%p674) target = $region44
        $region43: #{tpu_custom_call.1} parent=11 // pred_region
          %s678 = ssub.s32 2048, 2048
          %679 = vsyncadd [#allocation22], %s678
          %s680 = sshll.u32 [#allocation21], 4
          %s681 = int_to_ptr.vmem [resolvable:$true] %s680
          %686 = dma.hbm_to_vmem [thread:$0]  %s11, 2048, %s681, [#allocation22], 128, 128, 8
        $region44: #{tpu_custom_call.1} parent=11 // pred_fallthru
          _
        // Predicated region
        $region45: #{tpu_custom_call.1} parent=11 // pred_check
          %p687 = pneg %p342
        $region46: #{tpu_custom_call.1} parent=11 // pred_check_branch
          %689 = sbr.rel (%p687) target = $region48
        $region47: #{tpu_custom_call.1} parent=11 // pred_region
          %s691 = ssub.s32 128, 128
          %692 = vsyncadd [#allocation22], %s691
          %s694 = sshll.u32 [#allocation23], 4
          %s695 = int_to_ptr.vmem [resolvable:$true] %s694
          %697 = dma.hbm_to_vmem [thread:$0]  %s12, 128, %s695, [#allocation22]
        $region48: #{tpu_custom_call.1} parent=11 // pred_fallthru
          _
        // Predicated region
        $region49: #{tpu_custom_call.1} parent=11 // pred_check
          %p698 = pneg %p363
        $region50: #{tpu_custom_call.1} parent=11 // pred_check_branch
          %700 = sbr.rel (%p698) target = $region52
        $region51: #{tpu_custom_call.1} parent=11 // pred_region
          %s702 = ssub.s32 16, 16
          %703 = vsyncadd [#allocation25], %s702
          %s705 = sshll.u32 [#allocation24], 4
          %s706 = int_to_ptr.vmem [resolvable:$true] %s705
          %708 = dma.hbm_to_vmem [thread:$0]  %s13, 16, %s706, [#allocation25]
        $region52: #{tpu_custom_call.1} parent=11 // pred_fallthru
          _
        // Predicated region
        $region53: #{tpu_custom_call.1} parent=11 // pred_check
          %p709 = pneg %p384
        $region54: #{tpu_custom_call.1} parent=11 // pred_check_branch
          %711 = sbr.rel (%p709) target = $region56
        $region55: #{tpu_custom_call.1} parent=11 // pred_region
          %s713 = ssub.s32 2048, 2048
          %714 = vsyncadd [#allocation25], %s713
          %s715 = sshll.u32 [#allocation26], 4
          %s716 = int_to_ptr.vmem [resolvable:$true] %s715
          %721 = dma.hbm_to_vmem [thread:$0]  %s14, 2048, %s716, [#allocation25], 128, 128, 8
        $region56: #{tpu_custom_call.1} parent=11 // pred_fallthru
          _
        // Predicated region
        $region57: #{tpu_custom_call.1} parent=11 // pred_check
          %p722 = pneg %p405
        $region58: #{tpu_custom_call.1} parent=11 // pred_check_branch
          %724 = sbr.rel (%p722) target = $region60
        $region59: #{tpu_custom_call.1} parent=11 // pred_region
          %s726 = ssub.s32 16, 16
          %727 = vsyncadd [#allocation28], %s726
          %s729 = sshll.u32 [#allocation27], 4
          %s730 = int_to_ptr.vmem [resolvable:$true] %s729
          %732 = dma.hbm_to_vmem [thread:$0]  %s15, 16, %s730, [#allocation28]
        $region60: #{tpu_custom_call.1} parent=11 // pred_fallthru
          _
        // Predicated region
        $region61: #{tpu_custom_call.1} parent=11 // pred_check
          %p733 = pneg %p426
        $region62: #{tpu_custom_call.1} parent=11 // pred_check_branch
          %735 = sbr.rel (%p733) target = $region64
        $region63: #{tpu_custom_call.1} parent=11 // pred_region
          %s737 = ssub.s32 2048, 2048
          %738 = vsyncadd [#allocation28], %s737
          %s739 = sshll.u32 [#allocation29], 4
          %s740 = int_to_ptr.vmem [resolvable:$true] %s739
          %745 = dma.hbm_to_vmem [thread:$0]  %s16, 2048, %s740, [#allocation28], 128, 128, 8
        $region64: #{tpu_custom_call.1} parent=11 // pred_fallthru
          _
        // Predicated region
        $region65: #{tpu_custom_call.1} parent=11 // pred_check
          %p746 = pneg %p447
        $region66: #{tpu_custom_call.1} parent=11 // pred_check_branch
          %748 = sbr.rel (%p746) target = $region68
        $region67: #{tpu_custom_call.1} parent=11 // pred_region
          %s750 = ssub.s32 2048, 2048
          %751 = vsyncadd [#allocation31], %s750
          %s752 = sshll.u32 [#allocation30], 4
          %s753 = int_to_ptr.vmem [resolvable:$true] %s752
          %758 = dma.hbm_to_vmem [thread:$0]  %s17, 2048, %s753, [#allocation31], 128, 128, 8
        $region68: #{tpu_custom_call.1} parent=11 // pred_fallthru
          _
        // Predicated region
        $region69: #{tpu_custom_call.1} parent=11 // pred_check
          %p759 = pneg %p468
        $region70: #{tpu_custom_call.1} parent=11 // pred_check_branch
          %761 = sbr.rel (%p759) target = $region72
        $region71: #{tpu_custom_call.1} parent=11 // pred_region
          %s763 = ssub.s32 16, 16
          %764 = vsyncadd [#allocation31], %s763
          %s766 = sshll.u32 [#allocation32], 4
          %s767 = int_to_ptr.vmem [resolvable:$true] %s766
          %769 = dma.hbm_to_vmem [thread:$0]  %s18, 16, %s767, [#allocation31]
        $region72: #{tpu_custom_call.1} parent=11 // pred_fallthru
          _
        // Predicated region
        $region73: #{tpu_custom_call.1} parent=11 // pred_check
          %p770 = pneg %p489
        $region74: #{tpu_custom_call.1} parent=11 // pred_check_branch
          %772 = sbr.rel (%p770) target = $region76
        $region75: #{tpu_custom_call.1} parent=11 // pred_region
          %s774 = ssub.s32 2048, 2048
          %775 = vsyncadd [#allocation34], %s774
          %s776 = sshll.u32 [#allocation33], 4
          %s777 = int_to_ptr.vmem [resolvable:$true] %s776
          %782 = dma.hbm_to_vmem [thread:$0]  %s19, 2048, %s777, [#allocation34], 128, 128, 8
        $region76: #{tpu_custom_call.1} parent=11 // pred_fallthru
          _
        // Predicated region
        $region77: #{tpu_custom_call.1} parent=11 // pred_check
          %p783 = pneg %p510
        $region78: #{tpu_custom_call.1} parent=11 // pred_check_branch
          %785 = sbr.rel (%p783) target = $region80
        $region79: #{tpu_custom_call.1} parent=11 // pred_region
          %s787 = ssub.s32 16, 16
          %788 = vsyncadd [#allocation34], %s787
          %s790 = sshll.u32 [#allocation35], 4
          %s791 = int_to_ptr.vmem [resolvable:$true] %s790
          %793 = dma.hbm_to_vmem [thread:$0]  %s20, 16, %s791, [#allocation34]
        $region80: #{tpu_custom_call.1} parent=11 // pred_fallthru
          _
      $region12: #{tpu_custom_call.1} parent=5 // pred_fallthru
        _
      %p794 = scmp.lt.s32.totalorder %s49, 2
      // Predicated region
      $region81: #{tpu_custom_call.1} parent=5 // pred_check
        %p795 = pneg %p794
      $region82: #{tpu_custom_call.1} parent=5 // pred_check_branch
        %797 = sbr.rel (%p795) target = $region84
      $region83: #{tpu_custom_call.1} parent=5 // pred_region
        // Predicated region
        $region85: #{tpu_custom_call.1} parent=83 // pred_check
          %p798 = pneg %p90
        $region86: #{tpu_custom_call.1} parent=83 // pred_check_branch
          %800 = sbr.rel (%p798) target = $region88
        $region87: #{tpu_custom_call.1} parent=83 // pred_region
          %s801 = sand.u32 %s49, 1
          %s802 = scalar_lea.sflag [#allocation7], %s801
          %s803 = sand.u32 %s80, 1
          %s804 = smul.addr %s803, 128
          %s805 = scalar_lea.vmem [#allocation6], %s804
          %s806 = smul.u32 16, %s49
          %s808 = ssub.s32 2048, 2048
          %809 = vsyncadd %s802, %s808
          %s810 = smul.addr %s806, 128
          %s811 = scalar_lea.hbm %s1, %s810
          %s812 = sshll.u32 %s805, 4
          %s813 = int_to_ptr.vmem [resolvable:$true] %s812
          %818 = dma.hbm_to_vmem [thread:$0]  %s811, 2048, %s813, %s802, 128, 128, 8
        $region88: #{tpu_custom_call.1} parent=83 // pred_fallthru
          _
        // Predicated region
        $region89: #{tpu_custom_call.1} parent=83 // pred_check
          %p819 = pneg %p116
        $region90: #{tpu_custom_call.1} parent=83 // pred_check_branch
          %821 = sbr.rel (%p819) target = $region92
        $region91: #{tpu_custom_call.1} parent=83 // pred_region
          %s822 = sand.u32 %s49, 1
          %s823 = scalar_lea.sflag [#allocation7], %s822
          %s824 = sand.u32 %s106, 1
          %s825 = smul.addr %s824, 64
          %s826 = scalar_lea.vmem [#allocation8], %s825
          %s827 = smul.u32 16, %s49
          %s829 = ssub.s32 1024, 1024
          %830 = vsyncadd %s823, %s829
          %s831 = smul.addr %s827, 64
          %s832 = scalar_lea.hbm %s2, %s831
          %s833 = sshll.u32 %s826, 4
          %s834 = int_to_ptr.vmem [resolvable:$true] %s833
          %839 = dma.hbm_to_vmem [thread:$0]  %s832, 1024, %s834, %s823, 64, 64, 4
        $region92: #{tpu_custom_call.1} parent=83 // pred_fallthru
          _
        // Predicated region
        $region93: #{tpu_custom_call.1} parent=83 // pred_check
          %p840 = pneg %p142
        $region94: #{tpu_custom_call.1} parent=83 // pred_check_branch
          %842 = sbr.rel (%p840) target = $region96
        $region95: #{tpu_custom_call.1} parent=83 // pred_region
          %s843 = sand.u32 %s49, 1
          %s844 = scalar_lea.sflag [#allocation10], %s843
          %s845 = sand.u32 %s132, 1
          %s846 = smul.addr %s845, 64
          %s847 = scalar_lea.vmem [#allocation9], %s846
          %s848 = smul.u32 16, %s49
          %s850 = ssub.s32 1024, 1024
          %851 = vsyncadd %s844, %s850
          %s852 = smul.addr %s848, 64
          %s853 = scalar_lea.hbm %s3, %s852
          %s854 = sshll.u32 %s847, 4
          %s855 = int_to_ptr.vmem [resolvable:$true] %s854
          %860 = dma.hbm_to_vmem [thread:$0]  %s853, 1024, %s855, %s844, 64, 64, 4
        $region96: #{tpu_custom_call.1} parent=83 // pred_fallthru
          _
        // Predicated region
        $region97: #{tpu_custom_call.1} parent=83 // pred_check
          %p861 = pneg %p168
        $region98: #{tpu_custom_call.1} parent=83 // pred_check_branch
          %863 = sbr.rel (%p861) target = $region100
        $region99: #{tpu_custom_call.1} parent=83 // pred_region
          %s864 = sand.u32 %s49, 1
          %s865 = scalar_lea.sflag [#allocation10], %s864
          %s866 = sand.u32 %s158, 1
          %s867 = smul.addr %s866, 16
          %s868 = scalar_lea.vmem [#allocation11], %s867
          %s870 = ssub.s32 256, 256
          %871 = vsyncadd %s865, %s870
          %s872 = smul.addr %s49, 64
          %s873 = scalar_lea.hbm %s4, %s872
          %s874 = sshll.u32 %s868, 4
          %s875 = int_to_ptr.vmem [resolvable:$true] %s874
          %880 = dma.hbm_to_vmem [thread:$0]  %s873, 256, %s875, %s865, 128, 64, 4
        $region100: #{tpu_custom_call.1} parent=83 // pred_fallthru
          _
      $region84: #{tpu_custom_call.1} parent=5 // pred_fallthru
        _
      %p881 = scmp.le.s32.totalorder 1, %s49
      %p882 = scmp.lt.s32.totalorder %s49, 3
      %p883 = pnand %p881, %p882
      %p884 = pneg %p883
      // Predicated region
      $region101: #{tpu_custom_call.1} parent=5 // pred_check
        _
      $region102: #{tpu_custom_call.1} parent=5 // pred_check_branch
        %886 = sbr.rel (%p883) target = $region104
      $region103: #{tpu_custom_call.1} parent=5 // pred_region
        %s887 = ssub.s32 %s49, 1
        // Predicated region
        $region105: #{tpu_custom_call.1} parent=103 // pred_check
          %p888 = pneg %p70
        $region106: #{tpu_custom_call.1} parent=103 // pred_check_branch
          %890 = sbr.rel (%p888) target = $region108
        $region107: #{tpu_custom_call.1} parent=103 // pred_region
          %891 = dma.done [#allocation4], 512
        $region108: #{tpu_custom_call.1} parent=103 // pred_fallthru
          _
        %s892 = sand.u32 %s54, 1
        %s893 = scalar_lea.sflag [#allocation7], %s892
        %s894 = sand.u32 %s83, 1
        %s895 = smul.addr %s894, 128
        %s896 = scalar_lea.vmem [#allocation6], %s895
        // Predicated region
        $region109: #{tpu_custom_call.1} parent=103 // pred_check
          %p897 = pneg %p96
        $region110: #{tpu_custom_call.1} parent=103 // pred_check_branch
          %899 = sbr.rel (%p897) target = $region112
        $region111: #{tpu_custom_call.1} parent=103 // pred_region
          %900 = dma.done %s893, 2048
        $region112: #{tpu_custom_call.1} parent=103 // pred_fallthru
          _
        %s901 = sand.u32 %s54, 1
        %s902 = scalar_lea.sflag [#allocation7], %s901
        %s903 = sand.u32 %s109, 1
        %s904 = smul.addr %s903, 64
        %s905 = scalar_lea.vmem [#allocation8], %s904
        // Predicated region
        $region113: #{tpu_custom_call.1} parent=103 // pred_check
          %p906 = pneg %p122
        $region114: #{tpu_custom_call.1} parent=103 // pred_check_branch
          %908 = sbr.rel (%p906) target = $region116
        $region115: #{tpu_custom_call.1} parent=103 // pred_region
          %909 = dma.done %s902, 1024
        $region116: #{tpu_custom_call.1} parent=103 // pred_fallthru
          _
        %s910 = sand.u32 %s54, 1
        %s911 = scalar_lea.sflag [#allocation10], %s910
        %s912 = sand.u32 %s135, 1
        %s913 = smul.addr %s912, 64
        %s914 = scalar_lea.vmem [#allocation9], %s913
        // Predicated region
        $region117: #{tpu_custom_call.1} parent=103 // pred_check
          %p915 = pneg %p148
        $region118: #{tpu_custom_call.1} parent=103 // pred_check_branch
          %917 = sbr.rel (%p915) target = $region120
        $region119: #{tpu_custom_call.1} parent=103 // pred_region
          %918 = dma.done %s911, 1024
        $region120: #{tpu_custom_call.1} parent=103 // pred_fallthru
          _
        %s919 = sand.u32 %s54, 1
        %s920 = scalar_lea.sflag [#allocation10], %s919
        %s921 = sand.u32 %s161, 1
        %s922 = smul.addr %s921, 16
        %s923 = scalar_lea.vmem [#allocation11], %s922
        // Predicated region
        $region121: #{tpu_custom_call.1} parent=103 // pred_check
          %p924 = pneg %p174
        $region122: #{tpu_custom_call.1} parent=103 // pred_check_branch
          %926 = sbr.rel (%p924) target = $region124
        $region123: #{tpu_custom_call.1} parent=103 // pred_region
          %927 = dma.done %s920, 256
        $region124: #{tpu_custom_call.1} parent=103 // pred_fallthru
          _
        // Predicated region
        $region125: #{tpu_custom_call.1} parent=103 // pred_check
          %p928 = pneg %p195
        $region126: #{tpu_custom_call.1} parent=103 // pred_check_branch
          %930 = sbr.rel (%p928) target = $region128
        $region127: #{tpu_custom_call.1} parent=103 // pred_region
          %931 = dma.done [#allocation13], 128
        $region128: #{tpu_custom_call.1} parent=103 // pred_fallthru
          _
        // Predicated region
        $region129: #{tpu_custom_call.1} parent=103 // pred_check
          %p932 = pneg %p216
        $region130: #{tpu_custom_call.1} parent=103 // pred_check_branch
          %934 = sbr.rel (%p932) target = $region132
        $region131: #{tpu_custom_call.1} parent=103 // pred_region
          %935 = dma.done [#allocation13], 128
        $region132: #{tpu_custom_call.1} parent=103 // pred_fallthru
          _
        // Predicated region
        $region133: #{tpu_custom_call.1} parent=103 // pred_check
          %p936 = pneg %p237
        $region134: #{tpu_custom_call.1} parent=103 // pred_check_branch
          %938 = sbr.rel (%p936) target = $region136
        $region135: #{tpu_custom_call.1} parent=103 // pred_region
          %939 = dma.done [#allocation16], 128
        $region136: #{tpu_custom_call.1} parent=103 // pred_fallthru
          _
        // Predicated region
        $region137: #{tpu_custom_call.1} parent=103 // pred_check
          %p940 = pneg %p258
        $region138: #{tpu_custom_call.1} parent=103 // pred_check_branch
          %942 = sbr.rel (%p940) target = $region140
        $region139: #{tpu_custom_call.1} parent=103 // pred_region
          %943 = dma.done [#allocation16], 16
        $region140: #{tpu_custom_call.1} parent=103 // pred_fallthru
          _
        // Predicated region
        $region141: #{tpu_custom_call.1} parent=103 // pred_check
          %p944 = pneg %p279
        $region142: #{tpu_custom_call.1} parent=103 // pred_check_branch
          %946 = sbr.rel (%p944) target = $region144
        $region143: #{tpu_custom_call.1} parent=103 // pred_region
          %947 = dma.done [#allocation19], 2048
        $region144: #{tpu_custom_call.1} parent=103 // pred_fallthru
          _
        // Predicated region
        $region145: #{tpu_custom_call.1} parent=103 // pred_check
          %p948 = pneg %p300
        $region146: #{tpu_custom_call.1} parent=103 // pred_check_branch
          %950 = sbr.rel (%p948) target = $region148
        $region147: #{tpu_custom_call.1} parent=103 // pred_region
          %951 = dma.done [#allocation19], 16
        $region148: #{tpu_custom_call.1} parent=103 // pred_fallthru
          _
        // Predicated region
        $region149: #{tpu_custom_call.1} parent=103 // pred_check
          %p952 = pneg %p321
        $region150: #{tpu_custom_call.1} parent=103 // pred_check_branch
          %954 = sbr.rel (%p952) target = $region152
        $region151: #{tpu_custom_call.1} parent=103 // pred_region
          %955 = dma.done [#allocation22], 2048
        $region152: #{tpu_custom_call.1} parent=103 // pred_fallthru
          _
        // Predicated region
        $region153: #{tpu_custom_call.1} parent=103 // pred_check
          %p956 = pneg %p342
        $region154: #{tpu_custom_call.1} parent=103 // pred_check_branch
          %958 = sbr.rel (%p956) target = $region156
        $region155: #{tpu_custom_call.1} parent=103 // pred_region
          %959 = dma.done [#allocation22], 128
        $region156: #{tpu_custom_call.1} parent=103 // pred_fallthru
          _
        // Predicated region
        $region157: #{tpu_custom_call.1} parent=103 // pred_check
          %p960 = pneg %p363
        $region158: #{tpu_custom_call.1} parent=103 // pred_check_branch
          %962 = sbr.rel (%p960) target = $region160
        $region159: #{tpu_custom_call.1} parent=103 // pred_region
          %963 = dma.done [#allocation25], 16
        $region160: #{tpu_custom_call.1} parent=103 // pred_fallthru
          _
        // Predicated region
        $region161: #{tpu_custom_call.1} parent=103 // pred_check
          %p964 = pneg %p384
        $region162: #{tpu_custom_call.1} parent=103 // pred_check_branch
          %966 = sbr.rel (%p964) target = $region164
        $region163: #{tpu_custom_call.1} parent=103 // pred_region
          %967 = dma.done [#allocation25], 2048
        $region164: #{tpu_custom_call.1} parent=103 // pred_fallthru
          _
        // Predicated region
        $region165: #{tpu_custom_call.1} parent=103 // pred_check
          %p968 = pneg %p405
        $region166: #{tpu_custom_call.1} parent=103 // pred_check_branch
          %970 = sbr.rel (%p968) target = $region168
        $region167: #{tpu_custom_call.1} parent=103 // pred_region
          %971 = dma.done [#allocation28], 16
        $region168: #{tpu_custom_call.1} parent=103 // pred_fallthru
          _
        // Predicated region
        $region169: #{tpu_custom_call.1} parent=103 // pred_check
          %p972 = pneg %p426
        $region170: #{tpu_custom_call.1} parent=103 // pred_check_branch
          %974 = sbr.rel (%p972) target = $region172
        $region171: #{tpu_custom_call.1} parent=103 // pred_region
          %975 = dma.done [#allocation28], 2048
        $region172: #{tpu_custom_call.1} parent=103 // pred_fallthru
          _
        // Predicated region
        $region173: #{tpu_custom_call.1} parent=103 // pred_check
          %p976 = pneg %p447
        $region174: #{tpu_custom_call.1} parent=103 // pred_check_branch
          %978 = sbr.rel (%p976) target = $region176
        $region175: #{tpu_custom_call.1} parent=103 // pred_region
          %979 = dma.done [#allocation31], 2048
        $region176: #{tpu_custom_call.1} parent=103 // pred_fallthru
          _
        // Predicated region
        $region177: #{tpu_custom_call.1} parent=103 // pred_check
          %p980 = pneg %p468
        $region178: #{tpu_custom_call.1} parent=103 // pred_check_branch
          %982 = sbr.rel (%p980) target = $region180
        $region179: #{tpu_custom_call.1} parent=103 // pred_region
          %983 = dma.done [#allocation31], 16
        $region180: #{tpu_custom_call.1} parent=103 // pred_fallthru
          _
        // Predicated region
        $region181: #{tpu_custom_call.1} parent=103 // pred_check
          %p984 = pneg %p489
        $region182: #{tpu_custom_call.1} parent=103 // pred_check_branch
          %986 = sbr.rel (%p984) target = $region184
        $region183: #{tpu_custom_call.1} parent=103 // pred_region
          %987 = dma.done [#allocation34], 2048
        $region184: #{tpu_custom_call.1} parent=103 // pred_fallthru
          _
        // Predicated region
        $region185: #{tpu_custom_call.1} parent=103 // pred_check
          %p988 = pneg %p510
        $region186: #{tpu_custom_call.1} parent=103 // pred_check_branch
          %990 = sbr.rel (%p988) target = $region188
        $region187: #{tpu_custom_call.1} parent=103 // pred_region
          %991 = dma.done [#allocation34], 16
        $region188: #{tpu_custom_call.1} parent=103 // pred_fallthru
          _
        %p992 = pneg %p70
        %p993 = pneg %p67
        %s994 = sand.u32 %s54, 1
        %s995 = scalar_lea.sflag [#allocation7], %s994
        %s996 = sand.u32 %s83, 1
        %s997 = smul.addr %s996, 128
        %s998 = scalar_lea.vmem [#allocation6], %s997
        %p999 = pneg %p96
        %p1000 = pneg %p93
        %s1001 = sand.u32 %s54, 1
        %s1002 = scalar_lea.sflag [#allocation7], %s1001
        %s1003 = sand.u32 %s109, 1
        %s1004 = smul.addr %s1003, 64
        %s1005 = scalar_lea.vmem [#allocation8], %s1004
        %p1006 = pneg %p122
        %p1007 = pneg %p119
        %s1008 = sand.u32 %s54, 1
        %s1009 = scalar_lea.sflag [#allocation10], %s1008
        %s1010 = sand.u32 %s135, 1
        %s1011 = smul.addr %s1010, 64
        %s1012 = scalar_lea.vmem [#allocation9], %s1011
        %p1013 = pneg %p148
        %p1014 = pneg %p145
        %s1015 = sand.u32 %s54, 1
        %s1016 = scalar_lea.sflag [#allocation10], %s1015
        %s1017 = sand.u32 %s161, 1
        %s1018 = smul.addr %s1017, 16
        %s1019 = scalar_lea.vmem [#allocation11], %s1018
        %p1020 = pneg %p174
        %p1021 = pneg %p171
        %p1022 = pneg %p195
        %p1023 = pneg %p192
        %p1024 = pneg %p216
        %p1025 = pneg %p213
        %p1026 = pneg %p237
        %p1027 = pneg %p234
        %p1028 = pneg %p258
        %p1029 = pneg %p255
        %p1030 = pneg %p279
        %p1031 = pneg %p276
        %p1032 = pneg %p300
        %p1033 = pneg %p297
        %p1034 = pneg %p321
        %p1035 = pneg %p318
        %p1036 = pneg %p342
        %p1037 = pneg %p339
        %p1038 = pneg %p363
        %p1039 = pneg %p360
        %p1040 = pneg %p384
        %p1041 = pneg %p381
        %p1042 = pneg %p405
        %p1043 = pneg %p402
        %p1044 = pneg %p426
        %p1045 = pneg %p423
        %p1046 = pneg %p447
        %p1047 = pneg %p444
        %p1048 = pneg %p468
        %p1049 = pneg %p465
        %p1050 = pneg %p489
        %p1051 = pneg %p486
        %p1052 = pneg %p510
        %p1053 = pneg %p507
        %p1054 = pneg %p536
        %p1055 = pneg %p533
        %s1056 = sand.u32 %s523, 1
        %s1057 = scalar_lea.sflag [#allocation5], %s1056
        %s1058 = sand.u32 %s523, 1
        %s1059 = smul.addr %s1058, 128
        %s1060 = scalar_lea.vmem [#allocation36], %s1059
        %p1061 = pneg %p557
        %p1062 = pneg %p554
        %p1063 = pneg %p578
        %p1064 = pneg %p575
        %s1065 = smul.u32 16, %s54
        %s1066 = smul.u32 16, %s54
        %s1067 = smul.u32 16, %s54
        %s1068 = smul.u32 16, %s54
        %p1069 = scmp.eq.s32.totalorder %s54, 0
        // Predicated region
        $region189: #{tpu_custom_call.1} parent=103 // pred_check
          %p1070 = pneg %p1069
        $region190: #{tpu_custom_call.1} parent=103 // pred_check_branch
          %1072 = sbr.rel (%p1070) target = $region192
        $region191: #{tpu_custom_call.1} parent=103 // pred_region
          %1073 = vst [vmem:[#allocation2] sm:$0xff] 0.0
          %1074 = vst [vmem:[#allocation2 + $0x8] sm:$0xff] 0.0
          %1075 = vst [vmem:[#allocation2 + $0x10] sm:$0xff] 0.0
          %1076 = vst [vmem:[#allocation2 + $0x18] sm:$0xff] 0.0
        $region192: #{tpu_custom_call.1} parent=103 // pred_fallthru
          _
        %v1077 = vld [vmem:[#allocation3] sm:$0xff]
        %v1078 = vld [vmem:[#allocation3 + $0x8] sm:$0xff]
        %v1079 = vld [vmem:[#allocation3 + $0x10] sm:$0xff]
        %v1080 = vld [vmem:[#allocation3 + $0x18] sm:$0xff]
        %v1081 = vld [vmem:[%s896] sm:$0xff]
        %v1082 = vld [vmem:[%s896 + $0x8] sm:$0xff]
        %v1083 = vld [vmem:[%s896 + $0x10] sm:$0xff]
        %v1084 = vld [vmem:[%s896 + $0x18] sm:$0xff]
        %v1085 = vld [vmem:[%s896 + $0x20] sm:$0xff]
        %v1086 = vld [vmem:[%s896 + $0x28] sm:$0xff]
        %v1087 = vld [vmem:[%s896 + $0x30] sm:$0xff]
        %v1088 = vld [vmem:[%s896 + $0x38] sm:$0xff]
        %v1089 = vld [vmem:[%s896 + $0x40] sm:$0xff]
        %v1090 = vld [vmem:[%s896 + $0x48] sm:$0xff]
        %v1091 = vld [vmem:[%s896 + $0x50] sm:$0xff]
        %v1092 = vld [vmem:[%s896 + $0x58] sm:$0xff]
        %v1093 = vld [vmem:[%s896 + $0x60] sm:$0xff]
        %v1094 = vld [vmem:[%s896 + $0x68] sm:$0xff]
        %v1095 = vld [vmem:[%s896 + $0x70] sm:$0xff]
        %v1096 = vld [vmem:[%s896 + $0x78] sm:$0xff]
        %v1097 = vld [vmem:[%s905] sm:$0xf]
        %v1098 = vld [vmem:[%s905 + $0x4] sm:$0xf]
        %v1099 = vld [vmem:[%s905 + $0x8] sm:$0xf]
        %v1100 = vld [vmem:[%s905 + $0xc] sm:$0xf]
        %v1101 = vld [vmem:[%s905 + $0x10] sm:$0xf]
        %v1102 = vld [vmem:[%s905 + $0x14] sm:$0xf]
        %v1103 = vld [vmem:[%s905 + $0x18] sm:$0xf]
        %v1104 = vld [vmem:[%s905 + $0x1c] sm:$0xf]
        %v1105 = vld [vmem:[%s905 + $0x20] sm:$0xf]
        %v1106 = vld [vmem:[%s905 + $0x24] sm:$0xf]
        %v1107 = vld [vmem:[%s905 + $0x28] sm:$0xf]
        %v1108 = vld [vmem:[%s905 + $0x2c] sm:$0xf]
        %v1109 = vld [vmem:[%s905 + $0x30] sm:$0xf]
        %v1110 = vld [vmem:[%s905 + $0x34] sm:$0xf]
        %v1111 = vld [vmem:[%s905 + $0x38] sm:$0xf]
        %v1112 = vld [vmem:[%s905 + $0x3c] sm:$0xf]
        %v1113 = vunpack.c.l.bf16 %v1097
        %v1114 = vunpack.c.l.bf16 %v1098
        %v1115 = vunpack.c.l.bf16 %v1099
        %v1116 = vunpack.c.l.bf16 %v1100
        %v1117 = vunpack.c.l.bf16 %v1101
        %v1118 = vunpack.c.l.bf16 %v1102
        %v1119 = vunpack.c.l.bf16 %v1103
        %v1120 = vunpack.c.l.bf16 %v1104
        %v1121 = vunpack.c.l.bf16 %v1105
        %v1122 = vunpack.c.l.bf16 %v1106
        %v1123 = vunpack.c.l.bf16 %v1107
        %v1124 = vunpack.c.l.bf16 %v1108
        %v1125 = vunpack.c.l.bf16 %v1109
        %v1126 = vunpack.c.l.bf16 %v1110
        %v1127 = vunpack.c.l.bf16 %v1111
        %v1128 = vunpack.c.l.bf16 %v1112
        %v1129 = vld [vmem:[%s914] sm:$0xf]
        %v1130 = vld [vmem:[%s914 + $0x4] sm:$0xf]
        %v1131 = vld [vmem:[%s914 + $0x8] sm:$0xf]
        %v1132 = vld [vmem:[%s914 + $0xc] sm:$0xf]
        %v1133 = vld [vmem:[%s914 + $0x10] sm:$0xf]
        %v1134 = vld [vmem:[%s914 + $0x14] sm:$0xf]
        %v1135 = vld [vmem:[%s914 + $0x18] sm:$0xf]
        %v1136 = vld [vmem:[%s914 + $0x1c] sm:$0xf]
        %v1137 = vld [vmem:[%s914 + $0x20] sm:$0xf]
        %v1138 = vld [vmem:[%s914 + $0x24] sm:$0xf]
        %v1139 = vld [vmem:[%s914 + $0x28] sm:$0xf]
        %v1140 = vld [vmem:[%s914 + $0x2c] sm:$0xf]
        %v1141 = vld [vmem:[%s914 + $0x30] sm:$0xf]
        %v1142 = vld [vmem:[%s914 + $0x34] sm:$0xf]
        %v1143 = vld [vmem:[%s914 + $0x38] sm:$0xf]
        %v1144 = vld [vmem:[%s914 + $0x3c] sm:$0xf]
        %v1145 = vunpack.c.l.bf16 %v1129
        %v1146 = vunpack.c.l.bf16 %v1130
        %v1147 = vunpack.c.l.bf16 %v1131
        %v1148 = vunpack.c.l.bf16 %v1132
        %v1149 = vunpack.c.l.bf16 %v1133
        %v1150 = vunpack.c.l.bf16 %v1134
        %v1151 = vunpack.c.l.bf16 %v1135
        %v1152 = vunpack.c.l.bf16 %v1136
        %v1153 = vunpack.c.l.bf16 %v1137
        %v1154 = vunpack.c.l.bf16 %v1138
        %v1155 = vunpack.c.l.bf16 %v1139
        %v1156 = vunpack.c.l.bf16 %v1140
        %v1157 = vunpack.c.l.bf16 %v1141
        %v1158 = vunpack.c.l.bf16 %v1142
        %v1159 = vunpack.c.l.bf16 %v1143
        %v1160 = vunpack.c.l.bf16 %v1144
        %v1161 = vld [vmem:[%s923] sm:$0xf]
        %v1162 = vld [vmem:[%s923 + $0x4] sm:$0xf]
        %v1163 = vld [vmem:[%s923 + $0x8] sm:$0xf]
        %v1164 = vld [vmem:[%s923 + $0xc] sm:$0xf]
        %v1165 = vunpack.c.l.bf16 %v1161
        %v1166 = vunpack.c.l.bf16 %v1162
        %v1167 = vunpack.c.l.bf16 %v1163
        %v1168 = vunpack.c.l.bf16 %v1164
        %v1169 = vld [vmem:[#allocation14] sm:$0xff]
        %vm1170 = vcmask 64512
        %v1172 = vsel %vm1170, %v1077, 0
        %v1175 = vsel %vm1170, %v1078, 0
        %v1178 = vsel %vm1170, %v1079, 0
        %v1181 = vsel %vm1170, %v1080, 0
        %1183 = vmatprep.subr.mxu0 0.0
        %1184 = vmatpush1.msra.mxu0 %v1169
        %1185 = vmatprep.subr.mxu0 0.0
        %1186 = vmatpush1.msra.mxu0 0.0
        %1187 = vmatprep.subr.mxu0 0.0
        %1188 = vmatpush1.msra.mxu0 0.0
        %1189 = vmatprep.subr.mxu0 0.0
        %1190 = vmatpush1.msra.mxu0 0.0
        %1191 = vmatprep.subr.mxu0 0.0
        %1192 = vmatpush1.msra.mxu0 0.0
        %1193 = vmatprep.subr.mxu0 0.0
        %1194 = vmatpush1.msra.mxu0 0.0
        %1195 = vmatprep.subr.mxu0 0.0
        %1196 = vmatpush1.msra.mxu0 0.0
        %1197 = vmatprep.subr.mxu0 0.0
        %1198 = vmatpush1.msra.mxu0 0.0
        %1199 = vmatprep.subr.mxu0 0.0
        %1200 = vmatpush1.msra.mxu0 0.0
        %1201 = vmatprep.subr.mxu0 0.0
        %1202 = vmatpush1.msra.mxu0 0.0
        %1203 = vmatprep.subr.mxu0 0.0
        %1204 = vmatpush1.msra.mxu0 0.0
        %1205 = vmatprep.subr.mxu0 0.0
        %1206 = vmatpush1.msra.mxu0 0.0
        %1207 = vmatprep.subr.mxu0 0.0
        %1208 = vmatpush1.msra.mxu0 0.0
        %1209 = vmatprep.subr.mxu0 0.0
        %1210 = vmatpush1.msra.mxu0 0.0
        %1211 = vmatprep.subr.mxu0 0.0
        %1212 = vmatpush1.msra.mxu0 0.0
        %1213 = vmatprep.subr.mxu0 0.0
        %1214 = vmatpush1.msra.mxu0 0.0
        %1215 = vmatprep.subr.mxu0 0.0
        %1216 = vmatpush1.msra.mxu0 0.0
        %1217 = vmatprep.subr.mxu0 0.0
        %1218 = vmatpush1.msra.mxu0 0.0
        %1219 = vmatprep.subr.mxu0 0.0
        %1220 = vmatpush1.msra.mxu0 0.0
        %1221 = vmatprep.subr.mxu0 0.0
        %1222 = vmatpush1.msra.mxu0 0.0
        %1223 = vmatprep.subr.mxu0 0.0
        %1224 = vmatpush1.msra.mxu0 0.0
        %1225 = vmatprep.subr.mxu0 0.0
        %1226 = vmatpush1.msra.mxu0 0.0
        %1227 = vmatprep.subr.mxu0 0.0
        %1228 = vmatpush1.msra.mxu0 0.0
        %1229 = vmatprep.subr.mxu0 0.0
        %1230 = vmatpush1.msra.mxu0 0.0
        %1231 = vmatprep.subr.mxu0 0.0
        %1232 = vmatpush1.msra.mxu0 0.0
        %1233 = vmatprep.subr.mxu0 0.0
        %1234 = vmatpush1.msra.mxu0 0.0
        %1235 = vmatprep.subr.mxu0 0.0
        %1236 = vmatpush1.msra.mxu0 0.0
        %1237 = vmatprep.subr.mxu0 0.0
        %1238 = vmatpush1.msra.mxu0 0.0
        %1239 = vmatprep.subr.mxu0 0.0
        %1240 = vmatpush1.msra.mxu0 0.0
        %1241 = vmatprep.subr.mxu0 0.0
        %1242 = vmatpush1.msra.mxu0 0.0
        %1243 = vmatprep.subr.mxu0 0.0
        %1244 = vmatpush1.msra.mxu0 0.0
        %1245 = vmatprep.subr.mxu0 0.0
        %1246 = vmatpush1.msra.mxu0 0.0
        %1247 = vmatprep.mubr.f32.mxu0 0.0
        %1248 = vmatmul.mubr.f32.gmra.mrb[0].mxu0 %v1172
        %v1249 = vpop.f32.mrb[0].mxu0
        %v1250 = vadd.f32 0.0, %v1249
        %v1251 = vpop.f32.mrb[0].mxu0
        %1252 = vmatprep.mubr.f32.mxu0 0.0
        %1253 = vmatmul.mubr.f32.gmra.mrb[0].mxu0 %v1175
        %v1254 = vpop.f32.mrb[0].mxu0
        %v1255 = vadd.f32 0.0, %v1254
        %v1256 = vpop.f32.mrb[0].mxu0
        %1257 = vmatprep.mubr.f32.mxu0 0.0
        %1258 = vmatmul.mubr.f32.gmra.mrb[0].mxu0 %v1178
        %v1259 = vpop.f32.mrb[0].mxu0
        %v1260 = vadd.f32 0.0, %v1259
        %v1261 = vpop.f32.mrb[0].mxu0
        %1262 = vmatprep.mubr.f32.mxu0 0.0
        %1263 = vmatmul.mubr.f32.gmra.mrb[0].mxu0 %v1181
        %v1264 = vpop.f32.mrb[0].mxu0
        %v1265 = vadd.f32 0.0, %v1264
        %v1266 = vpop.f32.mrb[0].mxu0
        %1267 = vdwg.mxu0
        %v1268 = vld [vmem:[#allocation15] sm:$0xff]
        %1269 = vmatprep.subr.mxu0 0.0
        %1270 = vmatpush1.msra.mxu0 %v1268
        %1271 = vmatprep.subr.mxu0 0.0
        %1272 = vmatpush1.msra.mxu0 0.0
        %1273 = vmatprep.subr.mxu0 0.0
        %1274 = vmatpush1.msra.mxu0 0.0
        %1275 = vmatprep.subr.mxu0 0.0
        %1276 = vmatpush1.msra.mxu0 0.0
        %1277 = vmatprep.subr.mxu0 0.0
        %1278 = vmatpush1.msra.mxu0 0.0
        %1279 = vmatprep.subr.mxu0 0.0
        %1280 = vmatpush1.msra.mxu0 0.0
        %1281 = vmatprep.subr.mxu0 0.0
        %1282 = vmatpush1.msra.mxu0 0.0
        %1283 = vmatprep.subr.mxu0 0.0
        %1284 = vmatpush1.msra.mxu0 0.0
        %1285 = vmatprep.subr.mxu0 0.0
        %1286 = vmatpush1.msra.mxu0 0.0
        %1287 = vmatprep.subr.mxu0 0.0
        %1288 = vmatpush1.msra.mxu0 0.0
        %1289 = vmatprep.subr.mxu0 0.0
        %1290 = vmatpush1.msra.mxu0 0.0
        %1291 = vmatprep.subr.mxu0 0.0
        %1292 = vmatpush1.msra.mxu0 0.0
        %1293 = vmatprep.subr.mxu0 0.0
        %1294 = vmatpush1.msra.mxu0 0.0
        %1295 = vmatprep.subr.mxu0 0.0
        %1296 = vmatpush1.msra.mxu0 0.0
        %1297 = vmatprep.subr.mxu0 0.0
        %1298 = vmatpush1.msra.mxu0 0.0
        %1299 = vmatprep.subr.mxu0 0.0
        %1300 = vmatpush1.msra.mxu0 0.0
        %1301 = vmatprep.subr.mxu0 0.0
        %1302 = vmatpush1.msra.mxu0 0.0
        %1303 = vmatprep.subr.mxu0 0.0
        %1304 = vmatpush1.msra.mxu0 0.0
        %1305 = vmatprep.subr.mxu0 0.0
        %1306 = vmatpush1.msra.mxu0 0.0
        %1307 = vmatprep.subr.mxu0 0.0
        %1308 = vmatpush1.msra.mxu0 0.0
        %1309 = vmatprep.subr.mxu0 0.0
        %1310 = vmatpush1.msra.mxu0 0.0
        %1311 = vmatprep.subr.mxu0 0.0
        %1312 = vmatpush1.msra.mxu0 0.0
        %1313 = vmatprep.subr.mxu0 0.0
        %1314 = vmatpush1.msra.mxu0 0.0
        %1315 = vmatprep.subr.mxu0 0.0
        %1316 = vmatpush1.msra.mxu0 0.0
        %1317 = vmatprep.subr.mxu0 0.0
        %1318 = vmatpush1.msra.mxu0 0.0
        %1319 = vmatprep.subr.mxu0 0.0
        %1320 = vmatpush1.msra.mxu0 0.0
        %1321 = vmatprep.subr.mxu0 0.0
        %1322 = vmatpush1.msra.mxu0 0.0
        %1323 = vmatprep.subr.mxu0 0.0
        %1324 = vmatpush1.msra.mxu0 0.0
        %1325 = vmatprep.subr.mxu0 0.0
        %1326 = vmatpush1.msra.mxu0 0.0
        %1327 = vmatprep.subr.mxu0 0.0
        %1328 = vmatpush1.msra.mxu0 0.0
        %1329 = vmatprep.subr.mxu0 0.0
        %1330 = vmatpush1.msra.mxu0 0.0
        %1331 = vmatprep.subr.mxu0 0.0
        %1332 = vmatpush1.msra.mxu0 0.0
        %1333 = vmatprep.mubr.f32.mxu0 0.0
        %1334 = vmatmul.mubr.f32.gmra.mrb[0].mxu0 %v1172
        %v1335 = vpop.f32.mrb[0].mxu0
        %v1336 = vadd.f32 0.0, %v1335
        %v1337 = vpop.f32.mrb[0].mxu0
        %1338 = vmatprep.mubr.f32.mxu0 0.0
        %1339 = vmatmul.mubr.f32.gmra.mrb[0].mxu0 %v1175
        %v1340 = vpop.f32.mrb[0].mxu0
        %v1341 = vadd.f32 0.0, %v1340
        %v1342 = vpop.f32.mrb[0].mxu0
        %1343 = vmatprep.mubr.f32.mxu0 0.0
        %1344 = vmatmul.mubr.f32.gmra.mrb[0].mxu0 %v1178
        %v1345 = vpop.f32.mrb[0].mxu0
        %v1346 = vadd.f32 0.0, %v1345
        %v1347 = vpop.f32.mrb[0].mxu0
        %1348 = vmatprep.mubr.f32.mxu0 0.0
        %1349 = vmatmul.mubr.f32.gmra.mrb[0].mxu0 %v1181
        %v1350 = vpop.f32.mrb[0].mxu0
        %v1351 = vadd.f32 0.0, %v1350
        %v1352 = vpop.f32.mrb[0].mxu0
        %1353 = vdwg.mxu0
        %v1354 = vld [vmem:[#allocation12] sm:$0xff]
        %vm1355 = vcmask 261120
        %v1357 = vsel %vm1355, %v1113, 0
        %v1360 = vsel %vm1355, %v1114, 0
        %v1363 = vsel %vm1355, %v1115, 0
        %v1366 = vsel %vm1355, %v1116, 0
        %v1369 = vsel %vm1355, %v1117, 0
        %v1372 = vsel %vm1355, %v1118, 0
        %v1375 = vsel %vm1355, %v1119, 0
        %v1378 = vsel %vm1355, %v1120, 0
        %v1381 = vsel %vm1355, %v1121, 0
        %v1384 = vsel %vm1355, %v1122, 0
        %v1387 = vsel %vm1355, %v1123, 0
        %v1390 = vsel %vm1355, %v1124, 0
        %v1393 = vsel %vm1355, %v1125, 0
        %v1396 = vsel %vm1355, %v1126, 0
        %v1399 = vsel %vm1355, %v1127, 0
        %v1402 = vsel %vm1355, %v1128, 0
        %1404 = vmatprep.subr.mxu0 0.0
        %1405 = vmatpush1.msra.mxu0 %v1250
        %1406 = vmatprep.subr.mxu0 0.0
        %1407 = vmatpush1.msra.mxu0 %v1255
        %1408 = vmatprep.subr.mxu0 0.0
        %1409 = vmatpush1.msra.mxu0 %v1260
        %1410 = vmatprep.subr.mxu0 0.0
        %1411 = vmatpush1.msra.mxu0 %v1265
        %1412 = vmatprep.subr.mxu0 0.0
        %1413 = vmatpush1.msra.mxu0 0.0
        %1414 = vmatprep.subr.mxu0 0.0
        %1415 = vmatpush1.msra.mxu0 0.0
        %1416 = vmatprep.subr.mxu0 0.0
        %1417 = vmatpush1.msra.mxu0 0.0
        %1418 = vmatprep.subr.mxu0 0.0
        %1419 = vmatpush1.msra.mxu0 0.0
        %1420 = vmatprep.subr.mxu0 0.0
        %1421 = vmatpush1.msra.mxu0 0.0
        %1422 = vmatprep.subr.mxu0 0.0
        %1423 = vmatpush1.msra.mxu0 0.0
        %1424 = vmatprep.subr.mxu0 0.0
        %1425 = vmatpush1.msra.mxu0 0.0
        %1426 = vmatprep.subr.mxu0 0.0
        %1427 = vmatpush1.msra.mxu0 0.0
        %1428 = vmatprep.subr.mxu0 0.0
        %1429 = vmatpush1.msra.mxu0 0.0
        %1430 = vmatprep.subr.mxu0 0.0
        %1431 = vmatpush1.msra.mxu0 0.0
        %1432 = vmatprep.subr.mxu0 0.0
        %1433 = vmatpush1.msra.mxu0 0.0
        %1434 = vmatprep.subr.mxu0 0.0
        %1435 = vmatpush1.msra.mxu0 0.0
        %1436 = vmatprep.subr.mxu0 0.0
        %1437 = vmatpush1.msra.mxu0 0.0
        %1438 = vmatprep.subr.mxu0 0.0
        %1439 = vmatpush1.msra.mxu0 0.0
        %1440 = vmatprep.subr.mxu0 0.0
        %1441 = vmatpush1.msra.mxu0 0.0
        %1442 = vmatprep.subr.mxu0 0.0
        %1443 = vmatpush1.msra.mxu0 0.0
        %1444 = vmatprep.subr.mxu0 0.0
        %1445 = vmatpush1.msra.mxu0 0.0
        %1446 = vmatprep.subr.mxu0 0.0
        %1447 = vmatpush1.msra.mxu0 0.0
        %1448 = vmatprep.subr.mxu0 0.0
        %1449 = vmatpush1.msra.mxu0 0.0
        %1450 = vmatprep.subr.mxu0 0.0
        %1451 = vmatpush1.msra.mxu0 0.0
        %1452 = vmatprep.subr.mxu0 0.0
        %1453 = vmatpush1.msra.mxu0 0.0
        %1454 = vmatprep.subr.mxu0 0.0
        %1455 = vmatpush1.msra.mxu0 0.0
        %1456 = vmatprep.subr.mxu0 0.0
        %1457 = vmatpush1.msra.mxu0 0.0
        %1458 = vmatprep.subr.mxu0 0.0
        %1459 = vmatpush1.msra.mxu0 0.0
        %1460 = vmatprep.subr.mxu0 0.0
        %1461 = vmatpush1.msra.mxu0 0.0
        %1462 = vmatprep.subr.mxu0 0.0
        %1463 = vmatpush1.msra.mxu0 0.0
        %1464 = vmatprep.subr.mxu0 0.0
        %1465 = vmatpush1.msra.mxu0 0.0
        %1466 = vmatprep.subr.mxu0 0.0
        %1467 = vmatpush1.msra.mxu0 0.0
        %1468 = vmatprep.mubr.f32.mxu0 0.0
        %1469 = vmatmul.mubr.f32.gmra.mrb[0].mxu0 %v1357
        %v1470 = vpop.f32.mrb[0].mxu0
        %v1471 = vadd.f32 0.0, %v1470
        %v1472 = vpop.f32.mrb[0].mxu0
        %1473 = vmatprep.mubr.f32.mxu0 0.0
        %1474 = vmatmul.mubr.f32.gmra.mrb[0].mxu0 %v1360
        %v1475 = vpop.f32.mrb[0].mxu0
        %v1476 = vadd.f32 0.0, %v1475
        %v1477 = vpop.f32.mrb[0].mxu0
        %1478 = vmatprep.mubr.f32.mxu0 0.0
        %1479 = vmatmul.mubr.f32.gmra.mrb[0].mxu0 %v1363
        %v1480 = vpop.f32.mrb[0].mxu0
        %v1481 = vadd.f32 0.0, %v1480
        %v1482 = vpop.f32.mrb[0].mxu0
        %1483 = vmatprep.mubr.f32.mxu0 0.0
        %1484 = vmatmul.mubr.f32.gmra.mrb[0].mxu0 %v1366
        %v1485 = vpop.f32.mrb[0].mxu0
        %v1486 = vadd.f32 0.0, %v1485
        %v1487 = vpop.f32.mrb[0].mxu0
        %1488 = vmatprep.mubr.f32.mxu0 0.0
        %1489 = vmatmul.mubr.f32.gmra.mrb[0].mxu0 %v1369
        %v1490 = vpop.f32.mrb[0].mxu0
        %v1491 = vadd.f32 0.0, %v1490
        %v1492 = vpop.f32.mrb[0].mxu0
        %1493 = vmatprep.mubr.f32.mxu0 0.0
        %1494 = vmatmul.mubr.f32.gmra.mrb[0].mxu0 %v1372
        %v1495 = vpop.f32.mrb[0].mxu0
        %v1496 = vadd.f32 0.0, %v1495
        %v1497 = vpop.f32.mrb[0].mxu0
        %1498 = vmatprep.mubr.f32.mxu0 0.0
        %1499 = vmatmul.mubr.f32.gmra.mrb[0].mxu0 %v1375
        %v1500 = vpop.f32.mrb[0].mxu0
        %v1501 = vadd.f32 0.0, %v1500
        %v1502 = vpop.f32.mrb[0].mxu0
        %1503 = vmatprep.mubr.f32.mxu0 0.0
        %1504 = vmatmul.mubr.f32.gmra.mrb[0].mxu0 %v1378
        %v1505 = vpop.f32.mrb[0].mxu0
        %v1506 = vadd.f32 0.0, %v1505
        %v1507 = vpop.f32.mrb[0].mxu0
        %1508 = vmatprep.mubr.f32.mxu0 0.0
        %1509 = vmatmul.mubr.f32.gmra.mrb[0].mxu0 %v1381
        %v1510 = vpop.f32.mrb[0].mxu0
        %v1511 = vadd.f32 0.0, %v1510
        %v1512 = vpop.f32.mrb[0].mxu0
        %1513 = vmatprep.mubr.f32.mxu0 0.0
        %1514 = vmatmul.mubr.f32.gmra.mrb[0].mxu0 %v1384
        %v1515 = vpop.f32.mrb[0].mxu0
        %v1516 = vadd.f32 0.0, %v1515
        %v1517 = vpop.f32.mrb[0].mxu0
        %1518 = vmatprep.mubr.f32.mxu0 0.0
        %1519 = vmatmul.mubr.f32.gmra.mrb[0].mxu0 %v1387
        %v1520 = vpop.f32.mrb[0].mxu0
        %v1521 = vadd.f32 0.0, %v1520
        %v1522 = vpop.f32.mrb[0].mxu0
        %1523 = vmatprep.mubr.f32.mxu0 0.0
        %1524 = vmatmul.mubr.f32.gmra.mrb[0].mxu0 %v1390
        %v1525 = vpop.f32.mrb[0].mxu0
        %v1526 = vadd.f32 0.0, %v1525
        %v1527 = vpop.f32.mrb[0].mxu0
        %1528 = vmatprep.mubr.f32.mxu0 0.0
        %1529 = vmatmul.mubr.f32.gmra.mrb[0].mxu0 %v1393
        %v1530 = vpop.f32.mrb[0].mxu0
        %v1531 = vadd.f32 0.0, %v1530
        %v1532 = vpop.f32.mrb[0].mxu0
        %1533 = vmatprep.mubr.f32.mxu0 0.0
        %1534 = vmatmul.mubr.f32.gmra.mrb[0].mxu0 %v1396
        %v1535 = vpop.f32.mrb[0].mxu0
        %v1536 = vadd.f32 0.0, %v1535
        %v1537 = vpop.f32.mrb[0].mxu0
        %1538 = vmatprep.mubr.f32.mxu0 0.0
        %1539 = vmatmul.mubr.f32.gmra.mrb[0].mxu0 %v1399
        %v1540 = vpop.f32.mrb[0].mxu0
        %v1541 = vadd.f32 0.0, %v1540
        %v1542 = vpop.f32.mrb[0].mxu0
        %1543 = vmatprep.mubr.f32.mxu0 0.0
        %1544 = vmatmul.mubr.f32.gmra.mrb[0].mxu0 %v1402
        %v1545 = vpop.f32.mrb[0].mxu0
        %v1546 = vadd.f32 0.0, %v1545
        %v1547 = vpop.f32.mrb[0].mxu0
        %1548 = vdwg.mxu0
        %v1550 = vsel %vm1170, %v1081, 0
        %v1553 = vsel %vm1170, %v1082, 0
        %v1556 = vsel %vm1170, %v1083, 0
        %v1559 = vsel %vm1170, %v1084, 0
        %v1562 = vsel %vm1170, %v1085, 0
        %v1565 = vsel %vm1170, %v1086, 0
        %v1568 = vsel %vm1170, %v1087, 0
        %v1571 = vsel %vm1170, %v1088, 0
        %v1574 = vsel %vm1170, %v1089, 0
        %v1577 = vsel %vm1170, %v1090, 0
        %v1580 = vsel %vm1170, %v1091, 0
        %v1583 = vsel %vm1170, %v1092, 0
        %v1586 = vsel %vm1170, %v1093, 0
        %v1589 = vsel %vm1170, %v1094, 0
        %v1592 = vsel %vm1170, %v1095, 0
        %v1595 = vsel %vm1170, %v1096, 0
        %1597 = vmatprep.subr.mxu0 0.0
        %1598 = vmatpush1.msra.mxu0 %v1354
        %1599 = vmatprep.subr.mxu0 0.0
        %1600 = vmatpush1.msra.mxu0 0.0
        %1601 = vmatprep.subr.mxu0 0.0
        %1602 = vmatpush1.msra.mxu0 0.0
        %1603 = vmatprep.subr.mxu0 0.0
        %1604 = vmatpush1.msra.mxu0 0.0
        %1605 = vmatprep.subr.mxu0 0.0
        %1606 = vmatpush1.msra.mxu0 0.0
        %1607 = vmatprep.subr.mxu0 0.0
        %1608 = vmatpush1.msra.mxu0 0.0
        %1609 = vmatprep.subr.mxu0 0.0
        %1610 = vmatpush1.msra.mxu0 0.0
        %1611 = vmatprep.subr.mxu0 0.0
        %1612 = vmatpush1.msra.mxu0 0.0
        %1613 = vmatprep.subr.mxu0 0.0
        %1614 = vmatpush1.msra.mxu0 0.0
        %1615 = vmatprep.subr.mxu0 0.0
        %1616 = vmatpush1.msra.mxu0 0.0
        %1617 = vmatprep.subr.mxu0 0.0
        %1618 = vmatpush1.msra.mxu0 0.0
        %1619 = vmatprep.subr.mxu0 0.0
        %1620 = vmatpush1.msra.mxu0 0.0
        %1621 = vmatprep.subr.mxu0 0.0
        %1622 = vmatpush1.msra.mxu0 0.0
        %1623 = vmatprep.subr.mxu0 0.0
        %1624 = vmatpush1.msra.mxu0 0.0
        %1625 = vmatprep.subr.mxu0 0.0
        %1626 = vmatpush1.msra.mxu0 0.0
        %1627 = vmatprep.subr.mxu0 0.0
        %1628 = vmatpush1.msra.mxu0 0.0
        %1629 = vmatprep.subr.mxu0 0.0
        %1630 = vmatpush1.msra.mxu0 0.0
        %1631 = vmatprep.subr.mxu0 0.0
        %1632 = vmatpush1.msra.mxu0 0.0
        %1633 = vmatprep.subr.mxu0 0.0
        %1634 = vmatpush1.msra.mxu0 0.0
        %1635 = vmatprep.subr.mxu0 0.0
        %1636 = vmatpush1.msra.mxu0 0.0
        %1637 = vmatprep.subr.mxu0 0.0
        %1638 = vmatpush1.msra.mxu0 0.0
        %1639 = vmatprep.subr.mxu0 0.0
        %1640 = vmatpush1.msra.mxu0 0.0
        %1641 = vmatprep.subr.mxu0 0.0
        %1642 = vmatpush1.msra.mxu0 0.0
        %1643 = vmatprep.subr.mxu0 0.0
        %1644 = vmatpush1.msra.mxu0 0.0
        %1645 = vmatprep.subr.mxu0 0.0
        %1646 = vmatpush1.msra.mxu0 0.0
        %1647 = vmatprep.subr.mxu0 0.0
        %1648 = vmatpush1.msra.mxu0 0.0
        %1649 = vmatprep.subr.mxu0 0.0
        %1650 = vmatpush1.msra.mxu0 0.0
        %1651 = vmatprep.subr.mxu0 0.0
        %1652 = vmatpush1.msra.mxu0 0.0
        %1653 = vmatprep.subr.mxu0 0.0
        %1654 = vmatpush1.msra.mxu0 0.0
        %1655 = vmatprep.subr.mxu0 0.0
        %1656 = vmatpush1.msra.mxu0 0.0
        %1657 = vmatprep.subr.mxu0 0.0
        %1658 = vmatpush1.msra.mxu0 0.0
        %1659 = vmatprep.subr.mxu0 0.0
        %1660 = vmatpush1.msra.mxu0 0.0
        %1661 = vmatprep.mubr.f32.mxu0 0.0
        %1662 = vmatmul.mubr.f32.gmra.mrb[0].mxu0 %v1550
        %v1663 = vpop.f32.mrb[0].mxu0
        %v1664 = vadd.f32 %v1471, %v1663
        %v1665 = vpop.f32.mrb[0].mxu0
        %1666 = vmatprep.mubr.f32.mxu0 0.0
        %1667 = vmatmul.mubr.f32.gmra.mrb[0].mxu0 %v1553
        %v1668 = vpop.f32.mrb[0].mxu0
        %v1669 = vadd.f32 %v1476, %v1668
        %v1670 = vpop.f32.mrb[0].mxu0
        %1671 = vmatprep.mubr.f32.mxu0 0.0
        %1672 = vmatmul.mubr.f32.gmra.mrb[0].mxu0 %v1556
        %v1673 = vpop.f32.mrb[0].mxu0
        %v1674 = vadd.f32 %v1481, %v1673
        %v1675 = vpop.f32.mrb[0].mxu0
        %1676 = vmatprep.mubr.f32.mxu0 0.0
        %1677 = vmatmul.mubr.f32.gmra.mrb[0].mxu0 %v1559
        %v1678 = vpop.f32.mrb[0].mxu0
        %v1679 = vadd.f32 %v1486, %v1678
        %v1680 = vpop.f32.mrb[0].mxu0
        %1681 = vmatprep.mubr.f32.mxu0 0.0
        %1682 = vmatmul.mubr.f32.gmra.mrb[0].mxu0 %v1562
        %v1683 = vpop.f32.mrb[0].mxu0
        %v1684 = vadd.f32 %v1491, %v1683
        %v1685 = vpop.f32.mrb[0].mxu0
        %1686 = vmatprep.mubr.f32.mxu0 0.0
        %1687 = vmatmul.mubr.f32.gmra.mrb[0].mxu0 %v1565
        %v1688 = vpop.f32.mrb[0].mxu0
        %v1689 = vadd.f32 %v1496, %v1688
        %v1690 = vpop.f32.mrb[0].mxu0
        %1691 = vmatprep.mubr.f32.mxu0 0.0
        %1692 = vmatmul.mubr.f32.gmra.mrb[0].mxu0 %v1568
        %v1693 = vpop.f32.mrb[0].mxu0
        %v1694 = vadd.f32 %v1501, %v1693
        %v1695 = vpop.f32.mrb[0].mxu0
        %1696 = vmatprep.mubr.f32.mxu0 0.0
        %1697 = vmatmul.mubr.f32.gmra.mrb[0].mxu0 %v1571
        %v1698 = vpop.f32.mrb[0].mxu0
        %v1699 = vadd.f32 %v1506, %v1698
        %v1700 = vpop.f32.mrb[0].mxu0
        %1701 = vmatprep.mubr.f32.mxu0 0.0
        %1702 = vmatmul.mubr.f32.gmra.mrb[0].mxu0 %v1574
        %v1703 = vpop.f32.mrb[0].mxu0
        %v1704 = vadd.f32 %v1511, %v1703
        %v1705 = vpop.f32.mrb[0].mxu0
        %1706 = vmatprep.mubr.f32.mxu0 0.0
        %1707 = vmatmul.mubr.f32.gmra.mrb[0].mxu0 %v1577
        %v1708 = vpop.f32.mrb[0].mxu0
        %v1709 = vadd.f32 %v1516, %v1708
        %v1710 = vpop.f32.mrb[0].mxu0
        %1711 = vmatprep.mubr.f32.mxu0 0.0
        %1712 = vmatmul.mubr.f32.gmra.mrb[0].mxu0 %v1580
        %v1713 = vpop.f32.mrb[0].mxu0
        %v1714 = vadd.f32 %v1521, %v1713
        %v1715 = vpop.f32.mrb[0].mxu0
        %1716 = vmatprep.mubr.f32.mxu0 0.0
        %1717 = vmatmul.mubr.f32.gmra.mrb[0].mxu0 %v1583
        %v1718 = vpop.f32.mrb[0].mxu0
        %v1719 = vadd.f32 %v1526, %v1718
        %v1720 = vpop.f32.mrb[0].mxu0
        %1721 = vmatprep.mubr.f32.mxu0 0.0
        %1722 = vmatmul.mubr.f32.gmra.mrb[0].mxu0 %v1586
        %v1723 = vpop.f32.mrb[0].mxu0
        %v1724 = vadd.f32 %v1531, %v1723
        %v1725 = vpop.f32.mrb[0].mxu0
        %1726 = vmatprep.mubr.f32.mxu0 0.0
        %1727 = vmatmul.mubr.f32.gmra.mrb[0].mxu0 %v1589
        %v1728 = vpop.f32.mrb[0].mxu0
        %v1729 = vadd.f32 %v1536, %v1728
        %v1730 = vpop.f32.mrb[0].mxu0
        %1731 = vmatprep.mubr.f32.mxu0 0.0
        %1732 = vmatmul.mubr.f32.gmra.mrb[0].mxu0 %v1592
        %v1733 = vpop.f32.mrb[0].mxu0
        %v1734 = vadd.f32 %v1541, %v1733
        %v1735 = vpop.f32.mrb[0].mxu0
        %1736 = vmatprep.mubr.f32.mxu0 0.0
        %1737 = vmatmul.mubr.f32.gmra.mrb[0].mxu0 %v1595
        %v1738 = vpop.f32.mrb[0].mxu0
        %v1739 = vadd.f32 %v1546, %v1738
        %v1740 = vpop.f32.mrb[0].mxu0
        %1741 = vdwg.mxu0
        %v1743 = vsel %vm1355, %v1145, 0
        %v1746 = vsel %vm1355, %v1146, 0
        %v1749 = vsel %vm1355, %v1147, 0
        %v1752 = vsel %vm1355, %v1148, 0
        %v1755 = vsel %vm1355, %v1149, 0
        %v1758 = vsel %vm1355, %v1150, 0
        %v1761 = vsel %vm1355, %v1151, 0
        %v1764 = vsel %vm1355, %v1152, 0
        %v1767 = vsel %vm1355, %v1153, 0
        %v1770 = vsel %vm1355, %v1154, 0
        %v1773 = vsel %vm1355, %v1155, 0
        %v1776 = vsel %vm1355, %v1156, 0
        %v1779 = vsel %vm1355, %v1157, 0
        %v1782 = vsel %vm1355, %v1158, 0
        %v1785 = vsel %vm1355, %v1159, 0
        %v1788 = vsel %vm1355, %v1160, 0
        %1790 = vmatprep.subr.mxu0 0.0
        %1791 = vmatpush1.msra.mxu0 %v1336
        %1792 = vmatprep.subr.mxu0 0.0
        %1793 = vmatpush1.msra.mxu0 %v1341
        %1794 = vmatprep.subr.mxu0 0.0
        %1795 = vmatpush1.msra.mxu0 %v1346
        %1796 = vmatprep.subr.mxu0 0.0
        %1797 = vmatpush1.msra.mxu0 %v1351
        %1798 = vmatprep.subr.mxu0 0.0
        %1799 = vmatpush1.msra.mxu0 0.0
        %1800 = vmatprep.subr.mxu0 0.0
        %1801 = vmatpush1.msra.mxu0 0.0
        %1802 = vmatprep.subr.mxu0 0.0
        %1803 = vmatpush1.msra.mxu0 0.0
        %1804 = vmatprep.subr.mxu0 0.0
        %1805 = vmatpush1.msra.mxu0 0.0
        %1806 = vmatprep.subr.mxu0 0.0
        %1807 = vmatpush1.msra.mxu0 0.0
        %1808 = vmatprep.subr.mxu0 0.0
        %1809 = vmatpush1.msra.mxu0 0.0
        %1810 = vmatprep.subr.mxu0 0.0
        %1811 = vmatpush1.msra.mxu0 0.0
        %1812 = vmatprep.subr.mxu0 0.0
        %1813 = vmatpush1.msra.mxu0 0.0
        %1814 = vmatprep.subr.mxu0 0.0
        %1815 = vmatpush1.msra.mxu0 0.0
        %1816 = vmatprep.subr.mxu0 0.0
        %1817 = vmatpush1.msra.mxu0 0.0
        %1818 = vmatprep.subr.mxu0 0.0
        %1819 = vmatpush1.msra.mxu0 0.0
        %1820 = vmatprep.subr.mxu0 0.0
        %1821 = vmatpush1.msra.mxu0 0.0
        %1822 = vmatprep.subr.mxu0 0.0
        %1823 = vmatpush1.msra.mxu0 0.0
        %1824 = vmatprep.subr.mxu0 0.0
        %1825 = vmatpush1.msra.mxu0 0.0
        %1826 = vmatprep.subr.mxu0 0.0
        %1827 = vmatpush1.msra.mxu0 0.0
        %1828 = vmatprep.subr.mxu0 0.0
        %1829 = vmatpush1.msra.mxu0 0.0
        %1830 = vmatprep.subr.mxu0 0.0
        %1831 = vmatpush1.msra.mxu0 0.0
        %1832 = vmatprep.subr.mxu0 0.0
        %1833 = vmatpush1.msra.mxu0 0.0
        %1834 = vmatprep.subr.mxu0 0.0
        %1835 = vmatpush1.msra.mxu0 0.0
        %1836 = vmatprep.subr.mxu0 0.0
        %1837 = vmatpush1.msra.mxu0 0.0
        %1838 = vmatprep.subr.mxu0 0.0
        %1839 = vmatpush1.msra.mxu0 0.0
        %1840 = vmatprep.subr.mxu0 0.0
        %1841 = vmatpush1.msra.mxu0 0.0
        %1842 = vmatprep.subr.mxu0 0.0
        %1843 = vmatpush1.msra.mxu0 0.0
        %1844 = vmatprep.subr.mxu0 0.0
        %1845 = vmatpush1.msra.mxu0 0.0
        %1846 = vmatprep.subr.mxu0 0.0
        %1847 = vmatpush1.msra.mxu0 0.0
        %1848 = vmatprep.subr.mxu0 0.0
        %1849 = vmatpush1.msra.mxu0 0.0
        %1850 = vmatprep.subr.mxu0 0.0
        %1851 = vmatpush1.msra.mxu0 0.0
        %1852 = vmatprep.subr.mxu0 0.0
        %1853 = vmatpush1.msra.mxu0 0.0
        %1854 = vmatprep.mubr.f32.mxu0 0.0
        %1855 = vmatmul.mubr.f32.gmra.mrb[0].mxu0 %v1743
        %v1856 = vpop.f32.mrb[0].mxu0
        %v1857 = vadd.f32 0.0, %v1856
        %v1858 = vpop.f32.mrb[0].mxu0
        %1859 = vmatprep.mubr.f32.mxu0 0.0
        %1860 = vmatmul.mubr.f32.gmra.mrb[0].mxu0 %v1746
        %v1861 = vpop.f32.mrb[0].mxu0
        %v1862 = vadd.f32 0.0, %v1861
        %v1863 = vpop.f32.mrb[0].mxu0
        %1864 = vmatprep.mubr.f32.mxu0 0.0
        %1865 = vmatmul.mubr.f32.gmra.mrb[0].mxu0 %v1749
        %v1866 = vpop.f32.mrb[0].mxu0
        %v1867 = vadd.f32 0.0, %v1866
        %v1868 = vpop.f32.mrb[0].mxu0
        %1869 = vmatprep.mubr.f32.mxu0 0.0
        %1870 = vmatmul.mubr.f32.gmra.mrb[0].mxu0 %v1752
        %v1871 = vpop.f32.mrb[0].mxu0
        %v1872 = vadd.f32 0.0, %v1871
        %v1873 = vpop.f32.mrb[0].mxu0
        %1874 = vmatprep.mubr.f32.mxu0 0.0
        %1875 = vmatmul.mubr.f32.gmra.mrb[0].mxu0 %v1755
        %v1876 = vpop.f32.mrb[0].mxu0
        %v1877 = vadd.f32 0.0, %v1876
        %v1878 = vpop.f32.mrb[0].mxu0
        %1879 = vmatprep.mubr.f32.mxu0 0.0
        %1880 = vmatmul.mubr.f32.gmra.mrb[0].mxu0 %v1758
        %v1881 = vpop.f32.mrb[0].mxu0
        %v1882 = vadd.f32 0.0, %v1881
        %v1883 = vpop.f32.mrb[0].mxu0
        %1884 = vmatprep.mubr.f32.mxu0 0.0
        %1885 = vmatmul.mubr.f32.gmra.mrb[0].mxu0 %v1761
        %v1886 = vpop.f32.mrb[0].mxu0
        %v1887 = vadd.f32 0.0, %v1886
        %v1888 = vpop.f32.mrb[0].mxu0
        %1889 = vmatprep.mubr.f32.mxu0 0.0
        %1890 = vmatmul.mubr.f32.gmra.mrb[0].mxu0 %v1764
        %v1891 = vpop.f32.mrb[0].mxu0
        %v1892 = vadd.f32 0.0, %v1891
        %v1893 = vpop.f32.mrb[0].mxu0
        %1894 = vmatprep.mubr.f32.mxu0 0.0
        %1895 = vmatmul.mubr.f32.gmra.mrb[0].mxu0 %v1767
        %v1896 = vpop.f32.mrb[0].mxu0
        %v1897 = vadd.f32 0.0, %v1896
        %v1898 = vpop.f32.mrb[0].mxu0
        %1899 = vmatprep.mubr.f32.mxu0 0.0
        %1900 = vmatmul.mubr.f32.gmra.mrb[0].mxu0 %v1770
        %v1901 = vpop.f32.mrb[0].mxu0
        %v1902 = vadd.f32 0.0, %v1901
        %v1903 = vpop.f32.mrb[0].mxu0
        %1904 = vmatprep.mubr.f32.mxu0 0.0
        %1905 = vmatmul.mubr.f32.gmra.mrb[0].mxu0 %v1773
        %v1906 = vpop.f32.mrb[0].mxu0
        %v1907 = vadd.f32 0.0, %v1906
        %v1908 = vpop.f32.mrb[0].mxu0
        %1909 = vmatprep.mubr.f32.mxu0 0.0
        %1910 = vmatmul.mubr.f32.gmra.mrb[0].mxu0 %v1776
        %v1911 = vpop.f32.mrb[0].mxu0
        %v1912 = vadd.f32 0.0, %v1911
        %v1913 = vpop.f32.mrb[0].mxu0
        %1914 = vmatprep.mubr.f32.mxu0 0.0
        %1915 = vmatmul.mubr.f32.gmra.mrb[0].mxu0 %v1779
        %v1916 = vpop.f32.mrb[0].mxu0
        %v1917 = vadd.f32 0.0, %v1916
        %v1918 = vpop.f32.mrb[0].mxu0
        %1919 = vmatprep.mubr.f32.mxu0 0.0
        %1920 = vmatmul.mubr.f32.gmra.mrb[0].mxu0 %v1782
        %v1921 = vpop.f32.mrb[0].mxu0
        %v1922 = vadd.f32 0.0, %v1921
        %v1923 = vpop.f32.mrb[0].mxu0
        %1924 = vmatprep.mubr.f32.mxu0 0.0
        %1925 = vmatmul.mubr.f32.gmra.mrb[0].mxu0 %v1785
        %v1926 = vpop.f32.mrb[0].mxu0
        %v1927 = vadd.f32 0.0, %v1926
        %v1928 = vpop.f32.mrb[0].mxu0
        %1929 = vmatprep.mubr.f32.mxu0 0.0
        %1930 = vmatmul.mubr.f32.gmra.mrb[0].mxu0 %v1788
        %v1931 = vpop.f32.mrb[0].mxu0
        %v1932 = vadd.f32 0.0, %v1931
        %v1933 = vpop.f32.mrb[0].mxu0
        %1934 = vdwg.mxu0
        %v1935 = vadd.f32 %v1664, %v1857
        %v1936 = vadd.f32 %v1669, %v1862
        %v1937 = vadd.f32 %v1674, %v1867
        %v1938 = vadd.f32 %v1679, %v1872
        %v1939 = vadd.f32 %v1684, %v1877
        %v1940 = vadd.f32 %v1689, %v1882
        %v1941 = vadd.f32 %v1694, %v1887
        %v1942 = vadd.f32 %v1699, %v1892
        %v1943 = vadd.f32 %v1704, %v1897
        %v1944 = vadd.f32 %v1709, %v1902
        %v1945 = vadd.f32 %v1714, %v1907
        %v1946 = vadd.f32 %v1719, %v1912
        %v1947 = vadd.f32 %v1724, %v1917
        %v1948 = vadd.f32 %v1729, %v1922
        %v1949 = vadd.f32 %v1734, %v1927
        %v1950 = vadd.f32 %v1739, %v1932
        %v1951 = vld [vmem:[#allocation17] sm:$0x1]
        %v1953 = vlaneseq
        %v1954 = vshrl.u32 %v1953, 7
        %v1955 = vsub.s32 0, %v1954
        %v1956 = vrot.slane %v1951, %v1955
        %v1958 = vadd.f32 %v1935, %v1956
        %v1959 = vadd.f32 %v1936, %v1956
        %v1960 = vadd.f32 %v1937, %v1956
        %v1961 = vadd.f32 %v1938, %v1956
        %v1962 = vadd.f32 %v1939, %v1956
        %v1963 = vadd.f32 %v1940, %v1956
        %v1964 = vadd.f32 %v1941, %v1956
        %v1965 = vadd.f32 %v1942, %v1956
        %v1966 = vadd.f32 %v1943, %v1956
        %v1967 = vadd.f32 %v1944, %v1956
        %v1968 = vadd.f32 %v1945, %v1956
        %v1969 = vadd.f32 %v1946, %v1956
        %v1970 = vadd.f32 %v1947, %v1956
        %v1971 = vadd.f32 %v1948, %v1956
        %v1972 = vadd.f32 %v1949, %v1956
        %v1973 = vadd.f32 %v1950, %v1956
        %v1974 = vmax.f32 %v1958, 0.0
        %v1975 = vmax.f32 %v1959, 0.0
        %v1976 = vmax.f32 %v1960, 0.0
        %v1977 = vmax.f32 %v1961, 0.0
        %v1978 = vmax.f32 %v1962, 0.0
        %v1979 = vmax.f32 %v1963, 0.0
        %v1980 = vmax.f32 %v1964, 0.0
        %v1981 = vmax.f32 %v1965, 0.0
        %v1982 = vmax.f32 %v1966, 0.0
        %v1983 = vmax.f32 %v1967, 0.0
        %v1984 = vmax.f32 %v1968, 0.0
        %v1985 = vmax.f32 %v1969, 0.0
        %v1986 = vmax.f32 %v1970, 0.0
        %v1987 = vmax.f32 %v1971, 0.0
        %v1988 = vmax.f32 %v1972, 0.0
        %v1989 = vmax.f32 %v1973, 0.0
        %v1990 = vld [vmem:[#allocation18] sm:$0xff]
        %v1991 = vld [vmem:[#allocation18 + $0x8] sm:$0xff]
        %v1992 = vld [vmem:[#allocation18 + $0x10] sm:$0xff]
        %v1993 = vld [vmem:[#allocation18 + $0x18] sm:$0xff]
        %v1994 = vld [vmem:[#allocation18 + $0x20] sm:$0xff]
        %v1995 = vld [vmem:[#allocation18 + $0x28] sm:$0xff]
        %v1996 = vld [vmem:[#allocation18 + $0x30] sm:$0xff]
        %v1997 = vld [vmem:[#allocation18 + $0x38] sm:$0xff]
        %v1998 = vld [vmem:[#allocation18 + $0x40] sm:$0xff]
        %v1999 = vld [vmem:[#allocation18 + $0x48] sm:$0xff]
        %v2000 = vld [vmem:[#allocation18 + $0x50] sm:$0xff]
        %v2001 = vld [vmem:[#allocation18 + $0x58] sm:$0xff]
        %v2002 = vld [vmem:[#allocation18 + $0x60] sm:$0xff]
        %v2003 = vld [vmem:[#allocation18 + $0x68] sm:$0xff]
        %v2004 = vld [vmem:[#allocation18 + $0x70] sm:$0xff]
        %v2005 = vld [vmem:[#allocation18 + $0x78] sm:$0xff]
        %v2006 = vld [vmem:[#allocation20] sm:$0x1]
        %v2008 = vlaneseq
        %v2009 = vshrl.u32 %v2008, 7
        %v2010 = vsub.s32 0, %v2009
        %v2011 = vrot.slane %v2006, %v2010
        %2013 = vmatprep.subr.mxu0 0.0
        %2014 = vmatpush1.msra.mxu0 %v1990
        %2015 = vmatprep.subr.mxu0 0.0
        %2016 = vmatpush1.msra.mxu0 %v1991
        %2017 = vmatprep.subr.mxu0 0.0
        %2018 = vmatpush1.msra.mxu0 %v1992
        %2019 = vmatprep.subr.mxu0 0.0
        %2020 = vmatpush1.msra.mxu0 %v1993
        %2021 = vmatprep.subr.mxu0 0.0
        %2022 = vmatpush1.msra.mxu0 %v1994
        %2023 = vmatprep.subr.mxu0 0.0
        %2024 = vmatpush1.msra.mxu0 %v1995
        %2025 = vmatprep.subr.mxu0 0.0
        %2026 = vmatpush1.msra.mxu0 %v1996
        %2027 = vmatprep.subr.mxu0 0.0
        %2028 = vmatpush1.msra.mxu0 %v1997
        %2029 = vmatprep.subr.mxu0 0.0
        %2030 = vmatpush1.msra.mxu0 %v1998
        %2031 = vmatprep.subr.mxu0 0.0
        %2032 = vmatpush1.msra.mxu0 %v1999
        %2033 = vmatprep.subr.mxu0 0.0
        %2034 = vmatpush1.msra.mxu0 %v2000
        %2035 = vmatprep.subr.mxu0 0.0
        %2036 = vmatpush1.msra.mxu0 %v2001
        %2037 = vmatprep.subr.mxu0 0.0
        %2038 = vmatpush1.msra.mxu0 %v2002
        %2039 = vmatprep.subr.mxu0 0.0
        %2040 = vmatpush1.msra.mxu0 %v2003
        %2041 = vmatprep.subr.mxu0 0.0
        %2042 = vmatpush1.msra.mxu0 %v2004
        %2043 = vmatprep.subr.mxu0 0.0
        %2044 = vmatpush1.msra.mxu0 %v2005
        %2045 = vmatprep.subr.mxu0 0.0
        %2046 = vmatpush1.msra.mxu0 0.0
        %2047 = vmatprep.subr.mxu0 0.0
        %2048 = vmatpush1.msra.mxu0 0.0
        %2049 = vmatprep.subr.mxu0 0.0
        %2050 = vmatpush1.msra.mxu0 0.0
        %2051 = vmatprep.subr.mxu0 0.0
        %2052 = vmatpush1.msra.mxu0 0.0
        %2053 = vmatprep.subr.mxu0 0.0
        %2054 = vmatpush1.msra.mxu0 0.0
        %2055 = vmatprep.subr.mxu0 0.0
        %2056 = vmatpush1.msra.mxu0 0.0
        %2057 = vmatprep.subr.mxu0 0.0
        %2058 = vmatpush1.msra.mxu0 0.0
        %2059 = vmatprep.subr.mxu0 0.0
        %2060 = vmatpush1.msra.mxu0 0.0
        %2061 = vmatprep.subr.mxu0 0.0
        %2062 = vmatpush1.msra.mxu0 0.0
        %2063 = vmatprep.subr.mxu0 0.0
        %2064 = vmatpush1.msra.mxu0 0.0
        %2065 = vmatprep.subr.mxu0 0.0
        %2066 = vmatpush1.msra.mxu0 0.0
        %2067 = vmatprep.subr.mxu0 0.0
        %2068 = vmatpush1.msra.mxu0 0.0
        %2069 = vmatprep.subr.mxu0 0.0
        %2070 = vmatpush1.msra.mxu0 0.0
        %2071 = vmatprep.subr.mxu0 0.0
        %2072 = vmatpush1.msra.mxu0 0.0
        %2073 = vmatprep.subr.mxu0 0.0
        %2074 = vmatpush1.msra.mxu0 0.0
        %2075 = vmatprep.subr.mxu0 0.0
        %2076 = vmatpush1.msra.mxu0 0.0
        %2077 = vmatprep.mubr.f32.mxu0 0.0
        %2078 = vmatmul.mubr.f32.gmra.mrb[0].mxu0 %v1974
        %v2079 = vpop.f32.mrb[0].mxu0
        %v2080 = vadd.f32 %v2011, %v2079
        %v2081 = vpop.f32.mrb[0].mxu0
        %2082 = vmatprep.mubr.f32.mxu0 0.0
        %2083 = vmatmul.mubr.f32.gmra.mrb[0].mxu0 %v1975
        %v2084 = vpop.f32.mrb[0].mxu0
        %v2085 = vadd.f32 %v2011, %v2084
        %v2086 = vpop.f32.mrb[0].mxu0
        %2087 = vmatprep.mubr.f32.mxu0 0.0
        %2088 = vmatmul.mubr.f32.gmra.mrb[0].mxu0 %v1976
        %v2089 = vpop.f32.mrb[0].mxu0
        %v2090 = vadd.f32 %v2011, %v2089
        %v2091 = vpop.f32.mrb[0].mxu0
        %2092 = vmatprep.mubr.f32.mxu0 0.0
        %2093 = vmatmul.mubr.f32.gmra.mrb[0].mxu0 %v1977
        %v2094 = vpop.f32.mrb[0].mxu0
        %v2095 = vadd.f32 %v2011, %v2094
        %v2096 = vpop.f32.mrb[0].mxu0
        %2097 = vmatprep.mubr.f32.mxu0 0.0
        %2098 = vmatmul.mubr.f32.gmra.mrb[0].mxu0 %v1978
        %v2099 = vpop.f32.mrb[0].mxu0
        %v2100 = vadd.f32 %v2011, %v2099
        %v2101 = vpop.f32.mrb[0].mxu0
        %2102 = vmatprep.mubr.f32.mxu0 0.0
        %2103 = vmatmul.mubr.f32.gmra.mrb[0].mxu0 %v1979
        %v2104 = vpop.f32.mrb[0].mxu0
        %v2105 = vadd.f32 %v2011, %v2104
        %v2106 = vpop.f32.mrb[0].mxu0
        %2107 = vmatprep.mubr.f32.mxu0 0.0
        %2108 = vmatmul.mubr.f32.gmra.mrb[0].mxu0 %v1980
        %v2109 = vpop.f32.mrb[0].mxu0
        %v2110 = vadd.f32 %v2011, %v2109
        %v2111 = vpop.f32.mrb[0].mxu0
        %2112 = vmatprep.mubr.f32.mxu0 0.0
        %2113 = vmatmul.mubr.f32.gmra.mrb[0].mxu0 %v1981
        %v2114 = vpop.f32.mrb[0].mxu0
        %v2115 = vadd.f32 %v2011, %v2114
        %v2116 = vpop.f32.mrb[0].mxu0
        %2117 = vmatprep.mubr.f32.mxu0 0.0
        %2118 = vmatmul.mubr.f32.gmra.mrb[0].mxu0 %v1982
        %v2119 = vpop.f32.mrb[0].mxu0
        %v2120 = vadd.f32 %v2011, %v2119
        %v2121 = vpop.f32.mrb[0].mxu0
        %2122 = vmatprep.mubr.f32.mxu0 0.0
        %2123 = vmatmul.mubr.f32.gmra.mrb[0].mxu0 %v1983
        %v2124 = vpop.f32.mrb[0].mxu0
        %v2125 = vadd.f32 %v2011, %v2124
        %v2126 = vpop.f32.mrb[0].mxu0
        %2127 = vmatprep.mubr.f32.mxu0 0.0
        %2128 = vmatmul.mubr.f32.gmra.mrb[0].mxu0 %v1984
        %v2129 = vpop.f32.mrb[0].mxu0
        %v2130 = vadd.f32 %v2011, %v2129
        %v2131 = vpop.f32.mrb[0].mxu0
        %2132 = vmatprep.mubr.f32.mxu0 0.0
        %2133 = vmatmul.mubr.f32.gmra.mrb[0].mxu0 %v1985
        %v2134 = vpop.f32.mrb[0].mxu0
        %v2135 = vadd.f32 %v2011, %v2134
        %v2136 = vpop.f32.mrb[0].mxu0
        %2137 = vmatprep.mubr.f32.mxu0 0.0
        %2138 = vmatmul.mubr.f32.gmra.mrb[0].mxu0 %v1986
        %v2139 = vpop.f32.mrb[0].mxu0
        %v2140 = vadd.f32 %v2011, %v2139
        %v2141 = vpop.f32.mrb[0].mxu0
        %2142 = vmatprep.mubr.f32.mxu0 0.0
        %2143 = vmatmul.mubr.f32.gmra.mrb[0].mxu0 %v1987
        %v2144 = vpop.f32.mrb[0].mxu0
        %v2145 = vadd.f32 %v2011, %v2144
        %v2146 = vpop.f32.mrb[0].mxu0
        %2147 = vmatprep.mubr.f32.mxu0 0.0
        %2148 = vmatmul.mubr.f32.gmra.mrb[0].mxu0 %v1988
        %v2149 = vpop.f32.mrb[0].mxu0
        %v2150 = vadd.f32 %v2011, %v2149
        %v2151 = vpop.f32.mrb[0].mxu0
        %2152 = vmatprep.mubr.f32.mxu0 0.0
        %2153 = vmatmul.mubr.f32.gmra.mrb[0].mxu0 %v1989
        %v2154 = vpop.f32.mrb[0].mxu0
        %v2155 = vadd.f32 %v2011, %v2154
        %v2156 = vpop.f32.mrb[0].mxu0
        %2157 = vdwg.mxu0
        %2158 = vst [vmem:[%s1060] sm:$0xff] %v2080
        %2159 = vst [vmem:[%s1060 + $0x8] sm:$0xff] %v2085
        %2160 = vst [vmem:[%s1060 + $0x10] sm:$0xff] %v2090
        %2161 = vst [vmem:[%s1060 + $0x18] sm:$0xff] %v2095
        %2162 = vst [vmem:[%s1060 + $0x20] sm:$0xff] %v2100
        %2163 = vst [vmem:[%s1060 + $0x28] sm:$0xff] %v2105
        %2164 = vst [vmem:[%s1060 + $0x30] sm:$0xff] %v2110
        %2165 = vst [vmem:[%s1060 + $0x38] sm:$0xff] %v2115
        %2166 = vst [vmem:[%s1060 + $0x40] sm:$0xff] %v2120
        %2167 = vst [vmem:[%s1060 + $0x48] sm:$0xff] %v2125
        %2168 = vst [vmem:[%s1060 + $0x50] sm:$0xff] %v2130
        %2169 = vst [vmem:[%s1060 + $0x58] sm:$0xff] %v2135
        %2170 = vst [vmem:[%s1060 + $0x60] sm:$0xff] %v2140
        %2171 = vst [vmem:[%s1060 + $0x68] sm:$0xff] %v2145
        %2172 = vst [vmem:[%s1060 + $0x70] sm:$0xff] %v2150
        %2173 = vst [vmem:[%s1060 + $0x78] sm:$0xff] %v2155
        %v2174 = vld [vmem:[#allocation2] sm:$0xff]
        %v2175 = vld [vmem:[#allocation2 + $0x8] sm:$0xff]
        %v2176 = vld [vmem:[#allocation2 + $0x10] sm:$0xff]
        %v2177 = vld [vmem:[#allocation2 + $0x18] sm:$0xff]
        %2178 = vmatprep.subr.mxu0 0.0
        %2179 = vmatpush1.msra.mxu0 %v2080
        %2180 = vmatprep.subr.mxu0 0.0
        %2181 = vmatpush1.msra.mxu0 %v2085
        %2182 = vmatprep.subr.mxu0 0.0
        %2183 = vmatpush1.msra.mxu0 %v2090
        %2184 = vmatprep.subr.mxu0 0.0
        %2185 = vmatpush1.msra.mxu0 %v2095
        %2186 = vmatprep.subr.mxu0 0.0
        %2187 = vmatpush1.msra.mxu0 %v2100
        %2188 = vmatprep.subr.mxu0 0.0
        %2189 = vmatpush1.msra.mxu0 %v2105
        %2190 = vmatprep.subr.mxu0 0.0
        %2191 = vmatpush1.msra.mxu0 %v2110
        %2192 = vmatprep.subr.mxu0 0.0
        %2193 = vmatpush1.msra.mxu0 %v2115
        %2194 = vmatprep.subr.mxu0 0.0
        %2195 = vmatpush1.msra.mxu0 %v2120
        %2196 = vmatprep.subr.mxu0 0.0
        %2197 = vmatpush1.msra.mxu0 %v2125
        %2198 = vmatprep.subr.mxu0 0.0
        %2199 = vmatpush1.msra.mxu0 %v2130
        %2200 = vmatprep.subr.mxu0 0.0
        %2201 = vmatpush1.msra.mxu0 %v2135
        %2202 = vmatprep.subr.mxu0 0.0
        %2203 = vmatpush1.msra.mxu0 %v2140
        %2204 = vmatprep.subr.mxu0 0.0
        %2205 = vmatpush1.msra.mxu0 %v2145
        %2206 = vmatprep.subr.mxu0 0.0
        %2207 = vmatpush1.msra.mxu0 %v2150
        %2208 = vmatprep.subr.mxu0 0.0
        %2209 = vmatpush1.msra.mxu0 %v2155
        %2210 = vmatprep.subr.mxu0 0.0
        %2211 = vmatpush1.msra.mxu0 0.0
        %2212 = vmatprep.subr.mxu0 0.0
        %2213 = vmatpush1.msra.mxu0 0.0
        %2214 = vmatprep.subr.mxu0 0.0
        %2215 = vmatpush1.msra.mxu0 0.0
        %2216 = vmatprep.subr.mxu0 0.0
        %2217 = vmatpush1.msra.mxu0 0.0
        %2218 = vmatprep.subr.mxu0 0.0
        %2219 = vmatpush1.msra.mxu0 0.0
        %2220 = vmatprep.subr.mxu0 0.0
        %2221 = vmatpush1.msra.mxu0 0.0
        %2222 = vmatprep.subr.mxu0 0.0
        %2223 = vmatpush1.msra.mxu0 0.0
        %2224 = vmatprep.subr.mxu0 0.0
        %2225 = vmatpush1.msra.mxu0 0.0
        %2226 = vmatprep.subr.mxu0 0.0
        %2227 = vmatpush1.msra.mxu0 0.0
        %2228 = vmatprep.subr.mxu0 0.0
        %2229 = vmatpush1.msra.mxu0 0.0
        %2230 = vmatprep.subr.mxu0 0.0
        %2231 = vmatpush1.msra.mxu0 0.0
        %2232 = vmatprep.subr.mxu0 0.0
        %2233 = vmatpush1.msra.mxu0 0.0
        %2234 = vmatprep.subr.mxu0 0.0
        %2235 = vmatpush1.msra.mxu0 0.0
        %2236 = vmatprep.subr.mxu0 0.0
        %2237 = vmatpush1.msra.mxu0 0.0
        %2238 = vmatprep.subr.mxu0 0.0
        %2239 = vmatpush1.msra.mxu0 0.0
        %2240 = vmatprep.subr.mxu0 0.0
        %2241 = vmatpush1.msra.mxu0 0.0
        %2242 = vmatprep.mubr.f32.mxu0 0.0
        %2243 = vmatmul.mubr.f32.gmra.mrb[0].mxu0 %v1165
        %v2244 = vpop.f32.mrb[0].mxu0
        %v2245 = vadd.f32 0.0, %v2244
        %v2246 = vpop.f32.mrb[0].mxu0
        %2247 = vmatprep.mubr.f32.mxu0 0.0
        %2248 = vmatmul.mubr.f32.gmra.mrb[0].mxu0 %v1166
        %v2249 = vpop.f32.mrb[0].mxu0
        %v2250 = vadd.f32 0.0, %v2249
        %v2251 = vpop.f32.mrb[0].mxu0
        %2252 = vmatprep.mubr.f32.mxu0 0.0
        %2253 = vmatmul.mubr.f32.gmra.mrb[0].mxu0 %v1167
        %v2254 = vpop.f32.mrb[0].mxu0
        %v2255 = vadd.f32 0.0, %v2254
        %v2256 = vpop.f32.mrb[0].mxu0
        %2257 = vmatprep.mubr.f32.mxu0 0.0
        %2258 = vmatmul.mubr.f32.gmra.mrb[0].mxu0 %v1168
        %v2259 = vpop.f32.mrb[0].mxu0
        %v2260 = vadd.f32 0.0, %v2259
        %v2261 = vpop.f32.mrb[0].mxu0
        %2262 = vdwg.mxu0
        %v2263 = vadd.f32 %v2174, %v2245
        %v2264 = vadd.f32 %v2175, %v2250
        %v2265 = vadd.f32 %v2176, %v2255
        %v2266 = vadd.f32 %v2177, %v2260
        %2267 = vst [vmem:[#allocation2] sm:$0xff] %v2263
        %2268 = vst [vmem:[#allocation2 + $0x8] sm:$0xff] %v2264
        %2269 = vst [vmem:[#allocation2 + $0x10] sm:$0xff] %v2265
        %2270 = vst [vmem:[#allocation2 + $0x18] sm:$0xff] %v2266
        %p2271 = scmp.eq.s32.totalorder %s54, 1
        // Predicated region
        $region193: #{tpu_custom_call.1} parent=103 // pred_check
          %p2272 = pneg %p2271
        $region194: #{tpu_custom_call.1} parent=103 // pred_check_branch
          %2274 = sbr.rel (%p2272) target = $region196
        $region195: #{tpu_custom_call.1} parent=103 // pred_region
          %v2275 = vld [vmem:[#allocation2] sm:$0xff]
          %v2276 = vld [vmem:[#allocation2 + $0x8] sm:$0xff]
          %v2277 = vld [vmem:[#allocation2 + $0x10] sm:$0xff]
          %v2278 = vld [vmem:[#allocation2 + $0x18] sm:$0xff]
          %v2279 = vld [vmem:[#allocation21] sm:$0xff]
          %v2280 = vld [vmem:[#allocation21 + $0x8] sm:$0xff]
          %v2281 = vld [vmem:[#allocation21 + $0x10] sm:$0xff]
          %v2282 = vld [vmem:[#allocation21 + $0x18] sm:$0xff]
          %v2283 = vld [vmem:[#allocation21 + $0x20] sm:$0xff]
          %v2284 = vld [vmem:[#allocation21 + $0x28] sm:$0xff]
          %v2285 = vld [vmem:[#allocation21 + $0x30] sm:$0xff]
          %v2286 = vld [vmem:[#allocation21 + $0x38] sm:$0xff]
          %v2287 = vld [vmem:[#allocation21 + $0x40] sm:$0xff]
          %v2288 = vld [vmem:[#allocation21 + $0x48] sm:$0xff]
          %v2289 = vld [vmem:[#allocation21 + $0x50] sm:$0xff]
          %v2290 = vld [vmem:[#allocation21 + $0x58] sm:$0xff]
          %v2291 = vld [vmem:[#allocation21 + $0x60] sm:$0xff]
          %v2292 = vld [vmem:[#allocation21 + $0x68] sm:$0xff]
          %v2293 = vld [vmem:[#allocation21 + $0x70] sm:$0xff]
          %v2294 = vld [vmem:[#allocation21 + $0x78] sm:$0xff]
          %v2295 = vld [vmem:[#allocation23] sm:$0xff]
          %2296 = vmatprep.subr.mxu0 0.0
          %2297 = vmatpush1.msra.mxu0 %v2295
          %2298 = vmatprep.subr.mxu0 0.0
          %2299 = vmatpush1.msra.mxu0 0.0
          %2300 = vmatprep.subr.mxu0 0.0
          %2301 = vmatpush1.msra.mxu0 0.0
          %2302 = vmatprep.subr.mxu0 0.0
          %2303 = vmatpush1.msra.mxu0 0.0
          %2304 = vmatprep.subr.mxu0 0.0
          %2305 = vmatpush1.msra.mxu0 0.0
          %2306 = vmatprep.subr.mxu0 0.0
          %2307 = vmatpush1.msra.mxu0 0.0
          %2308 = vmatprep.subr.mxu0 0.0
          %2309 = vmatpush1.msra.mxu0 0.0
          %2310 = vmatprep.subr.mxu0 0.0
          %2311 = vmatpush1.msra.mxu0 0.0
          %2312 = vmatprep.subr.mxu0 0.0
          %2313 = vmatpush1.msra.mxu0 0.0
          %2314 = vmatprep.subr.mxu0 0.0
          %2315 = vmatpush1.msra.mxu0 0.0
          %2316 = vmatprep.subr.mxu0 0.0
          %2317 = vmatpush1.msra.mxu0 0.0
          %2318 = vmatprep.subr.mxu0 0.0
          %2319 = vmatpush1.msra.mxu0 0.0
          %2320 = vmatprep.subr.mxu0 0.0
          %2321 = vmatpush1.msra.mxu0 0.0
          %2322 = vmatprep.subr.mxu0 0.0
          %2323 = vmatpush1.msra.mxu0 0.0
          %2324 = vmatprep.subr.mxu0 0.0
          %2325 = vmatpush1.msra.mxu0 0.0
          %2326 = vmatprep.subr.mxu0 0.0
          %2327 = vmatpush1.msra.mxu0 0.0
          %2328 = vmatprep.subr.mxu0 0.0
          %2329 = vmatpush1.msra.mxu0 0.0
          %2330 = vmatprep.subr.mxu0 0.0
          %2331 = vmatpush1.msra.mxu0 0.0
          %2332 = vmatprep.subr.mxu0 0.0
          %2333 = vmatpush1.msra.mxu0 0.0
          %2334 = vmatprep.subr.mxu0 0.0
          %2335 = vmatpush1.msra.mxu0 0.0
          %2336 = vmatprep.subr.mxu0 0.0
          %2337 = vmatpush1.msra.mxu0 0.0
          %2338 = vmatprep.subr.mxu0 0.0
          %2339 = vmatpush1.msra.mxu0 0.0
          %2340 = vmatprep.subr.mxu0 0.0
          %2341 = vmatpush1.msra.mxu0 0.0
          %2342 = vmatprep.subr.mxu0 0.0
          %2343 = vmatpush1.msra.mxu0 0.0
          %2344 = vmatprep.subr.mxu0 0.0
          %2345 = vmatpush1.msra.mxu0 0.0
          %2346 = vmatprep.subr.mxu0 0.0
          %2347 = vmatpush1.msra.mxu0 0.0
          %2348 = vmatprep.subr.mxu0 0.0
          %2349 = vmatpush1.msra.mxu0 0.0
          %2350 = vmatprep.subr.mxu0 0.0
          %2351 = vmatpush1.msra.mxu0 0.0
          %2352 = vmatprep.subr.mxu0 0.0
          %2353 = vmatpush1.msra.mxu0 0.0
          %2354 = vmatprep.subr.mxu0 0.0
          %2355 = vmatpush1.msra.mxu0 0.0
          %2356 = vmatprep.subr.mxu0 0.0
          %2357 = vmatpush1.msra.mxu0 0.0
          %2358 = vmatprep.subr.mxu0 0.0
          %2359 = vmatpush1.msra.mxu0 0.0
          %2360 = vmatprep.mubr.f32.mxu0 0.0
          %2361 = vmatmul.mubr.f32.gmra.mrb[0].mxu0 %v1172
          %v2362 = vpop.f32.mrb[0].mxu0
          %v2363 = vadd.f32 0.0, %v2362
          %v2364 = vpop.f32.mrb[0].mxu0
          %2365 = vmatprep.mubr.f32.mxu0 0.0
          %2366 = vmatmul.mubr.f32.gmra.mrb[0].mxu0 %v1175
          %v2367 = vpop.f32.mrb[0].mxu0
          %v2368 = vadd.f32 0.0, %v2367
          %v2369 = vpop.f32.mrb[0].mxu0
          %2370 = vmatprep.mubr.f32.mxu0 0.0
          %2371 = vmatmul.mubr.f32.gmra.mrb[0].mxu0 %v1178
          %v2372 = vpop.f32.mrb[0].mxu0
          %v2373 = vadd.f32 0.0, %v2372
          %v2374 = vpop.f32.mrb[0].mxu0
          %2375 = vmatprep.mubr.f32.mxu0 0.0
          %2376 = vmatmul.mubr.f32.gmra.mrb[0].mxu0 %v1181
          %v2377 = vpop.f32.mrb[0].mxu0
          %v2378 = vadd.f32 0.0, %v2377
          %v2379 = vpop.f32.mrb[0].mxu0
          %2380 = vdwg.mxu0
          %2381 = vmatprep.subr.mxu0 0.0
          %2382 = vmatpush1.msra.mxu0 %v2279
          %2383 = vmatprep.subr.mxu0 0.0
          %2384 = vmatpush1.msra.mxu0 %v2280
          %2385 = vmatprep.subr.mxu0 0.0
          %2386 = vmatpush1.msra.mxu0 %v2281
          %2387 = vmatprep.subr.mxu0 0.0
          %2388 = vmatpush1.msra.mxu0 %v2282
          %2389 = vmatprep.subr.mxu0 0.0
          %2390 = vmatpush1.msra.mxu0 %v2283
          %2391 = vmatprep.subr.mxu0 0.0
          %2392 = vmatpush1.msra.mxu0 %v2284
          %2393 = vmatprep.subr.mxu0 0.0
          %2394 = vmatpush1.msra.mxu0 %v2285
          %2395 = vmatprep.subr.mxu0 0.0
          %2396 = vmatpush1.msra.mxu0 %v2286
          %2397 = vmatprep.subr.mxu0 0.0
          %2398 = vmatpush1.msra.mxu0 %v2287
          %2399 = vmatprep.subr.mxu0 0.0
          %2400 = vmatpush1.msra.mxu0 %v2288
          %2401 = vmatprep.subr.mxu0 0.0
          %2402 = vmatpush1.msra.mxu0 %v2289
          %2403 = vmatprep.subr.mxu0 0.0
          %2404 = vmatpush1.msra.mxu0 %v2290
          %2405 = vmatprep.subr.mxu0 0.0
          %2406 = vmatpush1.msra.mxu0 %v2291
          %2407 = vmatprep.subr.mxu0 0.0
          %2408 = vmatpush1.msra.mxu0 %v2292
          %2409 = vmatprep.subr.mxu0 0.0
          %2410 = vmatpush1.msra.mxu0 %v2293
          %2411 = vmatprep.subr.mxu0 0.0
          %2412 = vmatpush1.msra.mxu0 %v2294
          %2413 = vmatprep.subr.mxu0 0.0
          %2414 = vmatpush1.msra.mxu0 0.0
          %2415 = vmatprep.subr.mxu0 0.0
          %2416 = vmatpush1.msra.mxu0 0.0
          %2417 = vmatprep.subr.mxu0 0.0
          %2418 = vmatpush1.msra.mxu0 0.0
          %2419 = vmatprep.subr.mxu0 0.0
          %2420 = vmatpush1.msra.mxu0 0.0
          %2421 = vmatprep.subr.mxu0 0.0
          %2422 = vmatpush1.msra.mxu0 0.0
          %2423 = vmatprep.subr.mxu0 0.0
          %2424 = vmatpush1.msra.mxu0 0.0
          %2425 = vmatprep.subr.mxu0 0.0
          %2426 = vmatpush1.msra.mxu0 0.0
          %2427 = vmatprep.subr.mxu0 0.0
          %2428 = vmatpush1.msra.mxu0 0.0
          %2429 = vmatprep.subr.mxu0 0.0
          %2430 = vmatpush1.msra.mxu0 0.0
          %2431 = vmatprep.subr.mxu0 0.0
          %2432 = vmatpush1.msra.mxu0 0.0
          %2433 = vmatprep.subr.mxu0 0.0
          %2434 = vmatpush1.msra.mxu0 0.0
          %2435 = vmatprep.subr.mxu0 0.0
          %2436 = vmatpush1.msra.mxu0 0.0
          %2437 = vmatprep.subr.mxu0 0.0
          %2438 = vmatpush1.msra.mxu0 0.0
          %2439 = vmatprep.subr.mxu0 0.0
          %2440 = vmatpush1.msra.mxu0 0.0
          %2441 = vmatprep.subr.mxu0 0.0
          %2442 = vmatpush1.msra.mxu0 0.0
          %2443 = vmatprep.subr.mxu0 0.0
          %2444 = vmatpush1.msra.mxu0 0.0
          %2445 = vmatprep.mubr.f32.mxu0 0.0
          %2446 = vmatmul.mubr.f32.gmra.mrb[0].mxu0 %v2275
          %v2447 = vpop.f32.mrb[0].mxu0
          %v2448 = vadd.f32 %v2363, %v2447
          %v2449 = vpop.f32.mrb[0].mxu0
          %2450 = vmatprep.mubr.f32.mxu0 0.0
          %2451 = vmatmul.mubr.f32.gmra.mrb[0].mxu0 %v2276
          %v2452 = vpop.f32.mrb[0].mxu0
          %v2453 = vadd.f32 %v2368, %v2452
          %v2454 = vpop.f32.mrb[0].mxu0
          %2455 = vmatprep.mubr.f32.mxu0 0.0
          %2456 = vmatmul.mubr.f32.gmra.mrb[0].mxu0 %v2277
          %v2457 = vpop.f32.mrb[0].mxu0
          %v2458 = vadd.f32 %v2373, %v2457
          %v2459 = vpop.f32.mrb[0].mxu0
          %2460 = vmatprep.mubr.f32.mxu0 0.0
          %2461 = vmatmul.mubr.f32.gmra.mrb[0].mxu0 %v2278
          %v2462 = vpop.f32.mrb[0].mxu0
          %v2463 = vadd.f32 %v2378, %v2462
          %v2464 = vpop.f32.mrb[0].mxu0
          %2465 = vdwg.mxu0
          %v2466 = vld [vmem:[#allocation24] sm:$0x1]
          %v2468 = vlaneseq
          %v2469 = vshrl.u32 %v2468, 7
          %v2470 = vsub.s32 0, %v2469
          %v2471 = vrot.slane %v2466, %v2470
          %v2473 = vadd.f32 %v2448, %v2471
          %v2474 = vadd.f32 %v2453, %v2471
          %v2475 = vadd.f32 %v2458, %v2471
          %v2476 = vadd.f32 %v2463, %v2471
          %v2477 = vmax.f32 %v2473, 0.0
          %v2478 = vmax.f32 %v2474, 0.0
          %v2479 = vmax.f32 %v2475, 0.0
          %v2480 = vmax.f32 %v2476, 0.0
          %v2481 = vld [vmem:[#allocation26] sm:$0xff]
          %v2482 = vld [vmem:[#allocation26 + $0x8] sm:$0xff]
          %v2483 = vld [vmem:[#allocation26 + $0x10] sm:$0xff]
          %v2484 = vld [vmem:[#allocation26 + $0x18] sm:$0xff]
          %v2485 = vld [vmem:[#allocation26 + $0x20] sm:$0xff]
          %v2486 = vld [vmem:[#allocation26 + $0x28] sm:$0xff]
          %v2487 = vld [vmem:[#allocation26 + $0x30] sm:$0xff]
          %v2488 = vld [vmem:[#allocation26 + $0x38] sm:$0xff]
          %v2489 = vld [vmem:[#allocation26 + $0x40] sm:$0xff]
          %v2490 = vld [vmem:[#allocation26 + $0x48] sm:$0xff]
          %v2491 = vld [vmem:[#allocation26 + $0x50] sm:$0xff]
          %v2492 = vld [vmem:[#allocation26 + $0x58] sm:$0xff]
          %v2493 = vld [vmem:[#allocation26 + $0x60] sm:$0xff]
          %v2494 = vld [vmem:[#allocation26 + $0x68] sm:$0xff]
          %v2495 = vld [vmem:[#allocation26 + $0x70] sm:$0xff]
          %v2496 = vld [vmem:[#allocation26 + $0x78] sm:$0xff]
          %v2497 = vld [vmem:[#allocation27] sm:$0x1]
          %v2499 = vlaneseq
          %v2500 = vshrl.u32 %v2499, 7
          %v2501 = vsub.s32 0, %v2500
          %v2502 = vrot.slane %v2497, %v2501
          %2504 = vmatprep.subr.mxu0 0.0
          %2505 = vmatpush1.msra.mxu0 %v2481
          %2506 = vmatprep.subr.mxu0 0.0
          %2507 = vmatpush1.msra.mxu0 %v2482
          %2508 = vmatprep.subr.mxu0 0.0
          %2509 = vmatpush1.msra.mxu0 %v2483
          %2510 = vmatprep.subr.mxu0 0.0
          %2511 = vmatpush1.msra.mxu0 %v2484
          %2512 = vmatprep.subr.mxu0 0.0
          %2513 = vmatpush1.msra.mxu0 %v2485
          %2514 = vmatprep.subr.mxu0 0.0
          %2515 = vmatpush1.msra.mxu0 %v2486
          %2516 = vmatprep.subr.mxu0 0.0
          %2517 = vmatpush1.msra.mxu0 %v2487
          %2518 = vmatprep.subr.mxu0 0.0
          %2519 = vmatpush1.msra.mxu0 %v2488
          %2520 = vmatprep.subr.mxu0 0.0
          %2521 = vmatpush1.msra.mxu0 %v2489
          %2522 = vmatprep.subr.mxu0 0.0
          %2523 = vmatpush1.msra.mxu0 %v2490
          %2524 = vmatprep.subr.mxu0 0.0
          %2525 = vmatpush1.msra.mxu0 %v2491
          %2526 = vmatprep.subr.mxu0 0.0
          %2527 = vmatpush1.msra.mxu0 %v2492
          %2528 = vmatprep.subr.mxu0 0.0
          %2529 = vmatpush1.msra.mxu0 %v2493
          %2530 = vmatprep.subr.mxu0 0.0
          %2531 = vmatpush1.msra.mxu0 %v2494
          %2532 = vmatprep.subr.mxu0 0.0
          %2533 = vmatpush1.msra.mxu0 %v2495
          %2534 = vmatprep.subr.mxu0 0.0
          %2535 = vmatpush1.msra.mxu0 %v2496
          %2536 = vmatprep.subr.mxu0 0.0
          %2537 = vmatpush1.msra.mxu0 0.0
          %2538 = vmatprep.subr.mxu0 0.0
          %2539 = vmatpush1.msra.mxu0 0.0
          %2540 = vmatprep.subr.mxu0 0.0
          %2541 = vmatpush1.msra.mxu0 0.0
          %2542 = vmatprep.subr.mxu0 0.0
          %2543 = vmatpush1.msra.mxu0 0.0
          %2544 = vmatprep.subr.mxu0 0.0
          %2545 = vmatpush1.msra.mxu0 0.0
          %2546 = vmatprep.subr.mxu0 0.0
          %2547 = vmatpush1.msra.mxu0 0.0
          %2548 = vmatprep.subr.mxu0 0.0
          %2549 = vmatpush1.msra.mxu0 0.0
          %2550 = vmatprep.subr.mxu0 0.0
          %2551 = vmatpush1.msra.mxu0 0.0
          %2552 = vmatprep.subr.mxu0 0.0
          %2553 = vmatpush1.msra.mxu0 0.0
          %2554 = vmatprep.subr.mxu0 0.0
          %2555 = vmatpush1.msra.mxu0 0.0
          %2556 = vmatprep.subr.mxu0 0.0
          %2557 = vmatpush1.msra.mxu0 0.0
          %2558 = vmatprep.subr.mxu0 0.0
          %2559 = vmatpush1.msra.mxu0 0.0
          %2560 = vmatprep.subr.mxu0 0.0
          %2561 = vmatpush1.msra.mxu0 0.0
          %2562 = vmatprep.subr.mxu0 0.0
          %2563 = vmatpush1.msra.mxu0 0.0
          %2564 = vmatprep.subr.mxu0 0.0
          %2565 = vmatpush1.msra.mxu0 0.0
          %2566 = vmatprep.subr.mxu0 0.0
          %2567 = vmatpush1.msra.mxu0 0.0
          %2568 = vmatprep.mubr.f32.mxu0 0.0
          %2569 = vmatmul.mubr.f32.gmra.mrb[0].mxu0 %v2477
          %v2570 = vpop.f32.mrb[0].mxu0
          %v2571 = vadd.f32 %v2502, %v2570
          %v2572 = vpop.f32.mrb[0].mxu0
          %2573 = vmatprep.mubr.f32.mxu0 0.0
          %2574 = vmatmul.mubr.f32.gmra.mrb[0].mxu0 %v2478
          %v2575 = vpop.f32.mrb[0].mxu0
          %v2576 = vadd.f32 %v2502, %v2575
          %v2577 = vpop.f32.mrb[0].mxu0
          %2578 = vmatprep.mubr.f32.mxu0 0.0
          %2579 = vmatmul.mubr.f32.gmra.mrb[0].mxu0 %v2479
          %v2580 = vpop.f32.mrb[0].mxu0
          %v2581 = vadd.f32 %v2502, %v2580
          %v2582 = vpop.f32.mrb[0].mxu0
          %2583 = vmatprep.mubr.f32.mxu0 0.0
          %2584 = vmatmul.mubr.f32.gmra.mrb[0].mxu0 %v2480
          %v2585 = vpop.f32.mrb[0].mxu0
          %v2586 = vadd.f32 %v2502, %v2585
          %v2587 = vpop.f32.mrb[0].mxu0
          %2588 = vdwg.mxu0
          %2589 = vst [vmem:[#allocation37] sm:$0xff] %v2571
          %2590 = vst [vmem:[#allocation37 + $0x8] sm:$0xff] %v2576
          %2591 = vst [vmem:[#allocation37 + $0x10] sm:$0xff] %v2581
          %2592 = vst [vmem:[#allocation37 + $0x18] sm:$0xff] %v2586
          %v2593 = vadd.f32 %v2275, %v2276
          %v2594 = vadd.f32 %v2593, %v2277
          %v2595 = vadd.f32 %v2594, %v2278
          %v2596 = vrot.slane %v2595, 4
          %v2597 = vadd.f32 %v2595, %v2596
          %v2598 = vrot.slane %v2597, 2
          %v2599 = vadd.f32 %v2597, %v2598
          %v2600 = vrot.slane %v2599, 1
          %v2601 = vadd.f32 %v2599, %v2600
          %v2602 = vadd.f32 %v2571, %v2576
          %v2603 = vadd.f32 %v2602, %v2581
          %v2604 = vadd.f32 %v2603, %v2586
          %v2605 = vrot.slane %v2604, 4
          %v2606 = vadd.f32 %v2604, %v2605
          %v2607 = vrot.slane %v2606, 2
          %v2608 = vadd.f32 %v2606, %v2607
          %v2609 = vrot.slane %v2608, 1
          %v2610 = vadd.f32 %v2608, %v2609
          %v2611 = vld [vmem:[#allocation29] sm:$0xff]
          %v2612 = vld [vmem:[#allocation29 + $0x8] sm:$0xff]
          %v2613 = vld [vmem:[#allocation29 + $0x10] sm:$0xff]
          %v2614 = vld [vmem:[#allocation29 + $0x18] sm:$0xff]
          %v2615 = vld [vmem:[#allocation29 + $0x20] sm:$0xff]
          %v2616 = vld [vmem:[#allocation29 + $0x28] sm:$0xff]
          %v2617 = vld [vmem:[#allocation29 + $0x30] sm:$0xff]
          %v2618 = vld [vmem:[#allocation29 + $0x38] sm:$0xff]
          %v2619 = vld [vmem:[#allocation29 + $0x40] sm:$0xff]
          %v2620 = vld [vmem:[#allocation29 + $0x48] sm:$0xff]
          %v2621 = vld [vmem:[#allocation29 + $0x50] sm:$0xff]
          %v2622 = vld [vmem:[#allocation29 + $0x58] sm:$0xff]
          %v2623 = vld [vmem:[#allocation29 + $0x60] sm:$0xff]
          %v2624 = vld [vmem:[#allocation29 + $0x68] sm:$0xff]
          %v2625 = vld [vmem:[#allocation29 + $0x70] sm:$0xff]
          %v2626 = vld [vmem:[#allocation29 + $0x78] sm:$0xff]
          %v2627 = vld [vmem:[#allocation30] sm:$0xff]
          %v2628 = vld [vmem:[#allocation30 + $0x8] sm:$0xff]
          %v2629 = vld [vmem:[#allocation30 + $0x10] sm:$0xff]
          %v2630 = vld [vmem:[#allocation30 + $0x18] sm:$0xff]
          %v2631 = vld [vmem:[#allocation30 + $0x20] sm:$0xff]
          %v2632 = vld [vmem:[#allocation30 + $0x28] sm:$0xff]
          %v2633 = vld [vmem:[#allocation30 + $0x30] sm:$0xff]
          %v2634 = vld [vmem:[#allocation30 + $0x38] sm:$0xff]
          %v2635 = vld [vmem:[#allocation30 + $0x40] sm:$0xff]
          %v2636 = vld [vmem:[#allocation30 + $0x48] sm:$0xff]
          %v2637 = vld [vmem:[#allocation30 + $0x50] sm:$0xff]
          %v2638 = vld [vmem:[#allocation30 + $0x58] sm:$0xff]
          %v2639 = vld [vmem:[#allocation30 + $0x60] sm:$0xff]
          %v2640 = vld [vmem:[#allocation30 + $0x68] sm:$0xff]
          %v2641 = vld [vmem:[#allocation30 + $0x70] sm:$0xff]
          %v2642 = vld [vmem:[#allocation30 + $0x78] sm:$0xff]
          %2643 = vmatprep.subr.mxu0 0.0
          %2644 = vmatpush1.msra.mxu0 %v2627
          %2645 = vmatprep.subr.mxu0 0.0
          %2646 = vmatpush1.msra.mxu0 %v2628
          %2647 = vmatprep.subr.mxu0 0.0
          %2648 = vmatpush1.msra.mxu0 %v2629
          %2649 = vmatprep.subr.mxu0 0.0
          %2650 = vmatpush1.msra.mxu0 %v2630
          %2651 = vmatprep.subr.mxu0 0.0
          %2652 = vmatpush1.msra.mxu0 %v2631
          %2653 = vmatprep.subr.mxu0 0.0
          %2654 = vmatpush1.msra.mxu0 %v2632
          %2655 = vmatprep.subr.mxu0 0.0
          %2656 = vmatpush1.msra.mxu0 %v2633
          %2657 = vmatprep.subr.mxu0 0.0
          %2658 = vmatpush1.msra.mxu0 %v2634
          %2659 = vmatprep.subr.mxu0 0.0
          %2660 = vmatpush1.msra.mxu0 %v2635
          %2661 = vmatprep.subr.mxu0 0.0
          %2662 = vmatpush1.msra.mxu0 %v2636
          %2663 = vmatprep.subr.mxu0 0.0
          %2664 = vmatpush1.msra.mxu0 %v2637
          %2665 = vmatprep.subr.mxu0 0.0
          %2666 = vmatpush1.msra.mxu0 %v2638
          %2667 = vmatprep.subr.mxu0 0.0
          %2668 = vmatpush1.msra.mxu0 %v2639
          %2669 = vmatprep.subr.mxu0 0.0
          %2670 = vmatpush1.msra.mxu0 %v2640
          %2671 = vmatprep.subr.mxu0 0.0
          %2672 = vmatpush1.msra.mxu0 %v2641
          %2673 = vmatprep.subr.mxu0 0.0
          %2674 = vmatpush1.msra.mxu0 %v2642
          %2675 = vmatprep.subr.mxu0 0.0
          %2676 = vmatpush1.msra.mxu0 0.0
          %2677 = vmatprep.subr.mxu0 0.0
          %2678 = vmatpush1.msra.mxu0 0.0
          %2679 = vmatprep.subr.mxu0 0.0
          %2680 = vmatpush1.msra.mxu0 0.0
          %2681 = vmatprep.subr.mxu0 0.0
          %2682 = vmatpush1.msra.mxu0 0.0
          %2683 = vmatprep.subr.mxu0 0.0
          %2684 = vmatpush1.msra.mxu0 0.0
          %2685 = vmatprep.subr.mxu0 0.0
          %2686 = vmatpush1.msra.mxu0 0.0
          %2687 = vmatprep.subr.mxu0 0.0
          %2688 = vmatpush1.msra.mxu0 0.0
          %2689 = vmatprep.subr.mxu0 0.0
          %2690 = vmatpush1.msra.mxu0 0.0
          %2691 = vmatprep.subr.mxu0 0.0
          %2692 = vmatpush1.msra.mxu0 0.0
          %2693 = vmatprep.subr.mxu0 0.0
          %2694 = vmatpush1.msra.mxu0 0.0
          %2695 = vmatprep.subr.mxu0 0.0
          %2696 = vmatpush1.msra.mxu0 0.0
          %2697 = vmatprep.subr.mxu0 0.0
          %2698 = vmatpush1.msra.mxu0 0.0
          %2699 = vmatprep.subr.mxu0 0.0
          %2700 = vmatpush1.msra.mxu0 0.0
          %2701 = vmatprep.subr.mxu0 0.0
          %2702 = vmatpush1.msra.mxu0 0.0
          %2703 = vmatprep.subr.mxu0 0.0
          %2704 = vmatpush1.msra.mxu0 0.0
          %2705 = vmatprep.subr.mxu0 0.0
          %2706 = vmatpush1.msra.mxu0 0.0
          %2707 = vmatprep.mubr.f32.mxu0 0.0
          %2708 = vmatmul.mubr.f32.gmra.mrb[0].mxu0 %v2610
          %v2709 = vpop.f32.mrb[0].mxu0
          %v2710 = vadd.f32 0.0, %v2709
          %v2711 = vpop.f32.mrb[0].mxu0
          %2712 = vdwg.mxu0
          %2713 = vmatprep.subr.mxu0 0.0
          %2714 = vmatpush1.msra.mxu0 %v2611
          %2715 = vmatprep.subr.mxu0 0.0
          %2716 = vmatpush1.msra.mxu0 %v2612
          %2717 = vmatprep.subr.mxu0 0.0
          %2718 = vmatpush1.msra.mxu0 %v2613
          %2719 = vmatprep.subr.mxu0 0.0
          %2720 = vmatpush1.msra.mxu0 %v2614
          %2721 = vmatprep.subr.mxu0 0.0
          %2722 = vmatpush1.msra.mxu0 %v2615
          %2723 = vmatprep.subr.mxu0 0.0
          %2724 = vmatpush1.msra.mxu0 %v2616
          %2725 = vmatprep.subr.mxu0 0.0
          %2726 = vmatpush1.msra.mxu0 %v2617
          %2727 = vmatprep.subr.mxu0 0.0
          %2728 = vmatpush1.msra.mxu0 %v2618
          %2729 = vmatprep.subr.mxu0 0.0
          %2730 = vmatpush1.msra.mxu0 %v2619
          %2731 = vmatprep.subr.mxu0 0.0
          %2732 = vmatpush1.msra.mxu0 %v2620
          %2733 = vmatprep.subr.mxu0 0.0
          %2734 = vmatpush1.msra.mxu0 %v2621
          %2735 = vmatprep.subr.mxu0 0.0
          %2736 = vmatpush1.msra.mxu0 %v2622
          %2737 = vmatprep.subr.mxu0 0.0
          %2738 = vmatpush1.msra.mxu0 %v2623
          %2739 = vmatprep.subr.mxu0 0.0
          %2740 = vmatpush1.msra.mxu0 %v2624
          %2741 = vmatprep.subr.mxu0 0.0
          %2742 = vmatpush1.msra.mxu0 %v2625
          %2743 = vmatprep.subr.mxu0 0.0
          %2744 = vmatpush1.msra.mxu0 %v2626
          %2745 = vmatprep.subr.mxu0 0.0
          %2746 = vmatpush1.msra.mxu0 0.0
          %2747 = vmatprep.subr.mxu0 0.0
          %2748 = vmatpush1.msra.mxu0 0.0
          %2749 = vmatprep.subr.mxu0 0.0
          %2750 = vmatpush1.msra.mxu0 0.0
          %2751 = vmatprep.subr.mxu0 0.0
          %2752 = vmatpush1.msra.mxu0 0.0
          %2753 = vmatprep.subr.mxu0 0.0
          %2754 = vmatpush1.msra.mxu0 0.0
          %2755 = vmatprep.subr.mxu0 0.0
          %2756 = vmatpush1.msra.mxu0 0.0
          %2757 = vmatprep.subr.mxu0 0.0
          %2758 = vmatpush1.msra.mxu0 0.0
          %2759 = vmatprep.subr.mxu0 0.0
          %2760 = vmatpush1.msra.mxu0 0.0
          %2761 = vmatprep.subr.mxu0 0.0
          %2762 = vmatpush1.msra.mxu0 0.0
          %2763 = vmatprep.subr.mxu0 0.0
          %2764 = vmatpush1.msra.mxu0 0.0
          %2765 = vmatprep.subr.mxu0 0.0
          %2766 = vmatpush1.msra.mxu0 0.0
          %2767 = vmatprep.subr.mxu0 0.0
          %2768 = vmatpush1.msra.mxu0 0.0
          %2769 = vmatprep.subr.mxu0 0.0
          %2770 = vmatpush1.msra.mxu0 0.0
          %2771 = vmatprep.subr.mxu0 0.0
          %2772 = vmatpush1.msra.mxu0 0.0
          %2773 = vmatprep.subr.mxu0 0.0
          %2774 = vmatpush1.msra.mxu0 0.0
          %2775 = vmatprep.subr.mxu0 0.0
          %2776 = vmatpush1.msra.mxu0 0.0
          %2777 = vmatprep.mubr.f32.mxu0 0.0
          %2778 = vmatmul.mubr.f32.gmra.mrb[0].mxu0 %v2601
          %v2779 = vpop.f32.mrb[0].mxu0
          %v2780 = vadd.f32 %v2710, %v2779
          %v2781 = vpop.f32.mrb[0].mxu0
          %2782 = vdwg.mxu0
          %v2783 = vld [vmem:[#allocation32] sm:$0x1]
          %v2784 = vadd.f32 %v2780, %v2783
          %v2785 = vmax.f32 %v2784, 0.0
          %v2786 = vld [vmem:[#allocation33] sm:$0xff]
          %v2787 = vld [vmem:[#allocation33 + $0x8] sm:$0xff]
          %v2788 = vld [vmem:[#allocation33 + $0x10] sm:$0xff]
          %v2789 = vld [vmem:[#allocation33 + $0x18] sm:$0xff]
          %v2790 = vld [vmem:[#allocation33 + $0x20] sm:$0xff]
          %v2791 = vld [vmem:[#allocation33 + $0x28] sm:$0xff]
          %v2792 = vld [vmem:[#allocation33 + $0x30] sm:$0xff]
          %v2793 = vld [vmem:[#allocation33 + $0x38] sm:$0xff]
          %v2794 = vld [vmem:[#allocation33 + $0x40] sm:$0xff]
          %v2795 = vld [vmem:[#allocation33 + $0x48] sm:$0xff]
          %v2796 = vld [vmem:[#allocation33 + $0x50] sm:$0xff]
          %v2797 = vld [vmem:[#allocation33 + $0x58] sm:$0xff]
          %v2798 = vld [vmem:[#allocation33 + $0x60] sm:$0xff]
          %v2799 = vld [vmem:[#allocation33 + $0x68] sm:$0xff]
          %v2800 = vld [vmem:[#allocation33 + $0x70] sm:$0xff]
          %v2801 = vld [vmem:[#allocation33 + $0x78] sm:$0xff]
          %v2802 = vld [vmem:[#allocation35] sm:$0x1]
          %2803 = vmatprep.subr.mxu0 0.0
          %2804 = vmatpush1.msra.mxu0 %v2786
          %2805 = vmatprep.subr.mxu0 0.0
          %2806 = vmatpush1.msra.mxu0 %v2787
          %2807 = vmatprep.subr.mxu0 0.0
          %2808 = vmatpush1.msra.mxu0 %v2788
          %2809 = vmatprep.subr.mxu0 0.0
          %2810 = vmatpush1.msra.mxu0 %v2789
          %2811 = vmatprep.subr.mxu0 0.0
          %2812 = vmatpush1.msra.mxu0 %v2790
          %2813 = vmatprep.subr.mxu0 0.0
          %2814 = vmatpush1.msra.mxu0 %v2791
          %2815 = vmatprep.subr.mxu0 0.0
          %2816 = vmatpush1.msra.mxu0 %v2792
          %2817 = vmatprep.subr.mxu0 0.0
          %2818 = vmatpush1.msra.mxu0 %v2793
          %2819 = vmatprep.subr.mxu0 0.0
          %2820 = vmatpush1.msra.mxu0 %v2794
          %2821 = vmatprep.subr.mxu0 0.0
          %2822 = vmatpush1.msra.mxu0 %v2795
          %2823 = vmatprep.subr.mxu0 0.0
          %2824 = vmatpush1.msra.mxu0 %v2796
          %2825 = vmatprep.subr.mxu0 0.0
          %2826 = vmatpush1.msra.mxu0 %v2797
          %2827 = vmatprep.subr.mxu0 0.0
          %2828 = vmatpush1.msra.mxu0 %v2798
          %2829 = vmatprep.subr.mxu0 0.0
          %2830 = vmatpush1.msra.mxu0 %v2799
          %2831 = vmatprep.subr.mxu0 0.0
          %2832 = vmatpush1.msra.mxu0 %v2800
          %2833 = vmatprep.subr.mxu0 0.0
          %2834 = vmatpush1.msra.mxu0 %v2801
          %2835 = vmatprep.subr.mxu0 0.0
          %2836 = vmatpush1.msra.mxu0 0.0
          %2837 = vmatprep.subr.mxu0 0.0
          %2838 = vmatpush1.msra.mxu0 0.0
          %2839 = vmatprep.subr.mxu0 0.0
          %2840 = vmatpush1.msra.mxu0 0.0
          %2841 = vmatprep.subr.mxu0 0.0
          %2842 = vmatpush1.msra.mxu0 0.0
          %2843 = vmatprep.subr.mxu0 0.0
          %2844 = vmatpush1.msra.mxu0 0.0
          %2845 = vmatprep.subr.mxu0 0.0
          %2846 = vmatpush1.msra.mxu0 0.0
          %2847 = vmatprep.subr.mxu0 0.0
          %2848 = vmatpush1.msra.mxu0 0.0
          %2849 = vmatprep.subr.mxu0 0.0
          %2850 = vmatpush1.msra.mxu0 0.0
          %2851 = vmatprep.subr.mxu0 0.0
          %2852 = vmatpush1.msra.mxu0 0.0
          %2853 = vmatprep.subr.mxu0 0.0
          %2854 = vmatpush1.msra.mxu0 0.0
          %2855 = vmatprep.subr.mxu0 0.0
          %2856 = vmatpush1.msra.mxu0 0.0
          %2857 = vmatprep.subr.mxu0 0.0
          %2858 = vmatpush1.msra.mxu0 0.0
          %2859 = vmatprep.subr.mxu0 0.0
          %2860 = vmatpush1.msra.mxu0 0.0
          %2861 = vmatprep.subr.mxu0 0.0
          %2862 = vmatpush1.msra.mxu0 0.0
          %2863 = vmatprep.subr.mxu0 0.0
          %2864 = vmatpush1.msra.mxu0 0.0
          %2865 = vmatprep.subr.mxu0 0.0
          %2866 = vmatpush1.msra.mxu0 0.0
          %2867 = vmatprep.mubr.f32.mxu0 0.0
          %2868 = vmatmul.mubr.f32.gmra.mrb[0].mxu0 %v2785
          %v2869 = vpop.f32.mrb[0].mxu0
          %v2870 = vadd.f32 %v2802, %v2869
          %v2871 = vpop.f32.mrb[0].mxu0
          %2872 = vdwg.mxu0
          %2873 = vst [vmem:[#allocation39] sm:$0x1] %v2870
        $region196: #{tpu_custom_call.1} parent=103 // pred_fallthru
          _
        %s2874 = sand.u32 %s523, 1
        %s2875 = scalar_lea.sflag [#allocation5], %s2874
        %s2876 = sand.u32 %s523, 1
        %s2877 = smul.addr %s2876, 128
        %s2878 = scalar_lea.vmem [#allocation36], %s2877
        // Predicated region
        $region197: #{tpu_custom_call.1} parent=103 // pred_check
          %p2879 = pneg %p533
        $region198: #{tpu_custom_call.1} parent=103 // pred_check_branch
          %2881 = sbr.rel (%p2879) target = $region200
        $region199: #{tpu_custom_call.1} parent=103 // pred_region
          %s2882 = smul.u32 16, %s54
          %s2884 = ssub.s32 2048, 2048
          %2885 = vsyncadd %s2875, %s2884
          %s2886 = smul.addr %s2882, 128
          %s2887 = scalar_lea.hbm %s21, %s2886
          %s2888 = sshll.u32 %s2878, 4
          %s2889 = int_to_ptr.vmem [resolvable:$true] %s2888
          %2894 = dma.vmem_to_hbm [thread:$0]  %s2889, 2048, %s2887, %s2875, 128, 128, 8
        $region200: #{tpu_custom_call.1} parent=103 // pred_fallthru
          _
        // Predicated region
        $region201: #{tpu_custom_call.1} parent=103 // pred_check
          %p2895 = pneg %p554
        $region202: #{tpu_custom_call.1} parent=103 // pred_check_branch
          %2897 = sbr.rel (%p2895) target = $region204
        $region203: #{tpu_custom_call.1} parent=103 // pred_region
          %s2899 = ssub.s32 512, 512
          %2900 = vsyncadd [#allocation38], %s2899
          %s2901 = sshll.u32 [#allocation37], 4
          %s2902 = int_to_ptr.vmem [resolvable:$true] %s2901
          %2907 = dma.vmem_to_hbm [thread:$0]  %s2902, 512, %s22, [#allocation38], 128, 128, 8
        $region204: #{tpu_custom_call.1} parent=103 // pred_fallthru
          _
        // Predicated region
        $region205: #{tpu_custom_call.1} parent=103 // pred_check
          %p2908 = pneg %p575
        $region206: #{tpu_custom_call.1} parent=103 // pred_check_branch
          %2910 = sbr.rel (%p2908) target = $region208
        $region207: #{tpu_custom_call.1} parent=103 // pred_region
          %s2912 = ssub.s32 16, 16
          %2913 = vsyncadd [#allocation38], %s2912
          %s2915 = sshll.u32 [#allocation39], 4
          %s2916 = int_to_ptr.vmem [resolvable:$true] %s2915
          %2918 = dma.vmem_to_hbm [thread:$0]  %s2916, 16, %s23, [#allocation38]
        $region208: #{tpu_custom_call.1} parent=103 // pred_fallthru
          _
        // Predicated region
        $region209: #{tpu_custom_call.1} parent=103 // pred_check
          %p2919 = pneg %p554
        $region210: #{tpu_custom_call.1} parent=103 // pred_check_branch
          %2921 = sbr.rel (%p2919) target = $region212
        $region211: #{tpu_custom_call.1} parent=103 // pred_region
          %2922 = dma.done [#allocation38], 512
        $region212: #{tpu_custom_call.1} parent=103 // pred_fallthru
          _
        // Predicated region
        $region213: #{tpu_custom_call.1} parent=103 // pred_check
          %p2923 = pneg %p575
        $region214: #{tpu_custom_call.1} parent=103 // pred_check_branch
          %2925 = sbr.rel (%p2923) target = $region216
        $region215: #{tpu_custom_call.1} parent=103 // pred_region
          %2926 = dma.done [#allocation38], 16
        $region216: #{tpu_custom_call.1} parent=103 // pred_fallthru
          _
      $region104: #{tpu_custom_call.1} parent=5 // pred_fallthru
        _
      %p2927 = scmp.le.s32.totalorder 2, %s49
      // Predicated region
      $region217: #{tpu_custom_call.1} parent=5 // pred_check
        %p2928 = pneg %p2927
      $region218: #{tpu_custom_call.1} parent=5 // pred_check_branch
        %2930 = sbr.rel (%p2928) target = $region220
      $region219: #{tpu_custom_call.1} parent=5 // pred_region
        %s2931 = ssub.s32 %s49, 2
        // Predicated region
        $region221: #{tpu_custom_call.1} parent=219 // pred_check
          %p2932 = pneg %p539
        $region222: #{tpu_custom_call.1} parent=219 // pred_check_branch
          %2934 = sbr.rel (%p2932) target = $region224
        $region223: #{tpu_custom_call.1} parent=219 // pred_region
          %s2935 = sand.u32 %s524, 1
          %s2936 = scalar_lea.sflag [#allocation5], %s2935
          %s2937 = sand.u32 %s524, 1
          %s2938 = smul.addr %s2937, 128
          %s2939 = scalar_lea.vmem [#allocation36], %s2938
          %2940 = dma.done %s2936, 2048
        $region224: #{tpu_custom_call.1} parent=219 // pred_fallthru
          _
      $region220: #{tpu_custom_call.1} parent=5 // pred_fallthru
        _
    $region6: #{tpu_custom_call.1} parent=1 // loop_footer
      %s53 = sadd.s32 1, %s49
    $region7: #{tpu_custom_call.1} parent=1 // loop_footer_branch
      %48 = sbr.rel target = $region3
    $region8: #{tpu_custom_call.1} parent=1 // loop_exit
      _
    %2941 = vsyncpa [#allocation4], 1
    %s2942 = scalar_lea.sflag [#allocation4], 1
    %2943 = vsyncpa %s2942, 1
    %2944 = vsyncpa [#allocation7], 1
    %s2945 = scalar_lea.sflag [#allocation7], 1
    %2946 = vsyncpa %s2945, 1
    %2947 = vsyncpa [#allocation10], 1
    %s2948 = scalar_lea.sflag [#allocation10], 1
    %2949 = vsyncpa %s2948, 1
    %2950 = vsyncpa [#allocation13], 1
    %2951 = vsyncpa [#allocation16], 1
    %2952 = vsyncpa [#allocation19], 1
    %2953 = vsyncpa [#allocation22], 1
    %2954 = vsyncpa [#allocation25], 1
    %2955 = vsyncpa [#allocation28], 1
    %2956 = vsyncpa [#allocation31], 1
    %2957 = vsyncpa [#allocation34], 1
    %2958 = vsyncpa [#allocation5], 1
    %s2959 = scalar_lea.sflag [#allocation5], 1
    %2960 = vsyncpa %s2959, 1
    %2961 = vsyncpa [#allocation38], 1

</llo_original>
